<compile_context>
chip_gen: v6e
topology: v6e:2x2x1
jax: 0.10.0
libtpu: 0.0.40
codegen_flags: <defaults>
</compile_context>

<pallas_src>
import functools
import math

import jax
import jax.numpy as jnp
from jax.experimental import pallas as pl
from jax.experimental.pallas import tpu as pltpu

_EPS = 1e-5
_LANE = 128


# --------------------------------- kernels -----------------------------------


def _ln_kernel_rowwise(x_ref, w_ref, o_ref, *, inv_c):
    """Per-row stats via lane reduction.  Used when C is already a multiple of 128
    or when row-packing is not possible (fallback)."""
    x = x_ref[...].astype(jnp.float32)            # (TR, C)
    w = w_ref[...].astype(jnp.float32)            # (1, C)

    mean = jnp.sum(x, axis=-1, keepdims=True) * inv_c
    d = x - mean
    var = jnp.sum(d * d, axis=-1, keepdims=True) * inv_c     # biased, two-pass
    scale = jax.lax.rsqrt(var + _EPS)                        # EUP slot

    o_ref[...] = (x * (scale * w)).astype(o_ref.dtype)


def _ln_kernel_packed(x_ref, w_ref, s_ref, st_ref, o_ref, *, inv_c):
    """G original rows packed per VMEM row (W = G*C lanes, multiple of 128).
    Per-original-row statistics via a 0/1 block-diagonal segment-sum matmul on the
    MXU (idle otherwise), then broadcast back with its transpose.
    NOTE: rows are fully independent -> garbage rows from a partial last block are
    harmless; do NOT add cross-row reductions here without masking them."""
    x = x_ref[...].astype(jnp.float32)            # (TR, W)
    w = w_ref[...].astype(jnp.float32)            # (1, W)   weight tiled G times
    s = s_ref[...]                                # (W, G)   lane -> segment one-hot
    st = st_ref[...]                              # (G, W)   segment -> lanes

    dot = functools.partial(jnp.dot,
                            precision=jax.lax.Precision.HIGHEST,
                            preferred_element_type=jnp.float32)

    mean = dot(x, s) * inv_c                      # (TR, G)  per-original-row mean
    d = x - dot(mean, st)                         # (TR, W)
    var = dot(d * d, s) * inv_c                   # (TR, G)  biased, two-pass
    scale = jax.lax.rsqrt(var + _EPS)             # EUP slot
    scale_full = dot(scale, st)                   # (TR, W)

    o_ref[...] = (x * scale_full * w).astype(o_ref.dtype)


# --------------------------------- wrapper -----------------------------------


@functools.partial(jax.jit, static_argnames=("max_block_rows",))
def biasfree_layernorm(x, weight, max_block_rows=None):
    """x: (..., C); weight: (C,).  Returns same shape/dtype as x."""
    orig_shape = x.shape
    C = int(orig_shape[-1])
    N = 1
    for d in orig_shape[:-1]:
        N *= int(d)

    # ---- lane-packing factor: pack G rows so the packed width is 128-aligned ----
    G = 1
    if C % _LANE != 0:
        g = math.lcm(C, _LANE) // C
        if g <= 64 and N % g == 0:
            G = g
    W = G * C
    R = N // G
    x2 = x.reshape(R, W)                     # contiguous -> free (no HBM movement)

    # ---- row-tile sizing (bytes-based, generation-safe) -------------------------
    itemsize = x.dtype.itemsize
    sublane = max(8, (4 // itemsize) * 8)               # f32:8  bf16:16  int8/fp8:32
    w_pad = pl.cdiv(W, _LANE) * _LANE                   # lanes actually used in VMEM

    target_buf_bytes = 8 * 1024 * 1024                  # per pipelined buffer
    tr = max(sublane,
             (target_buf_bytes // (w_pad * itemsize)) // sublane * sublane)
    if max_block_rows is not None:
        tr = max(sublane, min(tr, (max_block_rows // sublane) * sublane))
    if R >= 2 * sublane:                                 # >=2 grid steps: v7x megacore
        tr = min(tr, pl.cdiv(pl.cdiv(R, 2), sublane) * sublane)
    tr = min(tr, R)
    grid = (pl.cdiv(R, tr),)                             # partial last block is masked

    block_bytes = tr * w_pad * itemsize
    vmem_need = 4 * block_bytes + 4 * w_pad * _LANE * 4  # 2x(in) + 2x(out) + consts
    vmem_limit = int(min(64 * 1024 * 1024,
                         max(16 * 1024 * 1024, vmem_need + vmem_need // 4)))

    cost = pl.CostEstimate(
        flops=int(N * C * (5 + 8 * G)),
        transcendentals=int(N),
        bytes_accessed=int(2 * N * C * itemsize + C * weight.dtype.itemsize),
    )
    cparams = pltpu.CompilerParams(
        dimension_semantics=("parallel",),
        vmem_limit_bytes=vmem_limit,
    )

    row_spec = pl.BlockSpec((tr, W), lambda i: (i, 0))
    bcast = lambda i: (0, 0)

    if G == 1:
        out = pl.pallas_call(
            functools.partial(_ln_kernel_rowwise, inv_c=1.0 / C),
            out_shape=jax.ShapeDtypeStruct((R, W), x.dtype),
            grid=grid,
            in_specs=[row_spec, pl.BlockSpec((1, W), bcast)],
            out_specs=row_spec,
            compiler_params=cparams,
            cost_estimate=cost,
        )(x2, weight.reshape(1, C))
    else:
        # 0/1 segment matrices + lane-tiled weight (constant-folded at compile time).
        lane_seg = jnp.arange(W, dtype=jnp.int32) // C                    # (W,)
        s_mat = (lane_seg[:, None] == jnp.arange(G, dtype=jnp.int32)[None, :]
                 ).astype(jnp.float32)                                     # (W, G)
        st_mat = s_mat.T                                                   # (G, W)
        w_full = jnp.tile(weight.reshape(1, C), (1, G))                    # (1, W)

        out = pl.pallas_call(
            functools.partial(_ln_kernel_packed, inv_c=1.0 / C),
            out_shape=jax.ShapeDtypeStruct((R, W), x.dtype),
            grid=grid,
            in_specs=[row_spec,
                      pl.BlockSpec((1, W), bcast),
                      pl.BlockSpec((W, G), bcast),
                      pl.BlockSpec((G, W), bcast)],
            out_specs=row_spec,
            compiler_params=cparams,
            cost_estimate=cost,
        )(x2, w_full, s_mat, st_mat)

    return out.reshape(orig_shape)


# ----------------------------- reference (JAX) --------------------------------


def _reference(x, weight):
    xf = x.astype(jnp.float32)
    sigma = jnp.var(xf, axis=-1, keepdims=True)           # biased (ddof=0)
    return (xf / jnp.sqrt(sigma + _EPS) * weight.astype(jnp.float32)).astype(x.dtype)


# ---------------------------------- main --------------------------------------


if __name__ == "__main__":
    key = jax.random.PRNGKey(0)
    kx, kw, kx2, kx3 = jax.random.split(key, 4)

    # Restormer applies this after to_3d(x): layout (B, H*W, C), LayerNorm over C.
    B, H, Wsp, C = 2, 16, 16, 48
    x = jax.random.normal(kx, (B, H * Wsp, C), dtype=jnp.float32) * 1.5 + 2.0
    weight = 1.0 + 0.1 * jax.random.normal(kw, (C,), dtype=jnp.float32)

    # 1) lane-packed path (C=48 -> G=8, W=384), 2 parallel grid steps.
    out = jax.block_until_ready(biasfree_layernorm(x, weight))
    ref = _reference(x, weight)
    assert out.shape == x.shape, out.shape
    assert jnp.allclose(out, ref, atol=2e-4, rtol=2e-4), \
        float(jnp.max(jnp.abs(out - ref)))

    # 2) fallback row-wise path + masked partial last block (N=300 not divisible by 8).
    x2 = jax.random.normal(kx2, (3, 100, C), dtype=jnp.float32) * 1.5 + 2.0
    out2 = jax.block_until_ready(biasfree_layernorm(x2, weight, max_block_rows=64))
    ref2 = _reference(x2, weight)
    assert out2.shape == x2.shape, out2.shape
    assert jnp.allclose(out2, ref2, atol=2e-4, rtol=2e-4), \
        float(jnp.max(jnp.abs(out2 - ref2)))

    # 3) already lane-dense channel count (C=128), G=1 row-wise path.
    C3 = 128
    w3 = 1.0 + 0.1 * jax.random.normal(kw, (C3,), dtype=jnp.float32)
    x3 = jax.random.normal(kx3, (2, 64, C3), dtype=jnp.float32)
    out3 = jax.block_until_ready(biasfree_layernorm(x3, w3))
    ref3 = _reference(x3, w3)
    assert jnp.allclose(out3, ref3, atol=2e-4, rtol=2e-4), \
        float(jnp.max(jnp.abs(out3 - ref3)))

    print("KERNEL_OK")
</pallas_src>

<mosaic_0001>
module attributes {stable_mosaic.version = 11 : i64} {
  func.func @_ln_kernel_packed(%arg0: i32, %arg1: memref<32x384xf32, #tpu.memory_space<vmem>>, %arg2: memref<1x384xf32, #tpu.memory_space<vmem>>, %arg3: memref<384x8xf32, #tpu.memory_space<vmem>>, %arg4: memref<8x384xf32, #tpu.memory_space<vmem>>, %arg5: memref<32x384xf32, #tpu.memory_space<vmem>>) attributes {dimension_semantics = [#tpu.dimension_semantics<parallel>], iteration_bounds = array<i64: 2>, scalar_prefetch = 0 : i64, scratch_operands = 0 : i64, tpu.core_type = #tpu.core_type<tc>, window_params = [{transform_indices = @transform_0, window_bounds = array<i64: 32, 384>}, {pipeline_mode = #tpu.pipeline_mode<synchronous>, transform_indices = @transform_1, window_bounds = array<i64: 1, 384>}, {pipeline_mode = #tpu.pipeline_mode<synchronous>, transform_indices = @transform_2, window_bounds = array<i64: 384, 8>}, {pipeline_mode = #tpu.pipeline_mode<synchronous>, transform_indices = @transform_3, window_bounds = array<i64: 8, 384>}, {transform_indices = @transform_4, window_bounds = array<i64: 32, 384>}]} {
    %c0 = arith.constant 0 : index
    %c0_0 = arith.constant 0 : index
    %0 = vector.load %arg1[%c0, %c0_0] : memref<32x384xf32, #tpu.memory_space<vmem>>, vector<32x384xf32>
    %c0_1 = arith.constant 0 : index
    %c0_2 = arith.constant 0 : index
    %1 = vector.load %arg2[%c0_1, %c0_2] : memref<1x384xf32, #tpu.memory_space<vmem>>, vector<1x384xf32>
    %c0_3 = arith.constant 0 : index
    %c0_4 = arith.constant 0 : index
    %2 = vector.load %arg3[%c0_3, %c0_4] : memref<384x8xf32, #tpu.memory_space<vmem>>, vector<384x8xf32>
    %c0_5 = arith.constant 0 : index
    %c0_6 = arith.constant 0 : index
    %3 = vector.load %arg4[%c0_5, %c0_6] : memref<8x384xf32, #tpu.memory_space<vmem>>, vector<8x384xf32>
    %cst = arith.constant dense<0.000000e+00> : vector<32x8xf32>
    %4 = tpu.matmul %0, %2, %cst {dimension_numbers = #tpu.dot_dimension_numbers<[1], [0], [0], [1], [0, 0, 1, 1], [], []>, precision = #tpu.contract_precision<fp32>} : vector<32x384xf32>, vector<384x8xf32>, vector<32x8xf32> -> vector<32x8xf32>
    %cst_7 = arith.constant 0.020833334 : f32
    %5 = vector.broadcast %cst_7 : f32 to vector<32x8xf32>
    %6 = arith.mulf %4, %5 : vector<32x8xf32>
    %cst_8 = arith.constant dense<0.000000e+00> : vector<32x384xf32>
    %7 = tpu.matmul %6, %3, %cst_8 {dimension_numbers = #tpu.dot_dimension_numbers<[1], [0], [0], [1], [0, 0, 1, 1], [], []>, precision = #tpu.contract_precision<fp32>} : vector<32x8xf32>, vector<8x384xf32>, vector<32x384xf32> -> vector<32x384xf32>
    %8 = arith.subf %0, %7 : vector<32x384xf32>
    %9 = arith.mulf %8, %8 : vector<32x384xf32>
    %cst_9 = arith.constant dense<0.000000e+00> : vector<32x8xf32>
    %10 = tpu.matmul %9, %2, %cst_9 {dimension_numbers = #tpu.dot_dimension_numbers<[1], [0], [0], [1], [0, 0, 1, 1], [], []>, precision = #tpu.contract_precision<fp32>} : vector<32x384xf32>, vector<384x8xf32>, vector<32x8xf32> -> vector<32x8xf32>
    %cst_10 = arith.constant 0.020833334 : f32
    %11 = vector.broadcast %cst_10 : f32 to vector<32x8xf32>
    %12 = arith.mulf %10, %11 : vector<32x8xf32>
    %cst_11 = arith.constant 9.99999974E-6 : f32
    %13 = vector.broadcast %cst_11 : f32 to vector<32x8xf32>
    %14 = arith.addf %12, %13 : vector<32x8xf32>
    %15 = math.rsqrt %14 : vector<32x8xf32>
    %cst_12 = arith.constant dense<0.000000e+00> : vector<32x384xf32>
    %16 = tpu.matmul %15, %3, %cst_12 {dimension_numbers = #tpu.dot_dimension_numbers<[1], [0], [0], [1], [0, 0, 1, 1], [], []>, precision = #tpu.contract_precision<fp32>} : vector<32x8xf32>, vector<8x384xf32>, vector<32x384xf32> -> vector<32x384xf32>
    %17 = arith.mulf %0, %16 : vector<32x384xf32>
    %18 = vector.broadcast %1 : vector<1x384xf32> to vector<32x384xf32>
    %19 = arith.mulf %17, %18 : vector<32x384xf32>
    %c0_13 = arith.constant 0 : index
    %c0_14 = arith.constant 0 : index
    %20 = vector.load %arg5[%c0_13, %c0_14] : memref<32x384xf32, #tpu.memory_space<vmem>>, vector<32x384xf32>
    tpu.vector_store %arg5[%c0_13, %c0_14], %19 {strides = array<i32>} : memref<32x384xf32, #tpu.memory_space<vmem>>, vector<32x384xf32>,
    return
  }
  func.func @transform_0(%arg0: i32) -> (i32, i32) {
    %c0_i32 = arith.constant 0 : i32
    %c0_i32_0 = arith.constant 0 : i32
    return %arg0, %c0_i32 : i32, i32
  }
  func.func @transform_1(%arg0: i32) -> (i32, i32) {
    %c0_i32 = arith.constant 0 : i32
    %c0_i32_0 = arith.constant 0 : i32
    %c0_i32_1 = arith.constant 0 : i32
    return %c0_i32, %c0_i32_0 : i32, i32
  }
  func.func @transform_2(%arg0: i32) -> (i32, i32) {
    %c0_i32 = arith.constant 0 : i32
    %c0_i32_0 = arith.constant 0 : i32
    %c0_i32_1 = arith.constant 0 : i32
    return %c0_i32, %c0_i32_0 : i32, i32
  }
  func.func @transform_3(%arg0: i32) -> (i32, i32) {
    %c0_i32 = arith.constant 0 : i32
    %c0_i32_0 = arith.constant 0 : i32
    %c0_i32_1 = arith.constant 0 : i32
    return %c0_i32, %c0_i32_0 : i32, i32
  }
  func.func @transform_4(%arg0: i32) -> (i32, i32) {
    %c0_i32 = arith.constant 0 : i32
    %c0_i32_0 = arith.constant 0 : i32
    return %arg0, %c0_i32 : i32, i32
  }
}

</mosaic_0001>

<llo_original>
// kernel: biasfree_layernorm.1
$region0: #{biasfree_layernorm.1}
  #allocation0 [shape = 'u32[]', space=smem, size = 0x4, offset = 0x4, fixed_abs, tag = 'smem constant byte address 0x4 - core index']
  #allocation1 [shape = 'u32[144,128]{1,0:T(1,128)}', space=vmem, size = 0x12000, scoped, tag = 'internal scratch']
  %s0 = inlined_call_operand.vmem [shape: f32[64,384], index: 0, kind: input, shape index: {}]
  %s1 = inlined_call_operand.vmem [shape: f32[1,384], index: 1, kind: input, shape index: {}]
  %s2 = inlined_call_operand.vmem [shape: f32[384,8], index: 2, kind: input, shape index: {}]
  %s3 = inlined_call_operand.vmem [shape: f32[8,384], index: 3, kind: input, shape index: {}]
  %s4 = inlined_call_operand.vmem [shape: f32[64,384], index: 4, kind: output, shape index: {}]
  %s5 = sld [smem:[#allocation0]]
  $region49: #{biasfree_layernorm.1} parent=0
    _
  %s7 = ssub.s32 1, %s5
  %s8 = scalar_select 0, %s7, %s5
  loop: start=0, step=1, limit=4
  $region2: #{biasfree_layernorm.1} parent=0 // loop_pre_header
    _
  $region3: #{biasfree_layernorm.1} parent=0 // loop_header
    %s10 = sphi 0, %s14
    %p11 = scmp.ge.s32.totalorder %s10, 4
    %s20 = sphi 0, %s22
    %s23 = sphi 0, %s20
    %s24 = sphi 0, %s23
    %s40 = sphi 0, %s24
    %s44 = sphi 0, %s44
    %s46 = sphi 0, %s44
    %s47 = sphi 0, %s46
    %s61 = sphi 0, %s47
    %s65 = sphi 0, %s65
    %s67 = sphi 0, %s65
    %s68 = sphi 0, %s67
    %s82 = sphi 0, %s68
    %s86 = sphi 0, %s86
    %s88 = sphi 0, %s86
    %s89 = sphi 0, %s88
    %s103 = sphi 0, %s89
    %s109 = sphi 0, %s111
    %s112 = sphi 0, %s109
    %s113 = sphi 0, %s112
    %s129 = sphi 0, %s113
  $region4: #{biasfree_layernorm.1} parent=0 // loop_header_branch
    %13 = sbr.rel (%p11) target = $region8
  $region5: #{biasfree_layernorm.1} parent=0 // loop_body
    %s15 = ssub.s32 %s10, 1
    %s16 = ssub.s32 %s10, 2
    %s17 = sadd.s32 %s10, 1
    %s18 = ssub.s32 %s10, %s17
    %p19 = scmp.eq.s32.totalorder %s18, 0
    %s21 = sadd.s32 %s20, 1
    %s22 = scalar_select %p19, %s20, %s21
    %p25 = pneg %p19
    %p26 = scmp.eq.s32.totalorder %s10, 1
    %p27 = por %p25, %p26
    %p28 = scmp.ne.s32.totalorder %s20, %s23
    %p29 = scmp.eq.s32.totalorder %s10, 0
    %p30 = por %p28, %p29
    %p31 = scmp.ne.s32.totalorder %s20, %s23
    %p32 = scmp.eq.s32.totalorder %s15, 1
    %p33 = por %p31, %p32
    %p34 = scmp.ne.s32.totalorder %s23, %s24
    %p35 = scmp.eq.s32.totalorder %s15, 0
    %p36 = por %p34, %p35
    %p37 = scmp.ne.s32.totalorder %s23, %s24
    %p38 = scmp.eq.s32.totalorder %s16, 1
    %p39 = por %p37, %p38
    %p41 = scmp.ne.s32.totalorder %s24, %s40
    %p42 = scmp.eq.s32.totalorder %s16, 0
    %p43 = por %p41, %p42
    %s45 = sadd.s32 %s44, 1
    %p48 = scmp.eq.s32.totalorder %s10, 1
    %p49 = scmp.ne.s32.totalorder %s44, %s46
    %p50 = scmp.eq.s32.totalorder %s10, 0
    %p51 = por %p49, %p50
    %p52 = scmp.ne.s32.totalorder %s44, %s46
    %p53 = scmp.eq.s32.totalorder %s15, 1
    %p54 = por %p52, %p53
    %p55 = scmp.ne.s32.totalorder %s46, %s47
    %p56 = scmp.eq.s32.totalorder %s15, 0
    %p57 = por %p55, %p56
    %p58 = scmp.ne.s32.totalorder %s46, %s47
    %p59 = scmp.eq.s32.totalorder %s16, 1
    %p60 = por %p58, %p59
    %p62 = scmp.ne.s32.totalorder %s47, %s61
    %p63 = scmp.eq.s32.totalorder %s16, 0
    %p64 = por %p62, %p63
    %s66 = sadd.s32 %s65, 1
    %p69 = scmp.eq.s32.totalorder %s10, 1
    %p70 = scmp.ne.s32.totalorder %s65, %s67
    %p71 = scmp.eq.s32.totalorder %s10, 0
    %p72 = por %p70, %p71
    %p73 = scmp.ne.s32.totalorder %s65, %s67
    %p74 = scmp.eq.s32.totalorder %s15, 1
    %p75 = por %p73, %p74
    %p76 = scmp.ne.s32.totalorder %s67, %s68
    %p77 = scmp.eq.s32.totalorder %s15, 0
    %p78 = por %p76, %p77
    %p79 = scmp.ne.s32.totalorder %s67, %s68
    %p80 = scmp.eq.s32.totalorder %s16, 1
    %p81 = por %p79, %p80
    %p83 = scmp.ne.s32.totalorder %s68, %s82
    %p84 = scmp.eq.s32.totalorder %s16, 0
    %p85 = por %p83, %p84
    %s87 = sadd.s32 %s86, 1
    %p90 = scmp.eq.s32.totalorder %s10, 1
    %p91 = scmp.ne.s32.totalorder %s86, %s88
    %p92 = scmp.eq.s32.totalorder %s10, 0
    %p93 = por %p91, %p92
    %p94 = scmp.ne.s32.totalorder %s86, %s88
    %p95 = scmp.eq.s32.totalorder %s15, 1
    %p96 = por %p94, %p95
    %p97 = scmp.ne.s32.totalorder %s88, %s89
    %p98 = scmp.eq.s32.totalorder %s15, 0
    %p99 = por %p97, %p98
    %p100 = scmp.ne.s32.totalorder %s88, %s89
    %p101 = scmp.eq.s32.totalorder %s16, 1
    %p102 = por %p100, %p101
    %p104 = scmp.ne.s32.totalorder %s89, %s103
    %p105 = scmp.eq.s32.totalorder %s16, 0
    %p106 = por %p104, %p105
    %s107 = ssub.s32 %s10, %s17
    %p108 = scmp.eq.s32.totalorder %s107, 0
    %s110 = sadd.s32 %s109, 1
    %s111 = scalar_select %p108, %s109, %s110
    %p114 = pneg %p108
    %p115 = scmp.eq.s32.totalorder %s10, 1
    %p116 = por %p114, %p115
    %p117 = scmp.ne.s32.totalorder %s109, %s112
    %p118 = scmp.eq.s32.totalorder %s10, 0
    %p119 = por %p117, %p118
    %p120 = scmp.ne.s32.totalorder %s109, %s112
    %p121 = scmp.eq.s32.totalorder %s15, 1
    %p122 = por %p120, %p121
    %p123 = scmp.ne.s32.totalorder %s112, %s113
    %p124 = scmp.eq.s32.totalorder %s15, 0
    %p125 = por %p123, %p124
    %p126 = scmp.ne.s32.totalorder %s112, %s113
    %p127 = scmp.eq.s32.totalorder %s16, 1
    %p128 = por %p126, %p127
    %p130 = scmp.ne.s32.totalorder %s113, %s129
    %p131 = scmp.eq.s32.totalorder %s16, 0
    %p132 = por %p130, %p131
    %p133 = scmp.le.s32.totalorder 1, %s10
    %p134 = scmp.lt.s32.totalorder %s10, 3
    %p135 = pnand %p133, %p134
    %p136 = pneg %p135
    // Predicated region
    $region9: #{biasfree_layernorm.1} parent=5 // pred_check
      _
    $region10: #{biasfree_layernorm.1} parent=5 // pred_check_branch
      %138 = sbr.rel (%p135) target = $region12
    $region11: #{biasfree_layernorm.1} parent=5 // pred_region
      %s139 = ssub.s32 %s10, 1
      // Predicated region
      $region13: #{biasfree_layernorm.1} parent=11 // pred_check
        %p140 = pneg %p57
      $region14: #{biasfree_layernorm.1} parent=11 // pred_check_branch
        %142 = sbr.rel (%p140) target = $region16
      $region15: #{biasfree_layernorm.1} parent=11 // pred_region
        _
      $region16: #{biasfree_layernorm.1} parent=11 // pred_fallthru
        _
      // Predicated region
      $region17: #{biasfree_layernorm.1} parent=11 // pred_check
        %p143 = pneg %p78
      $region18: #{biasfree_layernorm.1} parent=11 // pred_check_branch
        %145 = sbr.rel (%p143) target = $region20
      $region19: #{biasfree_layernorm.1} parent=11 // pred_region
        _
      $region20: #{biasfree_layernorm.1} parent=11 // pred_fallthru
        _
      // Predicated region
      $region21: #{biasfree_layernorm.1} parent=11 // pred_check
        %p146 = pneg %p99
      $region22: #{biasfree_layernorm.1} parent=11 // pred_check_branch
        %148 = sbr.rel (%p146) target = $region24
      $region23: #{biasfree_layernorm.1} parent=11 // pred_region
        _
      $region24: #{biasfree_layernorm.1} parent=11 // pred_fallthru
        _
    $region12: #{biasfree_layernorm.1} parent=5 // pred_fallthru
      _
    %p149 = scmp.lt.s32.totalorder %s10, 2
    // Predicated region
    $region25: #{biasfree_layernorm.1} parent=5 // pred_check
      %p150 = pneg %p149
    $region26: #{biasfree_layernorm.1} parent=5 // pred_check_branch
      %152 = sbr.rel (%p150) target = $region28
    $region27: #{biasfree_layernorm.1} parent=5 // pred_region
      // Predicated region
      $region29: #{biasfree_layernorm.1} parent=27 // pred_check
        %p153 = pneg %p30
      $region30: #{biasfree_layernorm.1} parent=27 // pred_check_branch
        %155 = sbr.rel (%p153) target = $region32
      $region31: #{biasfree_layernorm.1} parent=27 // pred_region
        %s156 = smul.u32 4, %s10
        %p157 = scmp.lt.s32.totalorder %s156, 7
        %s158 = scalar_select %p157, %s156, 7
        %s159 = smul.addr %s158, 3
        %s160 = smul.addr %s159, 8
        %s161 = scalar_lea.vmem %s0, %s160
        %s162 = smul.u32 4, %s10
      $region32: #{biasfree_layernorm.1} parent=27 // pred_fallthru
        _
    $region28: #{biasfree_layernorm.1} parent=5 // pred_fallthru
      _
    %p163 = scmp.le.s32.totalorder 1, %s10
    %p164 = scmp.lt.s32.totalorder %s10, 3
    %p165 = pnand %p163, %p164
    %p166 = pneg %p165
    // Predicated region
    $region33: #{biasfree_layernorm.1} parent=5 // pred_check
      _
    $region34: #{biasfree_layernorm.1} parent=5 // pred_check_branch
      %168 = sbr.rel (%p165) target = $region36
    $region35: #{biasfree_layernorm.1} parent=5 // pred_region
      %s169 = ssub.s32 %s10, 1
      %s170 = smul.u32 4, %s15
      %p171 = scmp.lt.s32.totalorder %s170, 7
      %s172 = scalar_select %p171, %s170, 7
      %s173 = smul.addr %s172, 3
      %s174 = smul.addr %s173, 8
      %s175 = scalar_lea.vmem %s0, %s174
      %p176 = pneg %p36
      %p177 = pneg %p33
      %p178 = pneg %p57
      %p179 = pneg %p54
      %p180 = pneg %p78
      %p181 = pneg %p75
      %p182 = pneg %p99
      %p183 = pneg %p96
      %p184 = pneg %p125
      %p185 = pneg %p122
      %s186 = smul.u32 4, %s15
      %p187 = scmp.lt.s32.totalorder %s186, 7
      %s188 = scalar_select %p187, %s186, 7
      %s189 = smul.addr %s188, 3
      %s190 = smul.addr %s189, 8
      %s191 = scalar_lea.vmem %s4, %s190
      %s192 = smul.u32 4, %s15
      %p193 = scmp.lt.s32.totalorder %s192, 7
      %s194 = scalar_select %p193, %s192, 7
      %s195 = smul.addr %s194, 3
      %s196 = smul.addr %s195, 8
      %s197 = scalar_lea.vmem %s0, %s196
      %s198 = smul.u32 4, %s15
      %s199 = smul.u32 4, %s15
      %p200 = scmp.lt.s32.totalorder %s199, 7
      %s201 = scalar_select %p200, %s199, 7
      %s202 = smul.addr %s201, 3
      %s203 = smul.addr %s202, 8
      %s204 = scalar_lea.vmem %s4, %s203
      %s205 = smul.u32 4, %s15
      %v206 = vld [vmem:[%s197] sm:$0xff]
      %v207 = vld [vmem:[%s197 + $0x8] sm:$0xff]
      %v208 = vld [vmem:[%s197 + $0x10] sm:$0xff]
      %v209 = vld [vmem:[%s197 + $0x18] sm:$0xff]
      %v210 = vld [vmem:[%s197 + $0x20] sm:$0xff]
      %v211 = vld [vmem:[%s197 + $0x28] sm:$0xff]
      %v212 = vld [vmem:[%s197 + $0x30] sm:$0xff]
      %v213 = vld [vmem:[%s197 + $0x38] sm:$0xff]
      %v214 = vld [vmem:[%s197 + $0x40] sm:$0xff]
      %v215 = vld [vmem:[%s197 + $0x48] sm:$0xff]
      %v216 = vld [vmem:[%s197 + $0x50] sm:$0xff]
      %v217 = vld [vmem:[%s197 + $0x58] sm:$0xff]
      %v218 = vld [vmem:[%s1] sm:$0x7]
      %v219 = vld [vmem:[%s2] sm:$0xff]
      %v220 = vld [vmem:[%s2 + $0x8] sm:$0xff]
      %v221 = vld [vmem:[%s2 + $0x10] sm:$0xff]
      %v222 = vld [vmem:[%s2 + $0x18] sm:$0xff]
      %v223 = vld [vmem:[%s2 + $0x20] sm:$0xff]
      %v224 = vld [vmem:[%s2 + $0x28] sm:$0xff]
      %v225 = vld [vmem:[%s2 + $0x30] sm:$0xff]
      %v226 = vld [vmem:[%s2 + $0x38] sm:$0xff]
      %v227 = vld [vmem:[%s2 + $0x40] sm:$0xff]
      %v228 = vld [vmem:[%s2 + $0x48] sm:$0xff]
      %v229 = vld [vmem:[%s2 + $0x50] sm:$0xff]
      %v230 = vld [vmem:[%s2 + $0x58] sm:$0xff]
      %v231 = vld [vmem:[%s2 + $0x60] sm:$0xff]
      %v232 = vld [vmem:[%s2 + $0x68] sm:$0xff]
      %v233 = vld [vmem:[%s2 + $0x70] sm:$0xff]
      %v234 = vld [vmem:[%s2 + $0x78] sm:$0xff]
      %v235 = vld [vmem:[%s2 + $0x80] sm:$0xff]
      %v236 = vld [vmem:[%s2 + $0x88] sm:$0xff]
      %v237 = vld [vmem:[%s2 + $0x90] sm:$0xff]
      %v238 = vld [vmem:[%s2 + $0x98] sm:$0xff]
      %v239 = vld [vmem:[%s2 + $0xa0] sm:$0xff]
      %v240 = vld [vmem:[%s2 + $0xa8] sm:$0xff]
      %v241 = vld [vmem:[%s2 + $0xb0] sm:$0xff]
      %v242 = vld [vmem:[%s2 + $0xb8] sm:$0xff]
      %v243 = vld [vmem:[%s2 + $0xc0] sm:$0xff]
      %v244 = vld [vmem:[%s2 + $0xc8] sm:$0xff]
      %v245 = vld [vmem:[%s2 + $0xd0] sm:$0xff]
      %v246 = vld [vmem:[%s2 + $0xd8] sm:$0xff]
      %v247 = vld [vmem:[%s2 + $0xe0] sm:$0xff]
      %v248 = vld [vmem:[%s2 + $0xe8] sm:$0xff]
      %v249 = vld [vmem:[%s2 + $0xf0] sm:$0xff]
      %v250 = vld [vmem:[%s2 + $0xf8] sm:$0xff]
      %v251 = vld [vmem:[%s2 + $0x100] sm:$0xff]
      %v252 = vld [vmem:[%s2 + $0x108] sm:$0xff]
      %v253 = vld [vmem:[%s2 + $0x110] sm:$0xff]
      %v254 = vld [vmem:[%s2 + $0x118] sm:$0xff]
      %v255 = vld [vmem:[%s2 + $0x120] sm:$0xff]
      %v256 = vld [vmem:[%s2 + $0x128] sm:$0xff]
      %v257 = vld [vmem:[%s2 + $0x130] sm:$0xff]
      %v258 = vld [vmem:[%s2 + $0x138] sm:$0xff]
      %v259 = vld [vmem:[%s2 + $0x140] sm:$0xff]
      %v260 = vld [vmem:[%s2 + $0x148] sm:$0xff]
      %v261 = vld [vmem:[%s2 + $0x150] sm:$0xff]
      %v262 = vld [vmem:[%s2 + $0x158] sm:$0xff]
      %v263 = vld [vmem:[%s2 + $0x160] sm:$0xff]
      %v264 = vld [vmem:[%s2 + $0x168] sm:$0xff]
      %v265 = vld [vmem:[%s2 + $0x170] sm:$0xff]
      %v266 = vld [vmem:[%s2 + $0x178] sm:$0xff]
      %v267 = vld [vmem:[%s3] sm:$0xff]
      %v268 = vld [vmem:[%s3 + $0x8] sm:$0xff]
      %v269 = vld [vmem:[%s3 + $0x10] sm:$0xff]
      %270 = vmatprep.subr.mxu0 0.0
      %v271 = vand.u32 %v234, 4294901760
      %272 = vmatpush1.msra.mxu0 %v271
      %273 = vmatprep.subr.mxu0 0.0
      %v274 = vand.u32 %v233, 4294901760
      %275 = vmatpush1.msra.mxu0 %v274
      %276 = vmatprep.subr.mxu0 0.0
      %v277 = vand.u32 %v232, 4294901760
      %278 = vmatpush1.msra.mxu0 %v277
      %279 = vmatprep.subr.mxu0 0.0
      %v280 = vand.u32 %v231, 4294901760
      %281 = vmatpush1.msra.mxu0 %v280
      %282 = vmatprep.subr.mxu0 0.0
      %v283 = vand.u32 %v230, 4294901760
      %284 = vmatpush1.msra.mxu0 %v283
      %285 = vmatprep.subr.mxu0 0.0
      %v286 = vand.u32 %v229, 4294901760
      %287 = vmatpush1.msra.mxu0 %v286
      %288 = vmatprep.subr.mxu0 0.0
      %v289 = vand.u32 %v228, 4294901760
      %290 = vmatpush1.msra.mxu0 %v289
      %291 = vmatprep.subr.mxu0 0.0
      %v292 = vand.u32 %v227, 4294901760
      %293 = vmatpush1.msra.mxu0 %v292
      %294 = vmatprep.subr.mxu0 0.0
      %v295 = vand.u32 %v226, 4294901760
      %296 = vmatpush1.msra.mxu0 %v295
      %297 = vmatprep.subr.mxu0 0.0
      %v298 = vand.u32 %v225, 4294901760
      %299 = vmatpush1.msra.mxu0 %v298
      %300 = vmatprep.subr.mxu0 0.0
      %v301 = vand.u32 %v224, 4294901760
      %302 = vmatpush1.msra.mxu0 %v301
      %303 = vmatprep.subr.mxu0 0.0
      %v304 = vand.u32 %v223, 4294901760
      %305 = vmatpush1.msra.mxu0 %v304
      %306 = vmatprep.subr.mxu0 0.0
      %v307 = vand.u32 %v222, 4294901760
      %308 = vmatpush1.msra.mxu0 %v307
      %309 = vmatprep.subr.mxu0 0.0
      %v310 = vand.u32 %v221, 4294901760
      %311 = vmatpush1.msra.mxu0 %v310
      %312 = vmatprep.subr.mxu0 0.0
      %v313 = vand.u32 %v220, 4294901760
      %314 = vmatpush1.msra.mxu0 %v313
      %315 = vmatprep.subr.mxu0 0.0
      %v316 = vand.u32 %v219, 4294901760
      %317 = vmatpush1.msra.mxu0 %v316
      %318 = vmatprep.subr.mxu0 0.0
      %v319 = vand.u32 %v250, 4294901760
      %320 = vmatpush2.msra.mxu0 %v319
      %321 = vmatprep.subr.mxu0 0.0
      %v322 = vand.u32 %v249, 4294901760
      %323 = vmatpush2.msra.mxu0 %v322
      %324 = vmatprep.subr.mxu0 0.0
      %v325 = vand.u32 %v248, 4294901760
      %326 = vmatpush2.msra.mxu0 %v325
      %327 = vmatprep.subr.mxu0 0.0
      %v328 = vand.u32 %v247, 4294901760
      %329 = vmatpush2.msra.mxu0 %v328
      %330 = vmatprep.subr.mxu0 0.0
      %v331 = vand.u32 %v246, 4294901760
      %332 = vmatpush2.msra.mxu0 %v331
      %333 = vmatprep.subr.mxu0 0.0
      %v334 = vand.u32 %v245, 4294901760
      %335 = vmatpush2.msra.mxu0 %v334
      %336 = vmatprep.subr.mxu0 0.0
      %v337 = vand.u32 %v244, 4294901760
      %338 = vmatpush2.msra.mxu0 %v337
      %339 = vmatprep.subr.mxu0 0.0
      %v340 = vand.u32 %v243, 4294901760
      %341 = vmatpush2.msra.mxu0 %v340
      %342 = vmatprep.subr.mxu0 0.0
      %v343 = vand.u32 %v242, 4294901760
      %344 = vmatpush2.msra.mxu0 %v343
      %345 = vmatprep.subr.mxu0 0.0
      %v346 = vand.u32 %v241, 4294901760
      %347 = vmatpush2.msra.mxu0 %v346
      %348 = vmatprep.subr.mxu0 0.0
      %v349 = vand.u32 %v240, 4294901760
      %350 = vmatpush2.msra.mxu0 %v349
      %351 = vmatprep.subr.mxu0 0.0
      %v352 = vand.u32 %v239, 4294901760
      %353 = vmatpush2.msra.mxu0 %v352
      %354 = vmatprep.subr.mxu0 0.0
      %v355 = vand.u32 %v238, 4294901760
      %356 = vmatpush2.msra.mxu0 %v355
      %357 = vmatprep.subr.mxu0 0.0
      %v358 = vand.u32 %v237, 4294901760
      %359 = vmatpush2.msra.mxu0 %v358
      %360 = vmatprep.subr.mxu0 0.0
      %v361 = vand.u32 %v236, 4294901760
      %362 = vmatpush2.msra.mxu0 %v361
      %363 = vmatprep.subr.mxu0 0.0
      %v364 = vand.u32 %v235, 4294901760
      %365 = vmatpush2.msra.mxu0 %v364
      %v366 = vand.u32 %v207, 4294901760
      %v367 = vsub.f32 %v207, %v366
      %v368 = vand.u32 %v367, 4294901760
      %v369 = vsub.f32 %v367, %v368
      %v370 = vand.u32 %v369, 4294901760
      %371 = vmatprep.mubr.f32.mxu0 %v370
      %v372 = vand.u32 %v206, 4294901760
      %v373 = vsub.f32 %v206, %v372
      %v374 = vand.u32 %v373, 4294901760
      %v375 = vsub.f32 %v373, %v374
      %v376 = vand.u32 %v375, 4294901760
      %377 = vmatmul.mubr.f32.gmra.mxu0 %v376
      %v378 = vpop.f32.mrf.mxu0
      %v379 = vadd.f32 0.0, %v378
      %v380 = vpop.f32.mrf.mxu0
      %v381 = vand.u32 %v210, 4294901760
      %v382 = vsub.f32 %v210, %v381
      %v383 = vand.u32 %v382, 4294901760
      %v384 = vsub.f32 %v382, %v383
      %v385 = vand.u32 %v384, 4294901760
      %386 = vmatprep.mubr.f32.mxu0 %v385
      %v387 = vand.u32 %v209, 4294901760
      %v388 = vsub.f32 %v209, %v387
      %v389 = vand.u32 %v388, 4294901760
      %v390 = vsub.f32 %v388, %v389
      %v391 = vand.u32 %v390, 4294901760
      %392 = vmatmul.mubr.f32.gmra.mxu0 %v391
      %v393 = vpop.f32.mrf.mxu0
      %v394 = vadd.f32 0.0, %v393
      %v395 = vpop.f32.mrf.mxu0
      %v396 = vand.u32 %v213, 4294901760
      %v397 = vsub.f32 %v213, %v396
      %v398 = vand.u32 %v397, 4294901760
      %v399 = vsub.f32 %v397, %v398
      %v400 = vand.u32 %v399, 4294901760
      %401 = vmatprep.mubr.f32.mxu0 %v400
      %v402 = vand.u32 %v212, 4294901760
      %v403 = vsub.f32 %v212, %v402
      %v404 = vand.u32 %v403, 4294901760
      %v405 = vsub.f32 %v403, %v404
      %v406 = vand.u32 %v405, 4294901760
      %407 = vmatmul.mubr.f32.gmra.mxu0 %v406
      %v408 = vpop.f32.mrf.mxu0
      %v409 = vadd.f32 0.0, %v408
      %v410 = vpop.f32.mrf.mxu0
      %v411 = vand.u32 %v216, 4294901760
      %v412 = vsub.f32 %v216, %v411
      %v413 = vand.u32 %v412, 4294901760
      %v414 = vsub.f32 %v412, %v413
      %v415 = vand.u32 %v414, 4294901760
      %416 = vmatprep.mubr.f32.mxu0 %v415
      %v417 = vand.u32 %v215, 4294901760
      %v418 = vsub.f32 %v215, %v417
      %v419 = vand.u32 %v418, 4294901760
      %v420 = vsub.f32 %v418, %v419
      %v421 = vand.u32 %v420, 4294901760
      %422 = vmatmul.mubr.f32.gmra.mxu0 %v421
      %v423 = vpop.f32.mrf.mxu0
      %v424 = vadd.f32 0.0, %v423
      %v425 = vpop.f32.mrf.mxu0
      %426 = vdwg.mxu0
      %427 = vmatprep.subr.mxu0 0.0
      %v428 = vand.u32 %v234, 4294901760
      %v429 = vsub.f32 %v234, %v428
      %v430 = vand.u32 %v429, 4294901760
      %v431 = vsub.f32 %v429, %v430
      %v432 = vand.u32 %v431, 4294901760
      %433 = vmatpush1.msra.mxu0 %v432
      %434 = vmatprep.subr.mxu0 0.0
      %v435 = vand.u32 %v233, 4294901760
      %v436 = vsub.f32 %v233, %v435
      %v437 = vand.u32 %v436, 4294901760
      %v438 = vsub.f32 %v436, %v437
      %v439 = vand.u32 %v438, 4294901760
      %440 = vmatpush1.msra.mxu0 %v439
      %441 = vmatprep.subr.mxu0 0.0
      %v442 = vand.u32 %v232, 4294901760
      %v443 = vsub.f32 %v232, %v442
      %v444 = vand.u32 %v443, 4294901760
      %v445 = vsub.f32 %v443, %v444
      %v446 = vand.u32 %v445, 4294901760
      %447 = vmatpush1.msra.mxu0 %v446
      %448 = vmatprep.subr.mxu0 0.0
      %v449 = vand.u32 %v231, 4294901760
      %v450 = vsub.f32 %v231, %v449
      %v451 = vand.u32 %v450, 4294901760
      %v452 = vsub.f32 %v450, %v451
      %v453 = vand.u32 %v452, 4294901760
      %454 = vmatpush1.msra.mxu0 %v453
      %455 = vmatprep.subr.mxu0 0.0
      %v456 = vand.u32 %v230, 4294901760
      %v457 = vsub.f32 %v230, %v456
      %v458 = vand.u32 %v457, 4294901760
      %v459 = vsub.f32 %v457, %v458
      %v460 = vand.u32 %v459, 4294901760
      %461 = vmatpush1.msra.mxu0 %v460
      %462 = vmatprep.subr.mxu0 0.0
      %v463 = vand.u32 %v229, 4294901760
      %v464 = vsub.f32 %v229, %v463
      %v465 = vand.u32 %v464, 4294901760
      %v466 = vsub.f32 %v464, %v465
      %v467 = vand.u32 %v466, 4294901760
      %468 = vmatpush1.msra.mxu0 %v467
      %469 = vmatprep.subr.mxu0 0.0
      %v470 = vand.u32 %v228, 4294901760
      %v471 = vsub.f32 %v228, %v470
      %v472 = vand.u32 %v471, 4294901760
      %v473 = vsub.f32 %v471, %v472
      %v474 = vand.u32 %v473, 4294901760
      %475 = vmatpush1.msra.mxu0 %v474
      %476 = vmatprep.subr.mxu0 0.0
      %v477 = vand.u32 %v227, 4294901760
      %v478 = vsub.f32 %v227, %v477
      %v479 = vand.u32 %v478, 4294901760
      %v480 = vsub.f32 %v478, %v479
      %v481 = vand.u32 %v480, 4294901760
      %482 = vmatpush1.msra.mxu0 %v481
      %483 = vmatprep.subr.mxu0 0.0
      %v484 = vand.u32 %v226, 4294901760
      %v485 = vsub.f32 %v226, %v484
      %v486 = vand.u32 %v485, 4294901760
      %v487 = vsub.f32 %v485, %v486
      %v488 = vand.u32 %v487, 4294901760
      %489 = vmatpush1.msra.mxu0 %v488
      %490 = vmatprep.subr.mxu0 0.0
      %v491 = vand.u32 %v225, 4294901760
      %v492 = vsub.f32 %v225, %v491
      %v493 = vand.u32 %v492, 4294901760
      %v494 = vsub.f32 %v492, %v493
      %v495 = vand.u32 %v494, 4294901760
      %496 = vmatpush1.msra.mxu0 %v495
      %497 = vmatprep.subr.mxu0 0.0
      %v498 = vand.u32 %v224, 4294901760
      %v499 = vsub.f32 %v224, %v498
      %v500 = vand.u32 %v499, 4294901760
      %v501 = vsub.f32 %v499, %v500
      %v502 = vand.u32 %v501, 4294901760
      %503 = vmatpush1.msra.mxu0 %v502
      %504 = vmatprep.subr.mxu0 0.0
      %v505 = vand.u32 %v223, 4294901760
      %v506 = vsub.f32 %v223, %v505
      %v507 = vand.u32 %v506, 4294901760
      %v508 = vsub.f32 %v506, %v507
      %v509 = vand.u32 %v508, 4294901760
      %510 = vmatpush1.msra.mxu0 %v509
      %511 = vmatprep.subr.mxu0 0.0
      %v512 = vand.u32 %v222, 4294901760
      %v513 = vsub.f32 %v222, %v512
      %v514 = vand.u32 %v513, 4294901760
      %v515 = vsub.f32 %v513, %v514
      %v516 = vand.u32 %v515, 4294901760
      %517 = vmatpush1.msra.mxu0 %v516
      %518 = vmatprep.subr.mxu0 0.0
      %v519 = vand.u32 %v221, 4294901760
      %v520 = vsub.f32 %v221, %v519
      %v521 = vand.u32 %v520, 4294901760
      %v522 = vsub.f32 %v520, %v521
      %v523 = vand.u32 %v522, 4294901760
      %524 = vmatpush1.msra.mxu0 %v523
      %525 = vmatprep.subr.mxu0 0.0
      %v526 = vand.u32 %v220, 4294901760
      %v527 = vsub.f32 %v220, %v526
      %v528 = vand.u32 %v527, 4294901760
      %v529 = vsub.f32 %v527, %v528
      %v530 = vand.u32 %v529, 4294901760
      %531 = vmatpush1.msra.mxu0 %v530
      %532 = vmatprep.subr.mxu0 0.0
      %v533 = vand.u32 %v219, 4294901760
      %v534 = vsub.f32 %v219, %v533
      %v535 = vand.u32 %v534, 4294901760
      %v536 = vsub.f32 %v534, %v535
      %v537 = vand.u32 %v536, 4294901760
      %538 = vmatpush1.msra.mxu0 %v537
      %539 = vmatprep.subr.mxu0 0.0
      %v540 = vand.u32 %v250, 4294901760
      %v541 = vsub.f32 %v250, %v540
      %v542 = vand.u32 %v541, 4294901760
      %v543 = vsub.f32 %v541, %v542
      %v544 = vand.u32 %v543, 4294901760
      %545 = vmatpush2.msra.mxu0 %v544
      %546 = vmatprep.subr.mxu0 0.0
      %v547 = vand.u32 %v249, 4294901760
      %v548 = vsub.f32 %v249, %v547
      %v549 = vand.u32 %v548, 4294901760
      %v550 = vsub.f32 %v548, %v549
      %v551 = vand.u32 %v550, 4294901760
      %552 = vmatpush2.msra.mxu0 %v551
      %553 = vmatprep.subr.mxu0 0.0
      %v554 = vand.u32 %v248, 4294901760
      %v555 = vsub.f32 %v248, %v554
      %v556 = vand.u32 %v555, 4294901760
      %v557 = vsub.f32 %v555, %v556
      %v558 = vand.u32 %v557, 4294901760
      %559 = vmatpush2.msra.mxu0 %v558
      %560 = vmatprep.subr.mxu0 0.0
      %v561 = vand.u32 %v247, 4294901760
      %v562 = vsub.f32 %v247, %v561
      %v563 = vand.u32 %v562, 4294901760
      %v564 = vsub.f32 %v562, %v563
      %v565 = vand.u32 %v564, 4294901760
      %566 = vmatpush2.msra.mxu0 %v565
      %567 = vmatprep.subr.mxu0 0.0
      %v568 = vand.u32 %v246, 4294901760
      %v569 = vsub.f32 %v246, %v568
      %v570 = vand.u32 %v569, 4294901760
      %v571 = vsub.f32 %v569, %v570
      %v572 = vand.u32 %v571, 4294901760
      %573 = vmatpush2.msra.mxu0 %v572
      %574 = vmatprep.subr.mxu0 0.0
      %v575 = vand.u32 %v245, 4294901760
      %v576 = vsub.f32 %v245, %v575
      %v577 = vand.u32 %v576, 4294901760
      %v578 = vsub.f32 %v576, %v577
      %v579 = vand.u32 %v578, 4294901760
      %580 = vmatpush2.msra.mxu0 %v579
      %581 = vmatprep.subr.mxu0 0.0
      %v582 = vand.u32 %v244, 4294901760
      %v583 = vsub.f32 %v244, %v582
      %v584 = vand.u32 %v583, 4294901760
      %v585 = vsub.f32 %v583, %v584
      %v586 = vand.u32 %v585, 4294901760
      %587 = vmatpush2.msra.mxu0 %v586
      %588 = vmatprep.subr.mxu0 0.0
      %v589 = vand.u32 %v243, 4294901760
      %v590 = vsub.f32 %v243, %v589
      %v591 = vand.u32 %v590, 4294901760
      %v592 = vsub.f32 %v590, %v591
      %v593 = vand.u32 %v592, 4294901760
      %594 = vmatpush2.msra.mxu0 %v593
      %595 = vmatprep.subr.mxu0 0.0
      %v596 = vand.u32 %v242, 4294901760
      %v597 = vsub.f32 %v242, %v596
      %v598 = vand.u32 %v597, 4294901760
      %v599 = vsub.f32 %v597, %v598
      %v600 = vand.u32 %v599, 4294901760
      %601 = vmatpush2.msra.mxu0 %v600
      %602 = vmatprep.subr.mxu0 0.0
      %v603 = vand.u32 %v241, 4294901760
      %v604 = vsub.f32 %v241, %v603
      %v605 = vand.u32 %v604, 4294901760
      %v606 = vsub.f32 %v604, %v605
      %v607 = vand.u32 %v606, 4294901760
      %608 = vmatpush2.msra.mxu0 %v607
      %609 = vmatprep.subr.mxu0 0.0
      %v610 = vand.u32 %v240, 4294901760
      %v611 = vsub.f32 %v240, %v610
      %v612 = vand.u32 %v611, 4294901760
      %v613 = vsub.f32 %v611, %v612
      %v614 = vand.u32 %v613, 4294901760
      %615 = vmatpush2.msra.mxu0 %v614
      %616 = vmatprep.subr.mxu0 0.0
      %v617 = vand.u32 %v239, 4294901760
      %v618 = vsub.f32 %v239, %v617
      %v619 = vand.u32 %v618, 4294901760
      %v620 = vsub.f32 %v618, %v619
      %v621 = vand.u32 %v620, 4294901760
      %622 = vmatpush2.msra.mxu0 %v621
      %623 = vmatprep.subr.mxu0 0.0
      %v624 = vand.u32 %v238, 4294901760
      %v625 = vsub.f32 %v238, %v624
      %v626 = vand.u32 %v625, 4294901760
      %v627 = vsub.f32 %v625, %v626
      %v628 = vand.u32 %v627, 4294901760
      %629 = vmatpush2.msra.mxu0 %v628
      %630 = vmatprep.subr.mxu0 0.0
      %v631 = vand.u32 %v237, 4294901760
      %v632 = vsub.f32 %v237, %v631
      %v633 = vand.u32 %v632, 4294901760
      %v634 = vsub.f32 %v632, %v633
      %v635 = vand.u32 %v634, 4294901760
      %636 = vmatpush2.msra.mxu0 %v635
      %637 = vmatprep.subr.mxu0 0.0
      %v638 = vand.u32 %v236, 4294901760
      %v639 = vsub.f32 %v236, %v638
      %v640 = vand.u32 %v639, 4294901760
      %v641 = vsub.f32 %v639, %v640
      %v642 = vand.u32 %v641, 4294901760
      %643 = vmatpush2.msra.mxu0 %v642
      %644 = vmatprep.subr.mxu0 0.0
      %v645 = vand.u32 %v235, 4294901760
      %v646 = vsub.f32 %v235, %v645
      %v647 = vand.u32 %v646, 4294901760
      %v648 = vsub.f32 %v646, %v647
      %v649 = vand.u32 %v648, 4294901760
      %650 = vmatpush2.msra.mxu0 %v649
      %v651 = vand.u32 %v207, 4294901760
      %652 = vmatprep.mubr.f32.mxu0 %v651
      %v653 = vand.u32 %v206, 4294901760
      %654 = vmatmul.mubr.f32.gmra.mxu0 %v653
      %v655 = vpop.f32.mrf.mxu0
      %v656 = vadd.f32 %v379, %v655
      %v657 = vpop.f32.mrf.mxu0
      %v658 = vand.u32 %v210, 4294901760
      %659 = vmatprep.mubr.f32.mxu0 %v658
      %v660 = vand.u32 %v209, 4294901760
      %661 = vmatmul.mubr.f32.gmra.mxu0 %v660
      %v662 = vpop.f32.mrf.mxu0
      %v663 = vadd.f32 %v394, %v662
      %v664 = vpop.f32.mrf.mxu0
      %v665 = vand.u32 %v213, 4294901760
      %666 = vmatprep.mubr.f32.mxu0 %v665
      %v667 = vand.u32 %v212, 4294901760
      %668 = vmatmul.mubr.f32.gmra.mxu0 %v667
      %v669 = vpop.f32.mrf.mxu0
      %v670 = vadd.f32 %v409, %v669
      %v671 = vpop.f32.mrf.mxu0
      %v672 = vand.u32 %v216, 4294901760
      %673 = vmatprep.mubr.f32.mxu0 %v672
      %v674 = vand.u32 %v215, 4294901760
      %675 = vmatmul.mubr.f32.gmra.mxu0 %v674
      %v676 = vpop.f32.mrf.mxu0
      %v677 = vadd.f32 %v424, %v676
      %v678 = vpop.f32.mrf.mxu0
      %679 = vdwg.mxu0
      %680 = vmatprep.subr.mxu0 0.0
      %v681 = vand.u32 %v234, 4294901760
      %v682 = vsub.f32 %v234, %v681
      %683 = vmatpush1.msra.mxu0 %v682
      %684 = vmatprep.subr.mxu0 0.0
      %v685 = vand.u32 %v233, 4294901760
      %v686 = vsub.f32 %v233, %v685
      %687 = vmatpush1.msra.mxu0 %v686
      %688 = vmatprep.subr.mxu0 0.0
      %v689 = vand.u32 %v232, 4294901760
      %v690 = vsub.f32 %v232, %v689
      %691 = vmatpush1.msra.mxu0 %v690
      %692 = vmatprep.subr.mxu0 0.0
      %v693 = vand.u32 %v231, 4294901760
      %v694 = vsub.f32 %v231, %v693
      %695 = vmatpush1.msra.mxu0 %v694
      %696 = vmatprep.subr.mxu0 0.0
      %v697 = vand.u32 %v230, 4294901760
      %v698 = vsub.f32 %v230, %v697
      %699 = vmatpush1.msra.mxu0 %v698
      %700 = vmatprep.subr.mxu0 0.0
      %v701 = vand.u32 %v229, 4294901760
      %v702 = vsub.f32 %v229, %v701
      %703 = vmatpush1.msra.mxu0 %v702
      %704 = vmatprep.subr.mxu0 0.0
      %v705 = vand.u32 %v228, 4294901760
      %v706 = vsub.f32 %v228, %v705
      %707 = vmatpush1.msra.mxu0 %v706
      %708 = vmatprep.subr.mxu0 0.0
      %v709 = vand.u32 %v227, 4294901760
      %v710 = vsub.f32 %v227, %v709
      %711 = vmatpush1.msra.mxu0 %v710
      %712 = vmatprep.subr.mxu0 0.0
      %v713 = vand.u32 %v226, 4294901760
      %v714 = vsub.f32 %v226, %v713
      %715 = vmatpush1.msra.mxu0 %v714
      %716 = vmatprep.subr.mxu0 0.0
      %v717 = vand.u32 %v225, 4294901760
      %v718 = vsub.f32 %v225, %v717
      %719 = vmatpush1.msra.mxu0 %v718
      %720 = vmatprep.subr.mxu0 0.0
      %v721 = vand.u32 %v224, 4294901760
      %v722 = vsub.f32 %v224, %v721
      %723 = vmatpush1.msra.mxu0 %v722
      %724 = vmatprep.subr.mxu0 0.0
      %v725 = vand.u32 %v223, 4294901760
      %v726 = vsub.f32 %v223, %v725
      %727 = vmatpush1.msra.mxu0 %v726
      %728 = vmatprep.subr.mxu0 0.0
      %v729 = vand.u32 %v222, 4294901760
      %v730 = vsub.f32 %v222, %v729
      %731 = vmatpush1.msra.mxu0 %v730
      %732 = vmatprep.subr.mxu0 0.0
      %v733 = vand.u32 %v221, 4294901760
      %v734 = vsub.f32 %v221, %v733
      %735 = vmatpush1.msra.mxu0 %v734
      %736 = vmatprep.subr.mxu0 0.0
      %v737 = vand.u32 %v220, 4294901760
      %v738 = vsub.f32 %v220, %v737
      %739 = vmatpush1.msra.mxu0 %v738
      %740 = vmatprep.subr.mxu0 0.0
      %v741 = vand.u32 %v219, 4294901760
      %v742 = vsub.f32 %v219, %v741
      %743 = vmatpush1.msra.mxu0 %v742
      %744 = vmatprep.subr.mxu0 0.0
      %v745 = vand.u32 %v250, 4294901760
      %v746 = vsub.f32 %v250, %v745
      %747 = vmatpush2.msra.mxu0 %v746
      %748 = vmatprep.subr.mxu0 0.0
      %v749 = vand.u32 %v249, 4294901760
      %v750 = vsub.f32 %v249, %v749
      %751 = vmatpush2.msra.mxu0 %v750
      %752 = vmatprep.subr.mxu0 0.0
      %v753 = vand.u32 %v248, 4294901760
      %v754 = vsub.f32 %v248, %v753
      %755 = vmatpush2.msra.mxu0 %v754
      %756 = vmatprep.subr.mxu0 0.0
      %v757 = vand.u32 %v247, 4294901760
      %v758 = vsub.f32 %v247, %v757
      %759 = vmatpush2.msra.mxu0 %v758
      %760 = vmatprep.subr.mxu0 0.0
      %v761 = vand.u32 %v246, 4294901760
      %v762 = vsub.f32 %v246, %v761
      %763 = vmatpush2.msra.mxu0 %v762
      %764 = vmatprep.subr.mxu0 0.0
      %v765 = vand.u32 %v245, 4294901760
      %v766 = vsub.f32 %v245, %v765
      %767 = vmatpush2.msra.mxu0 %v766
      %768 = vmatprep.subr.mxu0 0.0
      %v769 = vand.u32 %v244, 4294901760
      %v770 = vsub.f32 %v244, %v769
      %771 = vmatpush2.msra.mxu0 %v770
      %772 = vmatprep.subr.mxu0 0.0
      %v773 = vand.u32 %v243, 4294901760
      %v774 = vsub.f32 %v243, %v773
      %775 = vmatpush2.msra.mxu0 %v774
      %776 = vmatprep.subr.mxu0 0.0
      %v777 = vand.u32 %v242, 4294901760
      %v778 = vsub.f32 %v242, %v777
      %779 = vmatpush2.msra.mxu0 %v778
      %780 = vmatprep.subr.mxu0 0.0
      %v781 = vand.u32 %v241, 4294901760
      %v782 = vsub.f32 %v241, %v781
      %783 = vmatpush2.msra.mxu0 %v782
      %784 = vmatprep.subr.mxu0 0.0
      %v785 = vand.u32 %v240, 4294901760
      %v786 = vsub.f32 %v240, %v785
      %787 = vmatpush2.msra.mxu0 %v786
      %788 = vmatprep.subr.mxu0 0.0
      %v789 = vand.u32 %v239, 4294901760
      %v790 = vsub.f32 %v239, %v789
      %791 = vmatpush2.msra.mxu0 %v790
      %792 = vmatprep.subr.mxu0 0.0
      %v793 = vand.u32 %v238, 4294901760
      %v794 = vsub.f32 %v238, %v793
      %795 = vmatpush2.msra.mxu0 %v794
      %796 = vmatprep.subr.mxu0 0.0
      %v797 = vand.u32 %v237, 4294901760
      %v798 = vsub.f32 %v237, %v797
      %799 = vmatpush2.msra.mxu0 %v798
      %800 = vmatprep.subr.mxu0 0.0
      %v801 = vand.u32 %v236, 4294901760
      %v802 = vsub.f32 %v236, %v801
      %803 = vmatpush2.msra.mxu0 %v802
      %804 = vmatprep.subr.mxu0 0.0
      %v805 = vand.u32 %v235, 4294901760
      %v806 = vsub.f32 %v235, %v805
      %807 = vmatpush2.msra.mxu0 %v806
      %v808 = vand.u32 %v207, 4294901760
      %v809 = vsub.f32 %v207, %v808
      %810 = vmatprep.mubr.f32.mxu0 %v809
      %v811 = vand.u32 %v206, 4294901760
      %v812 = vsub.f32 %v206, %v811
      %813 = vmatmul.mubr.f32.gmra.mxu0 %v812
      %v814 = vpop.f32.mrf.mxu0
      %v815 = vadd.f32 %v656, %v814
      %v816 = vpop.f32.mrf.mxu0
      %v817 = vand.u32 %v210, 4294901760
      %v818 = vsub.f32 %v210, %v817
      %819 = vmatprep.mubr.f32.mxu0 %v818
      %v820 = vand.u32 %v209, 4294901760
      %v821 = vsub.f32 %v209, %v820
      %822 = vmatmul.mubr.f32.gmra.mxu0 %v821
      %v823 = vpop.f32.mrf.mxu0
      %v824 = vadd.f32 %v663, %v823
      %v825 = vpop.f32.mrf.mxu0
      %v826 = vand.u32 %v213, 4294901760
      %v827 = vsub.f32 %v213, %v826
      %828 = vmatprep.mubr.f32.mxu0 %v827
      %v829 = vand.u32 %v212, 4294901760
      %v830 = vsub.f32 %v212, %v829
      %831 = vmatmul.mubr.f32.gmra.mxu0 %v830
      %v832 = vpop.f32.mrf.mxu0
      %v833 = vadd.f32 %v670, %v832
      %v834 = vpop.f32.mrf.mxu0
      %v835 = vand.u32 %v216, 4294901760
      %v836 = vsub.f32 %v216, %v835
      %837 = vmatprep.mubr.f32.mxu0 %v836
      %v838 = vand.u32 %v215, 4294901760
      %v839 = vsub.f32 %v215, %v838
      %840 = vmatmul.mubr.f32.gmra.mxu0 %v839
      %v841 = vpop.f32.mrf.mxu0
      %v842 = vadd.f32 %v677, %v841
      %v843 = vpop.f32.mrf.mxu0
      %844 = vdwg.mxu0
      %845 = vmatprep.subr.mxu0 0.0
      %v846 = vand.u32 %v234, 4294901760
      %847 = vmatpush1.msra.mxu0 %v846
      %848 = vmatprep.subr.mxu0 0.0
      %v849 = vand.u32 %v233, 4294901760
      %850 = vmatpush1.msra.mxu0 %v849
      %851 = vmatprep.subr.mxu0 0.0
      %v852 = vand.u32 %v232, 4294901760
      %853 = vmatpush1.msra.mxu0 %v852
      %854 = vmatprep.subr.mxu0 0.0
      %v855 = vand.u32 %v231, 4294901760
      %856 = vmatpush1.msra.mxu0 %v855
      %857 = vmatprep.subr.mxu0 0.0
      %v858 = vand.u32 %v230, 4294901760
      %859 = vmatpush1.msra.mxu0 %v858
      %860 = vmatprep.subr.mxu0 0.0
      %v861 = vand.u32 %v229, 4294901760
      %862 = vmatpush1.msra.mxu0 %v861
      %863 = vmatprep.subr.mxu0 0.0
      %v864 = vand.u32 %v228, 4294901760
      %865 = vmatpush1.msra.mxu0 %v864
      %866 = vmatprep.subr.mxu0 0.0
      %v867 = vand.u32 %v227, 4294901760
      %868 = vmatpush1.msra.mxu0 %v867
      %869 = vmatprep.subr.mxu0 0.0
      %v870 = vand.u32 %v226, 4294901760
      %871 = vmatpush1.msra.mxu0 %v870
      %872 = vmatprep.subr.mxu0 0.0
      %v873 = vand.u32 %v225, 4294901760
      %874 = vmatpush1.msra.mxu0 %v873
      %875 = vmatprep.subr.mxu0 0.0
      %v876 = vand.u32 %v224, 4294901760
      %877 = vmatpush1.msra.mxu0 %v876
      %878 = vmatprep.subr.mxu0 0.0
      %v879 = vand.u32 %v223, 4294901760
      %880 = vmatpush1.msra.mxu0 %v879
      %881 = vmatprep.subr.mxu0 0.0
      %v882 = vand.u32 %v222, 4294901760
      %883 = vmatpush1.msra.mxu0 %v882
      %884 = vmatprep.subr.mxu0 0.0
      %v885 = vand.u32 %v221, 4294901760
      %886 = vmatpush1.msra.mxu0 %v885
      %887 = vmatprep.subr.mxu0 0.0
      %v888 = vand.u32 %v220, 4294901760
      %889 = vmatpush1.msra.mxu0 %v888
      %890 = vmatprep.subr.mxu0 0.0
      %v891 = vand.u32 %v219, 4294901760
      %892 = vmatpush1.msra.mxu0 %v891
      %893 = vmatprep.subr.mxu0 0.0
      %v894 = vand.u32 %v250, 4294901760
      %895 = vmatpush2.msra.mxu0 %v894
      %896 = vmatprep.subr.mxu0 0.0
      %v897 = vand.u32 %v249, 4294901760
      %898 = vmatpush2.msra.mxu0 %v897
      %899 = vmatprep.subr.mxu0 0.0
      %v900 = vand.u32 %v248, 4294901760
      %901 = vmatpush2.msra.mxu0 %v900
      %902 = vmatprep.subr.mxu0 0.0
      %v903 = vand.u32 %v247, 4294901760
      %904 = vmatpush2.msra.mxu0 %v903
      %905 = vmatprep.subr.mxu0 0.0
      %v906 = vand.u32 %v246, 4294901760
      %907 = vmatpush2.msra.mxu0 %v906
      %908 = vmatprep.subr.mxu0 0.0
      %v909 = vand.u32 %v245, 4294901760
      %910 = vmatpush2.msra.mxu0 %v909
      %911 = vmatprep.subr.mxu0 0.0
      %v912 = vand.u32 %v244, 4294901760
      %913 = vmatpush2.msra.mxu0 %v912
      %914 = vmatprep.subr.mxu0 0.0
      %v915 = vand.u32 %v243, 4294901760
      %916 = vmatpush2.msra.mxu0 %v915
      %917 = vmatprep.subr.mxu0 0.0
      %v918 = vand.u32 %v242, 4294901760
      %919 = vmatpush2.msra.mxu0 %v918
      %920 = vmatprep.subr.mxu0 0.0
      %v921 = vand.u32 %v241, 4294901760
      %922 = vmatpush2.msra.mxu0 %v921
      %923 = vmatprep.subr.mxu0 0.0
      %v924 = vand.u32 %v240, 4294901760
      %925 = vmatpush2.msra.mxu0 %v924
      %926 = vmatprep.subr.mxu0 0.0
      %v927 = vand.u32 %v239, 4294901760
      %928 = vmatpush2.msra.mxu0 %v927
      %929 = vmatprep.subr.mxu0 0.0
      %v930 = vand.u32 %v238, 4294901760
      %931 = vmatpush2.msra.mxu0 %v930
      %932 = vmatprep.subr.mxu0 0.0
      %v933 = vand.u32 %v237, 4294901760
      %934 = vmatpush2.msra.mxu0 %v933
      %935 = vmatprep.subr.mxu0 0.0
      %v936 = vand.u32 %v236, 4294901760
      %937 = vmatpush2.msra.mxu0 %v936
      %938 = vmatprep.subr.mxu0 0.0
      %v939 = vand.u32 %v235, 4294901760
      %940 = vmatpush2.msra.mxu0 %v939
      %v941 = vand.u32 %v207, 4294901760
      %v942 = vsub.f32 %v207, %v941
      %v943 = vand.u32 %v942, 4294901760
      %944 = vmatprep.mubr.f32.mxu0 %v943
      %v945 = vand.u32 %v206, 4294901760
      %v946 = vsub.f32 %v206, %v945
      %v947 = vand.u32 %v946, 4294901760
      %948 = vmatmul.mubr.f32.gmra.mxu0 %v947
      %v949 = vpop.f32.mrf.mxu0
      %v950 = vadd.f32 %v815, %v949
      %v951 = vpop.f32.mrf.mxu0
      %v952 = vand.u32 %v210, 4294901760
      %v953 = vsub.f32 %v210, %v952
      %v954 = vand.u32 %v953, 4294901760
      %955 = vmatprep.mubr.f32.mxu0 %v954
      %v956 = vand.u32 %v209, 4294901760
      %v957 = vsub.f32 %v209, %v956
      %v958 = vand.u32 %v957, 4294901760
      %959 = vmatmul.mubr.f32.gmra.mxu0 %v958
      %v960 = vpop.f32.mrf.mxu0
      %v961 = vadd.f32 %v824, %v960
      %v962 = vpop.f32.mrf.mxu0
      %v963 = vand.u32 %v213, 4294901760
      %v964 = vsub.f32 %v213, %v963
      %v965 = vand.u32 %v964, 4294901760
      %966 = vmatprep.mubr.f32.mxu0 %v965
      %v967 = vand.u32 %v212, 4294901760
      %v968 = vsub.f32 %v212, %v967
      %v969 = vand.u32 %v968, 4294901760
      %970 = vmatmul.mubr.f32.gmra.mxu0 %v969
      %v971 = vpop.f32.mrf.mxu0
      %v972 = vadd.f32 %v833, %v971
      %v973 = vpop.f32.mrf.mxu0
      %v974 = vand.u32 %v216, 4294901760
      %v975 = vsub.f32 %v216, %v974
      %v976 = vand.u32 %v975, 4294901760
      %977 = vmatprep.mubr.f32.mxu0 %v976
      %v978 = vand.u32 %v215, 4294901760
      %v979 = vsub.f32 %v215, %v978
      %v980 = vand.u32 %v979, 4294901760
      %981 = vmatmul.mubr.f32.gmra.mxu0 %v980
      %v982 = vpop.f32.mrf.mxu0
      %v983 = vadd.f32 %v842, %v982
      %v984 = vpop.f32.mrf.mxu0
      %985 = vdwg.mxu0
      %986 = vmatprep.subr.mxu0 0.0
      %v987 = vand.u32 %v234, 4294901760
      %v988 = vsub.f32 %v234, %v987
      %v989 = vand.u32 %v988, 4294901760
      %990 = vmatpush1.msra.mxu0 %v989
      %991 = vmatprep.subr.mxu0 0.0
      %v992 = vand.u32 %v233, 4294901760
      %v993 = vsub.f32 %v233, %v992
      %v994 = vand.u32 %v993, 4294901760
      %995 = vmatpush1.msra.mxu0 %v994
      %996 = vmatprep.subr.mxu0 0.0
      %v997 = vand.u32 %v232, 4294901760
      %v998 = vsub.f32 %v232, %v997
      %v999 = vand.u32 %v998, 4294901760
      %1000 = vmatpush1.msra.mxu0 %v999
      %1001 = vmatprep.subr.mxu0 0.0
      %v1002 = vand.u32 %v231, 4294901760
      %v1003 = vsub.f32 %v231, %v1002
      %v1004 = vand.u32 %v1003, 4294901760
      %1005 = vmatpush1.msra.mxu0 %v1004
      %1006 = vmatprep.subr.mxu0 0.0
      %v1007 = vand.u32 %v230, 4294901760
      %v1008 = vsub.f32 %v230, %v1007
      %v1009 = vand.u32 %v1008, 4294901760
      %1010 = vmatpush1.msra.mxu0 %v1009
      %1011 = vmatprep.subr.mxu0 0.0
      %v1012 = vand.u32 %v229, 4294901760
      %v1013 = vsub.f32 %v229, %v1012
      %v1014 = vand.u32 %v1013, 4294901760
      %1015 = vmatpush1.msra.mxu0 %v1014
      %1016 = vmatprep.subr.mxu0 0.0
      %v1017 = vand.u32 %v228, 4294901760
      %v1018 = vsub.f32 %v228, %v1017
      %v1019 = vand.u32 %v1018, 4294901760
      %1020 = vmatpush1.msra.mxu0 %v1019
      %1021 = vmatprep.subr.mxu0 0.0
      %v1022 = vand.u32 %v227, 4294901760
      %v1023 = vsub.f32 %v227, %v1022
      %v1024 = vand.u32 %v1023, 4294901760
      %1025 = vmatpush1.msra.mxu0 %v1024
      %1026 = vmatprep.subr.mxu0 0.0
      %v1027 = vand.u32 %v226, 4294901760
      %v1028 = vsub.f32 %v226, %v1027
      %v1029 = vand.u32 %v1028, 4294901760
      %1030 = vmatpush1.msra.mxu0 %v1029
      %1031 = vmatprep.subr.mxu0 0.0
      %v1032 = vand.u32 %v225, 4294901760
      %v1033 = vsub.f32 %v225, %v1032
      %v1034 = vand.u32 %v1033, 4294901760
      %1035 = vmatpush1.msra.mxu0 %v1034
      %1036 = vmatprep.subr.mxu0 0.0
      %v1037 = vand.u32 %v224, 4294901760
      %v1038 = vsub.f32 %v224, %v1037
      %v1039 = vand.u32 %v1038, 4294901760
      %1040 = vmatpush1.msra.mxu0 %v1039
      %1041 = vmatprep.subr.mxu0 0.0
      %v1042 = vand.u32 %v223, 4294901760
      %v1043 = vsub.f32 %v223, %v1042
      %v1044 = vand.u32 %v1043, 4294901760
      %1045 = vmatpush1.msra.mxu0 %v1044
      %1046 = vmatprep.subr.mxu0 0.0
      %v1047 = vand.u32 %v222, 4294901760
      %v1048 = vsub.f32 %v222, %v1047
      %v1049 = vand.u32 %v1048, 4294901760
      %1050 = vmatpush1.msra.mxu0 %v1049
      %1051 = vmatprep.subr.mxu0 0.0
      %v1052 = vand.u32 %v221, 4294901760
      %v1053 = vsub.f32 %v221, %v1052
      %v1054 = vand.u32 %v1053, 4294901760
      %1055 = vmatpush1.msra.mxu0 %v1054
      %1056 = vmatprep.subr.mxu0 0.0
      %v1057 = vand.u32 %v220, 4294901760
      %v1058 = vsub.f32 %v220, %v1057
      %v1059 = vand.u32 %v1058, 4294901760
      %1060 = vmatpush1.msra.mxu0 %v1059
      %1061 = vmatprep.subr.mxu0 0.0
      %v1062 = vand.u32 %v219, 4294901760
      %v1063 = vsub.f32 %v219, %v1062
      %v1064 = vand.u32 %v1063, 4294901760
      %1065 = vmatpush1.msra.mxu0 %v1064
      %1066 = vmatprep.subr.mxu0 0.0
      %v1067 = vand.u32 %v250, 4294901760
      %v1068 = vsub.f32 %v250, %v1067
      %v1069 = vand.u32 %v1068, 4294901760
      %1070 = vmatpush2.msra.mxu0 %v1069
      %1071 = vmatprep.subr.mxu0 0.0
      %v1072 = vand.u32 %v249, 4294901760
      %v1073 = vsub.f32 %v249, %v1072
      %v1074 = vand.u32 %v1073, 4294901760
      %1075 = vmatpush2.msra.mxu0 %v1074
      %1076 = vmatprep.subr.mxu0 0.0
      %v1077 = vand.u32 %v248, 4294901760
      %v1078 = vsub.f32 %v248, %v1077
      %v1079 = vand.u32 %v1078, 4294901760
      %1080 = vmatpush2.msra.mxu0 %v1079
      %1081 = vmatprep.subr.mxu0 0.0
      %v1082 = vand.u32 %v247, 4294901760
      %v1083 = vsub.f32 %v247, %v1082
      %v1084 = vand.u32 %v1083, 4294901760
      %1085 = vmatpush2.msra.mxu0 %v1084
      %1086 = vmatprep.subr.mxu0 0.0
      %v1087 = vand.u32 %v246, 4294901760
      %v1088 = vsub.f32 %v246, %v1087
      %v1089 = vand.u32 %v1088, 4294901760
      %1090 = vmatpush2.msra.mxu0 %v1089
      %1091 = vmatprep.subr.mxu0 0.0
      %v1092 = vand.u32 %v245, 4294901760
      %v1093 = vsub.f32 %v245, %v1092
      %v1094 = vand.u32 %v1093, 4294901760
      %1095 = vmatpush2.msra.mxu0 %v1094
      %1096 = vmatprep.subr.mxu0 0.0
      %v1097 = vand.u32 %v244, 4294901760
      %v1098 = vsub.f32 %v244, %v1097
      %v1099 = vand.u32 %v1098, 4294901760
      %1100 = vmatpush2.msra.mxu0 %v1099
      %1101 = vmatprep.subr.mxu0 0.0
      %v1102 = vand.u32 %v243, 4294901760
      %v1103 = vsub.f32 %v243, %v1102
      %v1104 = vand.u32 %v1103, 4294901760
      %1105 = vmatpush2.msra.mxu0 %v1104
      %1106 = vmatprep.subr.mxu0 0.0
      %v1107 = vand.u32 %v242, 4294901760
      %v1108 = vsub.f32 %v242, %v1107
      %v1109 = vand.u32 %v1108, 4294901760
      %1110 = vmatpush2.msra.mxu0 %v1109
      %1111 = vmatprep.subr.mxu0 0.0
      %v1112 = vand.u32 %v241, 4294901760
      %v1113 = vsub.f32 %v241, %v1112
      %v1114 = vand.u32 %v1113, 4294901760
      %1115 = vmatpush2.msra.mxu0 %v1114
      %1116 = vmatprep.subr.mxu0 0.0
      %v1117 = vand.u32 %v240, 4294901760
      %v1118 = vsub.f32 %v240, %v1117
      %v1119 = vand.u32 %v1118, 4294901760
      %1120 = vmatpush2.msra.mxu0 %v1119
      %1121 = vmatprep.subr.mxu0 0.0
      %v1122 = vand.u32 %v239, 4294901760
      %v1123 = vsub.f32 %v239, %v1122
      %v1124 = vand.u32 %v1123, 4294901760
      %1125 = vmatpush2.msra.mxu0 %v1124
      %1126 = vmatprep.subr.mxu0 0.0
      %v1127 = vand.u32 %v238, 4294901760
      %v1128 = vsub.f32 %v238, %v1127
      %v1129 = vand.u32 %v1128, 4294901760
      %1130 = vmatpush2.msra.mxu0 %v1129
      %1131 = vmatprep.subr.mxu0 0.0
      %v1132 = vand.u32 %v237, 4294901760
      %v1133 = vsub.f32 %v237, %v1132
      %v1134 = vand.u32 %v1133, 4294901760
      %1135 = vmatpush2.msra.mxu0 %v1134
      %1136 = vmatprep.subr.mxu0 0.0
      %v1137 = vand.u32 %v236, 4294901760
      %v1138 = vsub.f32 %v236, %v1137
      %v1139 = vand.u32 %v1138, 4294901760
      %1140 = vmatpush2.msra.mxu0 %v1139
      %1141 = vmatprep.subr.mxu0 0.0
      %v1142 = vand.u32 %v235, 4294901760
      %v1143 = vsub.f32 %v235, %v1142
      %v1144 = vand.u32 %v1143, 4294901760
      %1145 = vmatpush2.msra.mxu0 %v1144
      %v1146 = vand.u32 %v207, 4294901760
      %1147 = vmatprep.mubr.f32.mxu0 %v1146
      %v1148 = vand.u32 %v206, 4294901760
      %1149 = vmatmul.mubr.f32.gmra.mxu0 %v1148
      %v1150 = vpop.f32.mrf.mxu0
      %v1151 = vadd.f32 %v950, %v1150
      %v1152 = vpop.f32.mrf.mxu0
      %v1153 = vand.u32 %v210, 4294901760
      %1154 = vmatprep.mubr.f32.mxu0 %v1153
      %v1155 = vand.u32 %v209, 4294901760
      %1156 = vmatmul.mubr.f32.gmra.mxu0 %v1155
      %v1157 = vpop.f32.mrf.mxu0
      %v1158 = vadd.f32 %v961, %v1157
      %v1159 = vpop.f32.mrf.mxu0
      %v1160 = vand.u32 %v213, 4294901760
      %1161 = vmatprep.mubr.f32.mxu0 %v1160
      %v1162 = vand.u32 %v212, 4294901760
      %1163 = vmatmul.mubr.f32.gmra.mxu0 %v1162
      %v1164 = vpop.f32.mrf.mxu0
      %v1165 = vadd.f32 %v972, %v1164
      %v1166 = vpop.f32.mrf.mxu0
      %v1167 = vand.u32 %v216, 4294901760
      %1168 = vmatprep.mubr.f32.mxu0 %v1167
      %v1169 = vand.u32 %v215, 4294901760
      %1170 = vmatmul.mubr.f32.gmra.mxu0 %v1169
      %v1171 = vpop.f32.mrf.mxu0
      %v1172 = vadd.f32 %v983, %v1171
      %v1173 = vpop.f32.mrf.mxu0
      %1174 = vdwg.mxu0
      %1175 = vmatprep.subr.mxu0 0.0
      %v1176 = vand.u32 %v234, 4294901760
      %1177 = vmatpush1.msra.mxu0 %v1176
      %1178 = vmatprep.subr.mxu0 0.0
      %v1179 = vand.u32 %v233, 4294901760
      %1180 = vmatpush1.msra.mxu0 %v1179
      %1181 = vmatprep.subr.mxu0 0.0
      %v1182 = vand.u32 %v232, 4294901760
      %1183 = vmatpush1.msra.mxu0 %v1182
      %1184 = vmatprep.subr.mxu0 0.0
      %v1185 = vand.u32 %v231, 4294901760
      %1186 = vmatpush1.msra.mxu0 %v1185
      %1187 = vmatprep.subr.mxu0 0.0
      %v1188 = vand.u32 %v230, 4294901760
      %1189 = vmatpush1.msra.mxu0 %v1188
      %1190 = vmatprep.subr.mxu0 0.0
      %v1191 = vand.u32 %v229, 4294901760
      %1192 = vmatpush1.msra.mxu0 %v1191
      %1193 = vmatprep.subr.mxu0 0.0
      %v1194 = vand.u32 %v228, 4294901760
      %1195 = vmatpush1.msra.mxu0 %v1194
      %1196 = vmatprep.subr.mxu0 0.0
      %v1197 = vand.u32 %v227, 4294901760
      %1198 = vmatpush1.msra.mxu0 %v1197
      %1199 = vmatprep.subr.mxu0 0.0
      %v1200 = vand.u32 %v226, 4294901760
      %1201 = vmatpush1.msra.mxu0 %v1200
      %1202 = vmatprep.subr.mxu0 0.0
      %v1203 = vand.u32 %v225, 4294901760
      %1204 = vmatpush1.msra.mxu0 %v1203
      %1205 = vmatprep.subr.mxu0 0.0
      %v1206 = vand.u32 %v224, 4294901760
      %1207 = vmatpush1.msra.mxu0 %v1206
      %1208 = vmatprep.subr.mxu0 0.0
      %v1209 = vand.u32 %v223, 4294901760
      %1210 = vmatpush1.msra.mxu0 %v1209
      %1211 = vmatprep.subr.mxu0 0.0
      %v1212 = vand.u32 %v222, 4294901760
      %1213 = vmatpush1.msra.mxu0 %v1212
      %1214 = vmatprep.subr.mxu0 0.0
      %v1215 = vand.u32 %v221, 4294901760
      %1216 = vmatpush1.msra.mxu0 %v1215
      %1217 = vmatprep.subr.mxu0 0.0
      %v1218 = vand.u32 %v220, 4294901760
      %1219 = vmatpush1.msra.mxu0 %v1218
      %1220 = vmatprep.subr.mxu0 0.0
      %v1221 = vand.u32 %v219, 4294901760
      %1222 = vmatpush1.msra.mxu0 %v1221
      %1223 = vmatprep.subr.mxu0 0.0
      %v1224 = vand.u32 %v250, 4294901760
      %1225 = vmatpush2.msra.mxu0 %v1224
      %1226 = vmatprep.subr.mxu0 0.0
      %v1227 = vand.u32 %v249, 4294901760
      %1228 = vmatpush2.msra.mxu0 %v1227
      %1229 = vmatprep.subr.mxu0 0.0
      %v1230 = vand.u32 %v248, 4294901760
      %1231 = vmatpush2.msra.mxu0 %v1230
      %1232 = vmatprep.subr.mxu0 0.0
      %v1233 = vand.u32 %v247, 4294901760
      %1234 = vmatpush2.msra.mxu0 %v1233
      %1235 = vmatprep.subr.mxu0 0.0
      %v1236 = vand.u32 %v246, 4294901760
      %1237 = vmatpush2.msra.mxu0 %v1236
      %1238 = vmatprep.subr.mxu0 0.0
      %v1239 = vand.u32 %v245, 4294901760
      %1240 = vmatpush2.msra.mxu0 %v1239
      %1241 = vmatprep.subr.mxu0 0.0
      %v1242 = vand.u32 %v244, 4294901760
      %1243 = vmatpush2.msra.mxu0 %v1242
      %1244 = vmatprep.subr.mxu0 0.0
      %v1245 = vand.u32 %v243, 4294901760
      %1246 = vmatpush2.msra.mxu0 %v1245
      %1247 = vmatprep.subr.mxu0 0.0
      %v1248 = vand.u32 %v242, 4294901760
      %1249 = vmatpush2.msra.mxu0 %v1248
      %1250 = vmatprep.subr.mxu0 0.0
      %v1251 = vand.u32 %v241, 4294901760
      %1252 = vmatpush2.msra.mxu0 %v1251
      %1253 = vmatprep.subr.mxu0 0.0
      %v1254 = vand.u32 %v240, 4294901760
      %1255 = vmatpush2.msra.mxu0 %v1254
      %1256 = vmatprep.subr.mxu0 0.0
      %v1257 = vand.u32 %v239, 4294901760
      %1258 = vmatpush2.msra.mxu0 %v1257
      %1259 = vmatprep.subr.mxu0 0.0
      %v1260 = vand.u32 %v238, 4294901760
      %1261 = vmatpush2.msra.mxu0 %v1260
      %1262 = vmatprep.subr.mxu0 0.0
      %v1263 = vand.u32 %v237, 4294901760
      %1264 = vmatpush2.msra.mxu0 %v1263
      %1265 = vmatprep.subr.mxu0 0.0
      %v1266 = vand.u32 %v236, 4294901760
      %1267 = vmatpush2.msra.mxu0 %v1266
      %1268 = vmatprep.subr.mxu0 0.0
      %v1269 = vand.u32 %v235, 4294901760
      %1270 = vmatpush2.msra.mxu0 %v1269
      %v1271 = vand.u32 %v207, 4294901760
      %1272 = vmatprep.mubr.f32.mxu0 %v1271
      %v1273 = vand.u32 %v206, 4294901760
      %1274 = vmatmul.mubr.f32.gmra.mxu0 %v1273
      %v1275 = vpop.f32.mrf.mxu0
      %v1276 = vadd.f32 %v1151, %v1275
      %v1277 = vpop.f32.mrf.mxu0
      %v1278 = vand.u32 %v210, 4294901760
      %1279 = vmatprep.mubr.f32.mxu0 %v1278
      %v1280 = vand.u32 %v209, 4294901760
      %1281 = vmatmul.mubr.f32.gmra.mxu0 %v1280
      %v1282 = vpop.f32.mrf.mxu0
      %v1283 = vadd.f32 %v1158, %v1282
      %v1284 = vpop.f32.mrf.mxu0
      %v1285 = vand.u32 %v213, 4294901760
      %1286 = vmatprep.mubr.f32.mxu0 %v1285
      %v1287 = vand.u32 %v212, 4294901760
      %1288 = vmatmul.mubr.f32.gmra.mxu0 %v1287
      %v1289 = vpop.f32.mrf.mxu0
      %v1290 = vadd.f32 %v1165, %v1289
      %v1291 = vpop.f32.mrf.mxu0
      %v1292 = vand.u32 %v216, 4294901760
      %1293 = vmatprep.mubr.f32.mxu0 %v1292
      %v1294 = vand.u32 %v215, 4294901760
      %1295 = vmatmul.mubr.f32.gmra.mxu0 %v1294
      %v1296 = vpop.f32.mrf.mxu0
      %v1297 = vadd.f32 %v1172, %v1296
      %v1298 = vpop.f32.mrf.mxu0
      %1299 = vdwg.mxu0
      %1300 = vmatprep.subr.mxu0 0.0
      %v1301 = vand.u32 %v266, 4294901760
      %1302 = vmatpush1.msra.mxu0 %v1301
      %1303 = vmatprep.subr.mxu0 0.0
      %v1304 = vand.u32 %v265, 4294901760
      %1305 = vmatpush1.msra.mxu0 %v1304
      %1306 = vmatprep.subr.mxu0 0.0
      %v1307 = vand.u32 %v264, 4294901760
      %1308 = vmatpush1.msra.mxu0 %v1307
      %1309 = vmatprep.subr.mxu0 0.0
      %v1310 = vand.u32 %v263, 4294901760
      %1311 = vmatpush1.msra.mxu0 %v1310
      %1312 = vmatprep.subr.mxu0 0.0
      %v1313 = vand.u32 %v262, 4294901760
      %1314 = vmatpush1.msra.mxu0 %v1313
      %1315 = vmatprep.subr.mxu0 0.0
      %v1316 = vand.u32 %v261, 4294901760
      %1317 = vmatpush1.msra.mxu0 %v1316
      %1318 = vmatprep.subr.mxu0 0.0
      %v1319 = vand.u32 %v260, 4294901760
      %1320 = vmatpush1.msra.mxu0 %v1319
      %1321 = vmatprep.subr.mxu0 0.0
      %v1322 = vand.u32 %v259, 4294901760
      %1323 = vmatpush1.msra.mxu0 %v1322
      %1324 = vmatprep.subr.mxu0 0.0
      %v1325 = vand.u32 %v258, 4294901760
      %1326 = vmatpush1.msra.mxu0 %v1325
      %1327 = vmatprep.subr.mxu0 0.0
      %v1328 = vand.u32 %v257, 4294901760
      %1329 = vmatpush1.msra.mxu0 %v1328
      %1330 = vmatprep.subr.mxu0 0.0
      %v1331 = vand.u32 %v256, 4294901760
      %1332 = vmatpush1.msra.mxu0 %v1331
      %1333 = vmatprep.subr.mxu0 0.0
      %v1334 = vand.u32 %v255, 4294901760
      %1335 = vmatpush1.msra.mxu0 %v1334
      %1336 = vmatprep.subr.mxu0 0.0
      %v1337 = vand.u32 %v254, 4294901760
      %1338 = vmatpush1.msra.mxu0 %v1337
      %1339 = vmatprep.subr.mxu0 0.0
      %v1340 = vand.u32 %v253, 4294901760
      %1341 = vmatpush1.msra.mxu0 %v1340
      %1342 = vmatprep.subr.mxu0 0.0
      %v1343 = vand.u32 %v252, 4294901760
      %1344 = vmatpush1.msra.mxu0 %v1343
      %1345 = vmatprep.subr.mxu0 0.0
      %v1346 = vand.u32 %v251, 4294901760
      %1347 = vmatpush1.msra.mxu0 %v1346
      %1348 = vmatprep.subr.mxu0 0.0
      %1349 = vmatpush2.msra.mxu0 0.0
      %1350 = vmatprep.subr.mxu0 0.0
      %1351 = vmatpush2.msra.mxu0 0.0
      %1352 = vmatprep.subr.mxu0 0.0
      %1353 = vmatpush2.msra.mxu0 0.0
      %1354 = vmatprep.subr.mxu0 0.0
      %1355 = vmatpush2.msra.mxu0 0.0
      %1356 = vmatprep.subr.mxu0 0.0
      %1357 = vmatpush2.msra.mxu0 0.0
      %1358 = vmatprep.subr.mxu0 0.0
      %1359 = vmatpush2.msra.mxu0 0.0
      %1360 = vmatprep.subr.mxu0 0.0
      %1361 = vmatpush2.msra.mxu0 0.0
      %1362 = vmatprep.subr.mxu0 0.0
      %1363 = vmatpush2.msra.mxu0 0.0
      %1364 = vmatprep.subr.mxu0 0.0
      %1365 = vmatpush2.msra.mxu0 0.0
      %1366 = vmatprep.subr.mxu0 0.0
      %1367 = vmatpush2.msra.mxu0 0.0
      %1368 = vmatprep.subr.mxu0 0.0
      %1369 = vmatpush2.msra.mxu0 0.0
      %1370 = vmatprep.subr.mxu0 0.0
      %1371 = vmatpush2.msra.mxu0 0.0
      %1372 = vmatprep.subr.mxu0 0.0
      %1373 = vmatpush2.msra.mxu0 0.0
      %1374 = vmatprep.subr.mxu0 0.0
      %1375 = vmatpush2.msra.mxu0 0.0
      %1376 = vmatprep.subr.mxu0 0.0
      %1377 = vmatpush2.msra.mxu0 0.0
      %1378 = vmatprep.subr.mxu0 0.0
      %1379 = vmatpush2.msra.mxu0 0.0
      %1380 = vmatprep.mubr.f32.mxu0 0.0
      %v1381 = vand.u32 %v208, 4294901760
      %v1382 = vsub.f32 %v208, %v1381
      %v1383 = vand.u32 %v1382, 4294901760
      %v1384 = vsub.f32 %v1382, %v1383
      %v1385 = vand.u32 %v1384, 4294901760
      %1386 = vmatmul.mubr.f32.gmra.mxu0 %v1385
      %v1387 = vpop.f32.mrf.mxu0
      %v1388 = vadd.f32 %v1276, %v1387
      %v1389 = vpop.f32.mrf.mxu0
      %1390 = vmatprep.mubr.f32.mxu0 0.0
      %v1391 = vand.u32 %v211, 4294901760
      %v1392 = vsub.f32 %v211, %v1391
      %v1393 = vand.u32 %v1392, 4294901760
      %v1394 = vsub.f32 %v1392, %v1393
      %v1395 = vand.u32 %v1394, 4294901760
      %1396 = vmatmul.mubr.f32.gmra.mxu0 %v1395
      %v1397 = vpop.f32.mrf.mxu0
      %v1398 = vadd.f32 %v1283, %v1397
      %v1399 = vpop.f32.mrf.mxu0
      %1400 = vmatprep.mubr.f32.mxu0 0.0
      %v1401 = vand.u32 %v214, 4294901760
      %v1402 = vsub.f32 %v214, %v1401
      %v1403 = vand.u32 %v1402, 4294901760
      %v1404 = vsub.f32 %v1402, %v1403
      %v1405 = vand.u32 %v1404, 4294901760
      %1406 = vmatmul.mubr.f32.gmra.mxu0 %v1405
      %v1407 = vpop.f32.mrf.mxu0
      %v1408 = vadd.f32 %v1290, %v1407
      %v1409 = vpop.f32.mrf.mxu0
      %1410 = vmatprep.mubr.f32.mxu0 0.0
      %v1411 = vand.u32 %v217, 4294901760
      %v1412 = vsub.f32 %v217, %v1411
      %v1413 = vand.u32 %v1412, 4294901760
      %v1414 = vsub.f32 %v1412, %v1413
      %v1415 = vand.u32 %v1414, 4294901760
      %1416 = vmatmul.mubr.f32.gmra.mxu0 %v1415
      %v1417 = vpop.f32.mrf.mxu0
      %v1418 = vadd.f32 %v1297, %v1417
      %v1419 = vpop.f32.mrf.mxu0
      %1420 = vdwg.mxu0
      %1421 = vmatprep.subr.mxu0 0.0
      %v1422 = vand.u32 %v266, 4294901760
      %v1423 = vsub.f32 %v266, %v1422
      %v1424 = vand.u32 %v1423, 4294901760
      %v1425 = vsub.f32 %v1423, %v1424
      %v1426 = vand.u32 %v1425, 4294901760
      %1427 = vmatpush1.msra.mxu0 %v1426
      %1428 = vmatprep.subr.mxu0 0.0
      %v1429 = vand.u32 %v265, 4294901760
      %v1430 = vsub.f32 %v265, %v1429
      %v1431 = vand.u32 %v1430, 4294901760
      %v1432 = vsub.f32 %v1430, %v1431
      %v1433 = vand.u32 %v1432, 4294901760
      %1434 = vmatpush1.msra.mxu0 %v1433
      %1435 = vmatprep.subr.mxu0 0.0
      %v1436 = vand.u32 %v264, 4294901760
      %v1437 = vsub.f32 %v264, %v1436
      %v1438 = vand.u32 %v1437, 4294901760
      %v1439 = vsub.f32 %v1437, %v1438
      %v1440 = vand.u32 %v1439, 4294901760
      %1441 = vmatpush1.msra.mxu0 %v1440
      %1442 = vmatprep.subr.mxu0 0.0
      %v1443 = vand.u32 %v263, 4294901760
      %v1444 = vsub.f32 %v263, %v1443
      %v1445 = vand.u32 %v1444, 4294901760
      %v1446 = vsub.f32 %v1444, %v1445
      %v1447 = vand.u32 %v1446, 4294901760
      %1448 = vmatpush1.msra.mxu0 %v1447
      %1449 = vmatprep.subr.mxu0 0.0
      %v1450 = vand.u32 %v262, 4294901760
      %v1451 = vsub.f32 %v262, %v1450
      %v1452 = vand.u32 %v1451, 4294901760
      %v1453 = vsub.f32 %v1451, %v1452
      %v1454 = vand.u32 %v1453, 4294901760
      %1455 = vmatpush1.msra.mxu0 %v1454
      %1456 = vmatprep.subr.mxu0 0.0
      %v1457 = vand.u32 %v261, 4294901760
      %v1458 = vsub.f32 %v261, %v1457
      %v1459 = vand.u32 %v1458, 4294901760
      %v1460 = vsub.f32 %v1458, %v1459
      %v1461 = vand.u32 %v1460, 4294901760
      %1462 = vmatpush1.msra.mxu0 %v1461
      %1463 = vmatprep.subr.mxu0 0.0
      %v1464 = vand.u32 %v260, 4294901760
      %v1465 = vsub.f32 %v260, %v1464
      %v1466 = vand.u32 %v1465, 4294901760
      %v1467 = vsub.f32 %v1465, %v1466
      %v1468 = vand.u32 %v1467, 4294901760
      %1469 = vmatpush1.msra.mxu0 %v1468
      %1470 = vmatprep.subr.mxu0 0.0
      %v1471 = vand.u32 %v259, 4294901760
      %v1472 = vsub.f32 %v259, %v1471
      %v1473 = vand.u32 %v1472, 4294901760
      %v1474 = vsub.f32 %v1472, %v1473
      %v1475 = vand.u32 %v1474, 4294901760
      %1476 = vmatpush1.msra.mxu0 %v1475
      %1477 = vmatprep.subr.mxu0 0.0
      %v1478 = vand.u32 %v258, 4294901760
      %v1479 = vsub.f32 %v258, %v1478
      %v1480 = vand.u32 %v1479, 4294901760
      %v1481 = vsub.f32 %v1479, %v1480
      %v1482 = vand.u32 %v1481, 4294901760
      %1483 = vmatpush1.msra.mxu0 %v1482
      %1484 = vmatprep.subr.mxu0 0.0
      %v1485 = vand.u32 %v257, 4294901760
      %v1486 = vsub.f32 %v257, %v1485
      %v1487 = vand.u32 %v1486, 4294901760
      %v1488 = vsub.f32 %v1486, %v1487
      %v1489 = vand.u32 %v1488, 4294901760
      %1490 = vmatpush1.msra.mxu0 %v1489
      %1491 = vmatprep.subr.mxu0 0.0
      %v1492 = vand.u32 %v256, 4294901760
      %v1493 = vsub.f32 %v256, %v1492
      %v1494 = vand.u32 %v1493, 4294901760
      %v1495 = vsub.f32 %v1493, %v1494
      %v1496 = vand.u32 %v1495, 4294901760
      %1497 = vmatpush1.msra.mxu0 %v1496
      %1498 = vmatprep.subr.mxu0 0.0
      %v1499 = vand.u32 %v255, 4294901760
      %v1500 = vsub.f32 %v255, %v1499
      %v1501 = vand.u32 %v1500, 4294901760
      %v1502 = vsub.f32 %v1500, %v1501
      %v1503 = vand.u32 %v1502, 4294901760
      %1504 = vmatpush1.msra.mxu0 %v1503
      %1505 = vmatprep.subr.mxu0 0.0
      %v1506 = vand.u32 %v254, 4294901760
      %v1507 = vsub.f32 %v254, %v1506
      %v1508 = vand.u32 %v1507, 4294901760
      %v1509 = vsub.f32 %v1507, %v1508
      %v1510 = vand.u32 %v1509, 4294901760
      %1511 = vmatpush1.msra.mxu0 %v1510
      %1512 = vmatprep.subr.mxu0 0.0
      %v1513 = vand.u32 %v253, 4294901760
      %v1514 = vsub.f32 %v253, %v1513
      %v1515 = vand.u32 %v1514, 4294901760
      %v1516 = vsub.f32 %v1514, %v1515
      %v1517 = vand.u32 %v1516, 4294901760
      %1518 = vmatpush1.msra.mxu0 %v1517
      %1519 = vmatprep.subr.mxu0 0.0
      %v1520 = vand.u32 %v252, 4294901760
      %v1521 = vsub.f32 %v252, %v1520
      %v1522 = vand.u32 %v1521, 4294901760
      %v1523 = vsub.f32 %v1521, %v1522
      %v1524 = vand.u32 %v1523, 4294901760
      %1525 = vmatpush1.msra.mxu0 %v1524
      %1526 = vmatprep.subr.mxu0 0.0
      %v1527 = vand.u32 %v251, 4294901760
      %v1528 = vsub.f32 %v251, %v1527
      %v1529 = vand.u32 %v1528, 4294901760
      %v1530 = vsub.f32 %v1528, %v1529
      %v1531 = vand.u32 %v1530, 4294901760
      %1532 = vmatpush1.msra.mxu0 %v1531
      %1533 = vmatprep.subr.mxu0 0.0
      %1534 = vmatpush2.msra.mxu0 0.0
      %1535 = vmatprep.subr.mxu0 0.0
      %1536 = vmatpush2.msra.mxu0 0.0
      %1537 = vmatprep.subr.mxu0 0.0
      %1538 = vmatpush2.msra.mxu0 0.0
      %1539 = vmatprep.subr.mxu0 0.0
      %1540 = vmatpush2.msra.mxu0 0.0
      %1541 = vmatprep.subr.mxu0 0.0
      %1542 = vmatpush2.msra.mxu0 0.0
      %1543 = vmatprep.subr.mxu0 0.0
      %1544 = vmatpush2.msra.mxu0 0.0
      %1545 = vmatprep.subr.mxu0 0.0
      %1546 = vmatpush2.msra.mxu0 0.0
      %1547 = vmatprep.subr.mxu0 0.0
      %1548 = vmatpush2.msra.mxu0 0.0
      %1549 = vmatprep.subr.mxu0 0.0
      %1550 = vmatpush2.msra.mxu0 0.0
      %1551 = vmatprep.subr.mxu0 0.0
      %1552 = vmatpush2.msra.mxu0 0.0
      %1553 = vmatprep.subr.mxu0 0.0
      %1554 = vmatpush2.msra.mxu0 0.0
      %1555 = vmatprep.subr.mxu0 0.0
      %1556 = vmatpush2.msra.mxu0 0.0
      %1557 = vmatprep.subr.mxu0 0.0
      %1558 = vmatpush2.msra.mxu0 0.0
      %1559 = vmatprep.subr.mxu0 0.0
      %1560 = vmatpush2.msra.mxu0 0.0
      %1561 = vmatprep.subr.mxu0 0.0
      %1562 = vmatpush2.msra.mxu0 0.0
      %1563 = vmatprep.subr.mxu0 0.0
      %1564 = vmatpush2.msra.mxu0 0.0
      %1565 = vmatprep.mubr.f32.mxu0 0.0
      %v1566 = vand.u32 %v208, 4294901760
      %1567 = vmatmul.mubr.f32.gmra.mxu0 %v1566
      %v1568 = vpop.f32.mrf.mxu0
      %v1569 = vadd.f32 %v1388, %v1568
      %v1570 = vpop.f32.mrf.mxu0
      %1571 = vmatprep.mubr.f32.mxu0 0.0
      %v1572 = vand.u32 %v211, 4294901760
      %1573 = vmatmul.mubr.f32.gmra.mxu0 %v1572
      %v1574 = vpop.f32.mrf.mxu0
      %v1575 = vadd.f32 %v1398, %v1574
      %v1576 = vpop.f32.mrf.mxu0
      %1577 = vmatprep.mubr.f32.mxu0 0.0
      %v1578 = vand.u32 %v214, 4294901760
      %1579 = vmatmul.mubr.f32.gmra.mxu0 %v1578
      %v1580 = vpop.f32.mrf.mxu0
      %v1581 = vadd.f32 %v1408, %v1580
      %v1582 = vpop.f32.mrf.mxu0
      %1583 = vmatprep.mubr.f32.mxu0 0.0
      %v1584 = vand.u32 %v217, 4294901760
      %1585 = vmatmul.mubr.f32.gmra.mxu0 %v1584
      %v1586 = vpop.f32.mrf.mxu0
      %v1587 = vadd.f32 %v1418, %v1586
      %v1588 = vpop.f32.mrf.mxu0
      %1589 = vdwg.mxu0
      %1590 = vmatprep.subr.mxu0 0.0
      %v1591 = vand.u32 %v266, 4294901760
      %v1592 = vsub.f32 %v266, %v1591
      %1593 = vmatpush1.msra.mxu0 %v1592
      %1594 = vmatprep.subr.mxu0 0.0
      %v1595 = vand.u32 %v265, 4294901760
      %v1596 = vsub.f32 %v265, %v1595
      %1597 = vmatpush1.msra.mxu0 %v1596
      %1598 = vmatprep.subr.mxu0 0.0
      %v1599 = vand.u32 %v264, 4294901760
      %v1600 = vsub.f32 %v264, %v1599
      %1601 = vmatpush1.msra.mxu0 %v1600
      %1602 = vmatprep.subr.mxu0 0.0
      %v1603 = vand.u32 %v263, 4294901760
      %v1604 = vsub.f32 %v263, %v1603
      %1605 = vmatpush1.msra.mxu0 %v1604
      %1606 = vmatprep.subr.mxu0 0.0
      %v1607 = vand.u32 %v262, 4294901760
      %v1608 = vsub.f32 %v262, %v1607
      %1609 = vmatpush1.msra.mxu0 %v1608
      %1610 = vmatprep.subr.mxu0 0.0
      %v1611 = vand.u32 %v261, 4294901760
      %v1612 = vsub.f32 %v261, %v1611
      %1613 = vmatpush1.msra.mxu0 %v1612
      %1614 = vmatprep.subr.mxu0 0.0
      %v1615 = vand.u32 %v260, 4294901760
      %v1616 = vsub.f32 %v260, %v1615
      %1617 = vmatpush1.msra.mxu0 %v1616
      %1618 = vmatprep.subr.mxu0 0.0
      %v1619 = vand.u32 %v259, 4294901760
      %v1620 = vsub.f32 %v259, %v1619
      %1621 = vmatpush1.msra.mxu0 %v1620
      %1622 = vmatprep.subr.mxu0 0.0
      %v1623 = vand.u32 %v258, 4294901760
      %v1624 = vsub.f32 %v258, %v1623
      %1625 = vmatpush1.msra.mxu0 %v1624
      %1626 = vmatprep.subr.mxu0 0.0
      %v1627 = vand.u32 %v257, 4294901760
      %v1628 = vsub.f32 %v257, %v1627
      %1629 = vmatpush1.msra.mxu0 %v1628
      %1630 = vmatprep.subr.mxu0 0.0
      %v1631 = vand.u32 %v256, 4294901760
      %v1632 = vsub.f32 %v256, %v1631
      %1633 = vmatpush1.msra.mxu0 %v1632
      %1634 = vmatprep.subr.mxu0 0.0
      %v1635 = vand.u32 %v255, 4294901760
      %v1636 = vsub.f32 %v255, %v1635
      %1637 = vmatpush1.msra.mxu0 %v1636
      %1638 = vmatprep.subr.mxu0 0.0
      %v1639 = vand.u32 %v254, 4294901760
      %v1640 = vsub.f32 %v254, %v1639
      %1641 = vmatpush1.msra.mxu0 %v1640
      %1642 = vmatprep.subr.mxu0 0.0
      %v1643 = vand.u32 %v253, 4294901760
      %v1644 = vsub.f32 %v253, %v1643
      %1645 = vmatpush1.msra.mxu0 %v1644
      %1646 = vmatprep.subr.mxu0 0.0
      %v1647 = vand.u32 %v252, 4294901760
      %v1648 = vsub.f32 %v252, %v1647
      %1649 = vmatpush1.msra.mxu0 %v1648
      %1650 = vmatprep.subr.mxu0 0.0
      %v1651 = vand.u32 %v251, 4294901760
      %v1652 = vsub.f32 %v251, %v1651
      %1653 = vmatpush1.msra.mxu0 %v1652
      %1654 = vmatprep.subr.mxu0 0.0
      %1655 = vmatpush2.msra.mxu0 0.0
      %1656 = vmatprep.subr.mxu0 0.0
      %1657 = vmatpush2.msra.mxu0 0.0
      %1658 = vmatprep.subr.mxu0 0.0
      %1659 = vmatpush2.msra.mxu0 0.0
      %1660 = vmatprep.subr.mxu0 0.0
      %1661 = vmatpush2.msra.mxu0 0.0
      %1662 = vmatprep.subr.mxu0 0.0
      %1663 = vmatpush2.msra.mxu0 0.0
      %1664 = vmatprep.subr.mxu0 0.0
      %1665 = vmatpush2.msra.mxu0 0.0
      %1666 = vmatprep.subr.mxu0 0.0
      %1667 = vmatpush2.msra.mxu0 0.0
      %1668 = vmatprep.subr.mxu0 0.0
      %1669 = vmatpush2.msra.mxu0 0.0
      %1670 = vmatprep.subr.mxu0 0.0
      %1671 = vmatpush2.msra.mxu0 0.0
      %1672 = vmatprep.subr.mxu0 0.0
      %1673 = vmatpush2.msra.mxu0 0.0
      %1674 = vmatprep.subr.mxu0 0.0
      %1675 = vmatpush2.msra.mxu0 0.0
      %1676 = vmatprep.subr.mxu0 0.0
      %1677 = vmatpush2.msra.mxu0 0.0
      %1678 = vmatprep.subr.mxu0 0.0
      %1679 = vmatpush2.msra.mxu0 0.0
      %1680 = vmatprep.subr.mxu0 0.0
      %1681 = vmatpush2.msra.mxu0 0.0
      %1682 = vmatprep.subr.mxu0 0.0
      %1683 = vmatpush2.msra.mxu0 0.0
      %1684 = vmatprep.subr.mxu0 0.0
      %1685 = vmatpush2.msra.mxu0 0.0
      %1686 = vmatprep.mubr.f32.mxu0 0.0
      %v1687 = vand.u32 %v208, 4294901760
      %v1688 = vsub.f32 %v208, %v1687
      %1689 = vmatmul.mubr.f32.gmra.mxu0 %v1688
      %v1690 = vpop.f32.mrf.mxu0
      %v1691 = vadd.f32 %v1569, %v1690
      %v1692 = vpop.f32.mrf.mxu0
      %1693 = vmatprep.mubr.f32.mxu0 0.0
      %v1694 = vand.u32 %v211, 4294901760
      %v1695 = vsub.f32 %v211, %v1694
      %1696 = vmatmul.mubr.f32.gmra.mxu0 %v1695
      %v1697 = vpop.f32.mrf.mxu0
      %v1698 = vadd.f32 %v1575, %v1697
      %v1699 = vpop.f32.mrf.mxu0
      %1700 = vmatprep.mubr.f32.mxu0 0.0
      %v1701 = vand.u32 %v214, 4294901760
      %v1702 = vsub.f32 %v214, %v1701
      %1703 = vmatmul.mubr.f32.gmra.mxu0 %v1702
      %v1704 = vpop.f32.mrf.mxu0
      %v1705 = vadd.f32 %v1581, %v1704
      %v1706 = vpop.f32.mrf.mxu0
      %1707 = vmatprep.mubr.f32.mxu0 0.0
      %v1708 = vand.u32 %v217, 4294901760
      %v1709 = vsub.f32 %v217, %v1708
      %1710 = vmatmul.mubr.f32.gmra.mxu0 %v1709
      %v1711 = vpop.f32.mrf.mxu0
      %v1712 = vadd.f32 %v1587, %v1711
      %v1713 = vpop.f32.mrf.mxu0
      %1714 = vdwg.mxu0
      %1715 = vmatprep.subr.mxu0 0.0
      %v1716 = vand.u32 %v266, 4294901760
      %1717 = vmatpush1.msra.mxu0 %v1716
      %1718 = vmatprep.subr.mxu0 0.0
      %v1719 = vand.u32 %v265, 4294901760
      %1720 = vmatpush1.msra.mxu0 %v1719
      %1721 = vmatprep.subr.mxu0 0.0
      %v1722 = vand.u32 %v264, 4294901760
      %1723 = vmatpush1.msra.mxu0 %v1722
      %1724 = vmatprep.subr.mxu0 0.0
      %v1725 = vand.u32 %v263, 4294901760
      %1726 = vmatpush1.msra.mxu0 %v1725
      %1727 = vmatprep.subr.mxu0 0.0
      %v1728 = vand.u32 %v262, 4294901760
      %1729 = vmatpush1.msra.mxu0 %v1728
      %1730 = vmatprep.subr.mxu0 0.0
      %v1731 = vand.u32 %v261, 4294901760
      %1732 = vmatpush1.msra.mxu0 %v1731
      %1733 = vmatprep.subr.mxu0 0.0
      %v1734 = vand.u32 %v260, 4294901760
      %1735 = vmatpush1.msra.mxu0 %v1734
      %1736 = vmatprep.subr.mxu0 0.0
      %v1737 = vand.u32 %v259, 4294901760
      %1738 = vmatpush1.msra.mxu0 %v1737
      %1739 = vmatprep.subr.mxu0 0.0
      %v1740 = vand.u32 %v258, 4294901760
      %1741 = vmatpush1.msra.mxu0 %v1740
      %1742 = vmatprep.subr.mxu0 0.0
      %v1743 = vand.u32 %v257, 4294901760
      %1744 = vmatpush1.msra.mxu0 %v1743
      %1745 = vmatprep.subr.mxu0 0.0
      %v1746 = vand.u32 %v256, 4294901760
      %1747 = vmatpush1.msra.mxu0 %v1746
      %1748 = vmatprep.subr.mxu0 0.0
      %v1749 = vand.u32 %v255, 4294901760
      %1750 = vmatpush1.msra.mxu0 %v1749
      %1751 = vmatprep.subr.mxu0 0.0
      %v1752 = vand.u32 %v254, 4294901760
      %1753 = vmatpush1.msra.mxu0 %v1752
      %1754 = vmatprep.subr.mxu0 0.0
      %v1755 = vand.u32 %v253, 4294901760
      %1756 = vmatpush1.msra.mxu0 %v1755
      %1757 = vmatprep.subr.mxu0 0.0
      %v1758 = vand.u32 %v252, 4294901760
      %1759 = vmatpush1.msra.mxu0 %v1758
      %1760 = vmatprep.subr.mxu0 0.0
      %v1761 = vand.u32 %v251, 4294901760
      %1762 = vmatpush1.msra.mxu0 %v1761
      %1763 = vmatprep.subr.mxu0 0.0
      %1764 = vmatpush2.msra.mxu0 0.0
      %1765 = vmatprep.subr.mxu0 0.0
      %1766 = vmatpush2.msra.mxu0 0.0
      %1767 = vmatprep.subr.mxu0 0.0
      %1768 = vmatpush2.msra.mxu0 0.0
      %1769 = vmatprep.subr.mxu0 0.0
      %1770 = vmatpush2.msra.mxu0 0.0
      %1771 = vmatprep.subr.mxu0 0.0
      %1772 = vmatpush2.msra.mxu0 0.0
      %1773 = vmatprep.subr.mxu0 0.0
      %1774 = vmatpush2.msra.mxu0 0.0
      %1775 = vmatprep.subr.mxu0 0.0
      %1776 = vmatpush2.msra.mxu0 0.0
      %1777 = vmatprep.subr.mxu0 0.0
      %1778 = vmatpush2.msra.mxu0 0.0
      %1779 = vmatprep.subr.mxu0 0.0
      %1780 = vmatpush2.msra.mxu0 0.0
      %1781 = vmatprep.subr.mxu0 0.0
      %1782 = vmatpush2.msra.mxu0 0.0
      %1783 = vmatprep.subr.mxu0 0.0
      %1784 = vmatpush2.msra.mxu0 0.0
      %1785 = vmatprep.subr.mxu0 0.0
      %1786 = vmatpush2.msra.mxu0 0.0
      %1787 = vmatprep.subr.mxu0 0.0
      %1788 = vmatpush2.msra.mxu0 0.0
      %1789 = vmatprep.subr.mxu0 0.0
      %1790 = vmatpush2.msra.mxu0 0.0
      %1791 = vmatprep.subr.mxu0 0.0
      %1792 = vmatpush2.msra.mxu0 0.0
      %1793 = vmatprep.subr.mxu0 0.0
      %1794 = vmatpush2.msra.mxu0 0.0
      %1795 = vmatprep.mubr.f32.mxu0 0.0
      %v1796 = vand.u32 %v208, 4294901760
      %v1797 = vsub.f32 %v208, %v1796
      %v1798 = vand.u32 %v1797, 4294901760
      %1799 = vmatmul.mubr.f32.gmra.mxu0 %v1798
      %v1800 = vpop.f32.mrf.mxu0
      %v1801 = vadd.f32 %v1691, %v1800
      %v1802 = vpop.f32.mrf.mxu0
      %1803 = vmatprep.mubr.f32.mxu0 0.0
      %v1804 = vand.u32 %v211, 4294901760
      %v1805 = vsub.f32 %v211, %v1804
      %v1806 = vand.u32 %v1805, 4294901760
      %1807 = vmatmul.mubr.f32.gmra.mxu0 %v1806
      %v1808 = vpop.f32.mrf.mxu0
      %v1809 = vadd.f32 %v1698, %v1808
      %v1810 = vpop.f32.mrf.mxu0
      %1811 = vmatprep.mubr.f32.mxu0 0.0
      %v1812 = vand.u32 %v214, 4294901760
      %v1813 = vsub.f32 %v214, %v1812
      %v1814 = vand.u32 %v1813, 4294901760
      %1815 = vmatmul.mubr.f32.gmra.mxu0 %v1814
      %v1816 = vpop.f32.mrf.mxu0
      %v1817 = vadd.f32 %v1705, %v1816
      %v1818 = vpop.f32.mrf.mxu0
      %1819 = vmatprep.mubr.f32.mxu0 0.0
      %v1820 = vand.u32 %v217, 4294901760
      %v1821 = vsub.f32 %v217, %v1820
      %v1822 = vand.u32 %v1821, 4294901760
      %1823 = vmatmul.mubr.f32.gmra.mxu0 %v1822
      %v1824 = vpop.f32.mrf.mxu0
      %v1825 = vadd.f32 %v1712, %v1824
      %v1826 = vpop.f32.mrf.mxu0
      %1827 = vdwg.mxu0
      %1828 = vmatprep.subr.mxu0 0.0
      %v1829 = vand.u32 %v266, 4294901760
      %v1830 = vsub.f32 %v266, %v1829
      %v1831 = vand.u32 %v1830, 4294901760
      %1832 = vmatpush1.msra.mxu0 %v1831
      %1833 = vmatprep.subr.mxu0 0.0
      %v1834 = vand.u32 %v265, 4294901760
      %v1835 = vsub.f32 %v265, %v1834
      %v1836 = vand.u32 %v1835, 4294901760
      %1837 = vmatpush1.msra.mxu0 %v1836
      %1838 = vmatprep.subr.mxu0 0.0
      %v1839 = vand.u32 %v264, 4294901760
      %v1840 = vsub.f32 %v264, %v1839
      %v1841 = vand.u32 %v1840, 4294901760
      %1842 = vmatpush1.msra.mxu0 %v1841
      %1843 = vmatprep.subr.mxu0 0.0
      %v1844 = vand.u32 %v263, 4294901760
      %v1845 = vsub.f32 %v263, %v1844
      %v1846 = vand.u32 %v1845, 4294901760
      %1847 = vmatpush1.msra.mxu0 %v1846
      %1848 = vmatprep.subr.mxu0 0.0
      %v1849 = vand.u32 %v262, 4294901760
      %v1850 = vsub.f32 %v262, %v1849
      %v1851 = vand.u32 %v1850, 4294901760
      %1852 = vmatpush1.msra.mxu0 %v1851
      %1853 = vmatprep.subr.mxu0 0.0
      %v1854 = vand.u32 %v261, 4294901760
      %v1855 = vsub.f32 %v261, %v1854
      %v1856 = vand.u32 %v1855, 4294901760
      %1857 = vmatpush1.msra.mxu0 %v1856
      %1858 = vmatprep.subr.mxu0 0.0
      %v1859 = vand.u32 %v260, 4294901760
      %v1860 = vsub.f32 %v260, %v1859
      %v1861 = vand.u32 %v1860, 4294901760
      %1862 = vmatpush1.msra.mxu0 %v1861
      %1863 = vmatprep.subr.mxu0 0.0
      %v1864 = vand.u32 %v259, 4294901760
      %v1865 = vsub.f32 %v259, %v1864
      %v1866 = vand.u32 %v1865, 4294901760
      %1867 = vmatpush1.msra.mxu0 %v1866
      %1868 = vmatprep.subr.mxu0 0.0
      %v1869 = vand.u32 %v258, 4294901760
      %v1870 = vsub.f32 %v258, %v1869
      %v1871 = vand.u32 %v1870, 4294901760
      %1872 = vmatpush1.msra.mxu0 %v1871
      %1873 = vmatprep.subr.mxu0 0.0
      %v1874 = vand.u32 %v257, 4294901760
      %v1875 = vsub.f32 %v257, %v1874
      %v1876 = vand.u32 %v1875, 4294901760
      %1877 = vmatpush1.msra.mxu0 %v1876
      %1878 = vmatprep.subr.mxu0 0.0
      %v1879 = vand.u32 %v256, 4294901760
      %v1880 = vsub.f32 %v256, %v1879
      %v1881 = vand.u32 %v1880, 4294901760
      %1882 = vmatpush1.msra.mxu0 %v1881
      %1883 = vmatprep.subr.mxu0 0.0
      %v1884 = vand.u32 %v255, 4294901760
      %v1885 = vsub.f32 %v255, %v1884
      %v1886 = vand.u32 %v1885, 4294901760
      %1887 = vmatpush1.msra.mxu0 %v1886
      %1888 = vmatprep.subr.mxu0 0.0
      %v1889 = vand.u32 %v254, 4294901760
      %v1890 = vsub.f32 %v254, %v1889
      %v1891 = vand.u32 %v1890, 4294901760
      %1892 = vmatpush1.msra.mxu0 %v1891
      %1893 = vmatprep.subr.mxu0 0.0
      %v1894 = vand.u32 %v253, 4294901760
      %v1895 = vsub.f32 %v253, %v1894
      %v1896 = vand.u32 %v1895, 4294901760
      %1897 = vmatpush1.msra.mxu0 %v1896
      %1898 = vmatprep.subr.mxu0 0.0
      %v1899 = vand.u32 %v252, 4294901760
      %v1900 = vsub.f32 %v252, %v1899
      %v1901 = vand.u32 %v1900, 4294901760
      %1902 = vmatpush1.msra.mxu0 %v1901
      %1903 = vmatprep.subr.mxu0 0.0
      %v1904 = vand.u32 %v251, 4294901760
      %v1905 = vsub.f32 %v251, %v1904
      %v1906 = vand.u32 %v1905, 4294901760
      %1907 = vmatpush1.msra.mxu0 %v1906
      %1908 = vmatprep.subr.mxu0 0.0
      %1909 = vmatpush2.msra.mxu0 0.0
      %1910 = vmatprep.subr.mxu0 0.0
      %1911 = vmatpush2.msra.mxu0 0.0
      %1912 = vmatprep.subr.mxu0 0.0
      %1913 = vmatpush2.msra.mxu0 0.0
      %1914 = vmatprep.subr.mxu0 0.0
      %1915 = vmatpush2.msra.mxu0 0.0
      %1916 = vmatprep.subr.mxu0 0.0
      %1917 = vmatpush2.msra.mxu0 0.0
      %1918 = vmatprep.subr.mxu0 0.0
      %1919 = vmatpush2.msra.mxu0 0.0
      %1920 = vmatprep.subr.mxu0 0.0
      %1921 = vmatpush2.msra.mxu0 0.0
      %1922 = vmatprep.subr.mxu0 0.0
      %1923 = vmatpush2.msra.mxu0 0.0
      %1924 = vmatprep.subr.mxu0 0.0
      %1925 = vmatpush2.msra.mxu0 0.0
      %1926 = vmatprep.subr.mxu0 0.0
      %1927 = vmatpush2.msra.mxu0 0.0
      %1928 = vmatprep.subr.mxu0 0.0
      %1929 = vmatpush2.msra.mxu0 0.0
      %1930 = vmatprep.subr.mxu0 0.0
      %1931 = vmatpush2.msra.mxu0 0.0
      %1932 = vmatprep.subr.mxu0 0.0
      %1933 = vmatpush2.msra.mxu0 0.0
      %1934 = vmatprep.subr.mxu0 0.0
      %1935 = vmatpush2.msra.mxu0 0.0
      %1936 = vmatprep.subr.mxu0 0.0
      %1937 = vmatpush2.msra.mxu0 0.0
      %1938 = vmatprep.subr.mxu0 0.0
      %1939 = vmatpush2.msra.mxu0 0.0
      %1940 = vmatprep.mubr.f32.mxu0 0.0
      %v1941 = vand.u32 %v208, 4294901760
      %1942 = vmatmul.mubr.f32.gmra.mxu0 %v1941
      %v1943 = vpop.f32.mrf.mxu0
      %v1944 = vadd.f32 %v1801, %v1943
      %v1945 = vpop.f32.mrf.mxu0
      %1946 = vmatprep.mubr.f32.mxu0 0.0
      %v1947 = vand.u32 %v211, 4294901760
      %1948 = vmatmul.mubr.f32.gmra.mxu0 %v1947
      %v1949 = vpop.f32.mrf.mxu0
      %v1950 = vadd.f32 %v1809, %v1949
      %v1951 = vpop.f32.mrf.mxu0
      %1952 = vmatprep.mubr.f32.mxu0 0.0
      %v1953 = vand.u32 %v214, 4294901760
      %1954 = vmatmul.mubr.f32.gmra.mxu0 %v1953
      %v1955 = vpop.f32.mrf.mxu0
      %v1956 = vadd.f32 %v1817, %v1955
      %v1957 = vpop.f32.mrf.mxu0
      %1958 = vmatprep.mubr.f32.mxu0 0.0
      %v1959 = vand.u32 %v217, 4294901760
      %1960 = vmatmul.mubr.f32.gmra.mxu0 %v1959
      %v1961 = vpop.f32.mrf.mxu0
      %v1962 = vadd.f32 %v1825, %v1961
      %v1963 = vpop.f32.mrf.mxu0
      %1964 = vdwg.mxu0
      %1965 = vmatprep.subr.mxu0 0.0
      %v1966 = vand.u32 %v266, 4294901760
      %1967 = vmatpush1.msra.mxu0 %v1966
      %1968 = vmatprep.subr.mxu0 0.0
      %v1969 = vand.u32 %v265, 4294901760
      %1970 = vmatpush1.msra.mxu0 %v1969
      %1971 = vmatprep.subr.mxu0 0.0
      %v1972 = vand.u32 %v264, 4294901760
      %1973 = vmatpush1.msra.mxu0 %v1972
      %1974 = vmatprep.subr.mxu0 0.0
      %v1975 = vand.u32 %v263, 4294901760
      %1976 = vmatpush1.msra.mxu0 %v1975
      %1977 = vmatprep.subr.mxu0 0.0
      %v1978 = vand.u32 %v262, 4294901760
      %1979 = vmatpush1.msra.mxu0 %v1978
      %1980 = vmatprep.subr.mxu0 0.0
      %v1981 = vand.u32 %v261, 4294901760
      %1982 = vmatpush1.msra.mxu0 %v1981
      %1983 = vmatprep.subr.mxu0 0.0
      %v1984 = vand.u32 %v260, 4294901760
      %1985 = vmatpush1.msra.mxu0 %v1984
      %1986 = vmatprep.subr.mxu0 0.0
      %v1987 = vand.u32 %v259, 4294901760
      %1988 = vmatpush1.msra.mxu0 %v1987
      %1989 = vmatprep.subr.mxu0 0.0
      %v1990 = vand.u32 %v258, 4294901760
      %1991 = vmatpush1.msra.mxu0 %v1990
      %1992 = vmatprep.subr.mxu0 0.0
      %v1993 = vand.u32 %v257, 4294901760
      %1994 = vmatpush1.msra.mxu0 %v1993
      %1995 = vmatprep.subr.mxu0 0.0
      %v1996 = vand.u32 %v256, 4294901760
      %1997 = vmatpush1.msra.mxu0 %v1996
      %1998 = vmatprep.subr.mxu0 0.0
      %v1999 = vand.u32 %v255, 4294901760
      %2000 = vmatpush1.msra.mxu0 %v1999
      %2001 = vmatprep.subr.mxu0 0.0
      %v2002 = vand.u32 %v254, 4294901760
      %2003 = vmatpush1.msra.mxu0 %v2002
      %2004 = vmatprep.subr.mxu0 0.0
      %v2005 = vand.u32 %v253, 4294901760
      %2006 = vmatpush1.msra.mxu0 %v2005
      %2007 = vmatprep.subr.mxu0 0.0
      %v2008 = vand.u32 %v252, 4294901760
      %2009 = vmatpush1.msra.mxu0 %v2008
      %2010 = vmatprep.subr.mxu0 0.0
      %v2011 = vand.u32 %v251, 4294901760
      %2012 = vmatpush1.msra.mxu0 %v2011
      %2013 = vmatprep.subr.mxu0 0.0
      %2014 = vmatpush2.msra.mxu0 0.0
      %2015 = vmatprep.subr.mxu0 0.0
      %2016 = vmatpush2.msra.mxu0 0.0
      %2017 = vmatprep.subr.mxu0 0.0
      %2018 = vmatpush2.msra.mxu0 0.0
      %2019 = vmatprep.subr.mxu0 0.0
      %2020 = vmatpush2.msra.mxu0 0.0
      %2021 = vmatprep.subr.mxu0 0.0
      %2022 = vmatpush2.msra.mxu0 0.0
      %2023 = vmatprep.subr.mxu0 0.0
      %2024 = vmatpush2.msra.mxu0 0.0
      %2025 = vmatprep.subr.mxu0 0.0
      %2026 = vmatpush2.msra.mxu0 0.0
      %2027 = vmatprep.subr.mxu0 0.0
      %2028 = vmatpush2.msra.mxu0 0.0
      %2029 = vmatprep.subr.mxu0 0.0
      %2030 = vmatpush2.msra.mxu0 0.0
      %2031 = vmatprep.subr.mxu0 0.0
      %2032 = vmatpush2.msra.mxu0 0.0
      %2033 = vmatprep.subr.mxu0 0.0
      %2034 = vmatpush2.msra.mxu0 0.0
      %2035 = vmatprep.subr.mxu0 0.0
      %2036 = vmatpush2.msra.mxu0 0.0
      %2037 = vmatprep.subr.mxu0 0.0
      %2038 = vmatpush2.msra.mxu0 0.0
      %2039 = vmatprep.subr.mxu0 0.0
      %2040 = vmatpush2.msra.mxu0 0.0
      %2041 = vmatprep.subr.mxu0 0.0
      %2042 = vmatpush2.msra.mxu0 0.0
      %2043 = vmatprep.subr.mxu0 0.0
      %2044 = vmatpush2.msra.mxu0 0.0
      %2045 = vmatprep.mubr.f32.mxu0 0.0
      %v2046 = vand.u32 %v208, 4294901760
      %2047 = vmatmul.mubr.f32.gmra.mxu0 %v2046
      %v2048 = vpop.f32.mrf.mxu0
      %v2049 = vadd.f32 %v1944, %v2048
      %v2050 = vpop.f32.mrf.mxu0
      %2051 = vmatprep.mubr.f32.mxu0 0.0
      %v2052 = vand.u32 %v211, 4294901760
      %2053 = vmatmul.mubr.f32.gmra.mxu0 %v2052
      %v2054 = vpop.f32.mrf.mxu0
      %v2055 = vadd.f32 %v1950, %v2054
      %v2056 = vpop.f32.mrf.mxu0
      %2057 = vmatprep.mubr.f32.mxu0 0.0
      %v2058 = vand.u32 %v214, 4294901760
      %2059 = vmatmul.mubr.f32.gmra.mxu0 %v2058
      %v2060 = vpop.f32.mrf.mxu0
      %v2061 = vadd.f32 %v1956, %v2060
      %v2062 = vpop.f32.mrf.mxu0
      %2063 = vmatprep.mubr.f32.mxu0 0.0
      %v2064 = vand.u32 %v217, 4294901760
      %2065 = vmatmul.mubr.f32.gmra.mxu0 %v2064
      %v2066 = vpop.f32.mrf.mxu0
      %v2067 = vadd.f32 %v1962, %v2066
      %v2068 = vpop.f32.mrf.mxu0
      %2069 = vdwg.mxu0
      %v2070 = vmul.f32 %v2049, 0.020833334
      %v2071 = vmul.f32 %v2055, 0.020833334
      %v2072 = vmul.f32 %v2061, 0.020833334
      %v2073 = vmul.f32 %v2067, 0.020833334
      %vm2074 = vcmask 64512
      %v2076 = vsel %vm2074, %v2070, 0
      %v2079 = vsel %vm2074, %v2071, 0
      %v2082 = vsel %vm2074, %v2072, 0
      %v2085 = vsel %vm2074, %v2073, 0
      %2087 = vmatprep.subr.mxu0 0.0
      %2088 = vmatpush1.msra.mxu0 0.0
      %2089 = vmatprep.subr.mxu0 0.0
      %2090 = vmatpush1.msra.mxu0 0.0
      %2091 = vmatprep.subr.mxu0 0.0
      %2092 = vmatpush1.msra.mxu0 0.0
      %2093 = vmatprep.subr.mxu0 0.0
      %2094 = vmatpush1.msra.mxu0 0.0
      %2095 = vmatprep.subr.mxu0 0.0
      %2096 = vmatpush1.msra.mxu0 0.0
      %2097 = vmatprep.subr.mxu0 0.0
      %2098 = vmatpush1.msra.mxu0 0.0
      %2099 = vmatprep.subr.mxu0 0.0
      %2100 = vmatpush1.msra.mxu0 0.0
      %2101 = vmatprep.subr.mxu0 0.0
      %2102 = vmatpush1.msra.mxu0 0.0
      %2103 = vmatprep.subr.mxu0 0.0
      %2104 = vmatpush1.msra.mxu0 0.0
      %2105 = vmatprep.subr.mxu0 0.0
      %2106 = vmatpush1.msra.mxu0 0.0
      %2107 = vmatprep.subr.mxu0 0.0
      %2108 = vmatpush1.msra.mxu0 0.0
      %2109 = vmatprep.subr.mxu0 0.0
      %2110 = vmatpush1.msra.mxu0 0.0
      %2111 = vmatprep.subr.mxu0 0.0
      %2112 = vmatpush1.msra.mxu0 0.0
      %2113 = vmatprep.subr.mxu0 0.0
      %2114 = vmatpush1.msra.mxu0 0.0
      %2115 = vmatprep.subr.mxu0 0.0
      %2116 = vmatpush1.msra.mxu0 0.0
      %v2117 = vand.u32 %v268, 4294901760
      %2118 = vmatprep.subr.mxu0 %v2117
      %v2119 = vand.u32 %v267, 4294901760
      %2120 = vmatpush1.msra.mxu0 %v2119
      %2121 = vmatprep.subr.mxu0 0.0
      %2122 = vmatpush2.msra.mxu0 0.0
      %2123 = vmatprep.subr.mxu0 0.0
      %2124 = vmatpush2.msra.mxu0 0.0
      %2125 = vmatprep.subr.mxu0 0.0
      %2126 = vmatpush2.msra.mxu0 0.0
      %2127 = vmatprep.subr.mxu0 0.0
      %2128 = vmatpush2.msra.mxu0 0.0
      %2129 = vmatprep.subr.mxu0 0.0
      %2130 = vmatpush2.msra.mxu0 0.0
      %2131 = vmatprep.subr.mxu0 0.0
      %2132 = vmatpush2.msra.mxu0 0.0
      %2133 = vmatprep.subr.mxu0 0.0
      %2134 = vmatpush2.msra.mxu0 0.0
      %2135 = vmatprep.subr.mxu0 0.0
      %2136 = vmatpush2.msra.mxu0 0.0
      %2137 = vmatprep.subr.mxu0 0.0
      %2138 = vmatpush2.msra.mxu0 0.0
      %2139 = vmatprep.subr.mxu0 0.0
      %2140 = vmatpush2.msra.mxu0 0.0
      %2141 = vmatprep.subr.mxu0 0.0
      %2142 = vmatpush2.msra.mxu0 0.0
      %2143 = vmatprep.subr.mxu0 0.0
      %2144 = vmatpush2.msra.mxu0 0.0
      %2145 = vmatprep.subr.mxu0 0.0
      %2146 = vmatpush2.msra.mxu0 0.0
      %2147 = vmatprep.subr.mxu0 0.0
      %2148 = vmatpush2.msra.mxu0 0.0
      %2149 = vmatprep.subr.mxu0 0.0
      %2150 = vmatpush2.msra.mxu0 0.0
      %2151 = vmatprep.subr.mxu0 0.0
      %2152 = vmatpush2.msra.mxu0 0.0
      %2153 = vmatprep.mubr.f32.mxu0 0.0
      %v2154 = vand.u32 %v2076, 4294901760
      %v2155 = vsub.f32 %v2076, %v2154
      %v2156 = vand.u32 %v2155, 4294901760
      %v2157 = vsub.f32 %v2155, %v2156
      %v2158 = vand.u32 %v2157, 4294901760
      %2159 = vmatmul.mubr.f32.gmra.mxu0 %v2158
      %v2160 = vpop.f32.mrf.mxu0
      %v2161 = vadd.f32 0.0, %v2160
      %v2162 = vpop.f32.mrf.mxu0
      %v2163 = vadd.f32 0.0, %v2162
      %2164 = vmatprep.mubr.f32.mxu0 0.0
      %v2165 = vand.u32 %v2079, 4294901760
      %v2166 = vsub.f32 %v2079, %v2165
      %v2167 = vand.u32 %v2166, 4294901760
      %v2168 = vsub.f32 %v2166, %v2167
      %v2169 = vand.u32 %v2168, 4294901760
      %2170 = vmatmul.mubr.f32.gmra.mxu0 %v2169
      %v2171 = vpop.f32.mrf.mxu0
      %v2172 = vadd.f32 0.0, %v2171
      %v2173 = vpop.f32.mrf.mxu0
      %v2174 = vadd.f32 0.0, %v2173
      %2175 = vmatprep.mubr.f32.mxu0 0.0
      %v2176 = vand.u32 %v2082, 4294901760
      %v2177 = vsub.f32 %v2082, %v2176
      %v2178 = vand.u32 %v2177, 4294901760
      %v2179 = vsub.f32 %v2177, %v2178
      %v2180 = vand.u32 %v2179, 4294901760
      %2181 = vmatmul.mubr.f32.gmra.mxu0 %v2180
      %v2182 = vpop.f32.mrf.mxu0
      %v2183 = vadd.f32 0.0, %v2182
      %v2184 = vpop.f32.mrf.mxu0
      %v2185 = vadd.f32 0.0, %v2184
      %2186 = vmatprep.mubr.f32.mxu0 0.0
      %v2187 = vand.u32 %v2085, 4294901760
      %v2188 = vsub.f32 %v2085, %v2187
      %v2189 = vand.u32 %v2188, 4294901760
      %v2190 = vsub.f32 %v2188, %v2189
      %v2191 = vand.u32 %v2190, 4294901760
      %2192 = vmatmul.mubr.f32.gmra.mxu0 %v2191
      %v2193 = vpop.f32.mrf.mxu0
      %v2194 = vadd.f32 0.0, %v2193
      %v2195 = vpop.f32.mrf.mxu0
      %v2196 = vadd.f32 0.0, %v2195
      %2197 = vdwg.mxu0
      %2198 = vmatprep.subr.mxu0 0.0
      %2199 = vmatpush1.msra.mxu0 0.0
      %2200 = vmatprep.subr.mxu0 0.0
      %2201 = vmatpush1.msra.mxu0 0.0
      %2202 = vmatprep.subr.mxu0 0.0
      %2203 = vmatpush1.msra.mxu0 0.0
      %2204 = vmatprep.subr.mxu0 0.0
      %2205 = vmatpush1.msra.mxu0 0.0
      %2206 = vmatprep.subr.mxu0 0.0
      %2207 = vmatpush1.msra.mxu0 0.0
      %2208 = vmatprep.subr.mxu0 0.0
      %2209 = vmatpush1.msra.mxu0 0.0
      %2210 = vmatprep.subr.mxu0 0.0
      %2211 = vmatpush1.msra.mxu0 0.0
      %2212 = vmatprep.subr.mxu0 0.0
      %2213 = vmatpush1.msra.mxu0 0.0
      %2214 = vmatprep.subr.mxu0 0.0
      %2215 = vmatpush1.msra.mxu0 0.0
      %2216 = vmatprep.subr.mxu0 0.0
      %2217 = vmatpush1.msra.mxu0 0.0
      %2218 = vmatprep.subr.mxu0 0.0
      %2219 = vmatpush1.msra.mxu0 0.0
      %2220 = vmatprep.subr.mxu0 0.0
      %2221 = vmatpush1.msra.mxu0 0.0
      %2222 = vmatprep.subr.mxu0 0.0
      %2223 = vmatpush1.msra.mxu0 0.0
      %2224 = vmatprep.subr.mxu0 0.0
      %2225 = vmatpush1.msra.mxu0 0.0
      %2226 = vmatprep.subr.mxu0 0.0
      %2227 = vmatpush1.msra.mxu0 0.0
      %v2228 = vand.u32 %v268, 4294901760
      %v2229 = vsub.f32 %v268, %v2228
      %v2230 = vand.u32 %v2229, 4294901760
      %v2231 = vsub.f32 %v2229, %v2230
      %v2232 = vand.u32 %v2231, 4294901760
      %2233 = vmatprep.subr.mxu0 %v2232
      %v2234 = vand.u32 %v267, 4294901760
      %v2235 = vsub.f32 %v267, %v2234
      %v2236 = vand.u32 %v2235, 4294901760
      %v2237 = vsub.f32 %v2235, %v2236
      %v2238 = vand.u32 %v2237, 4294901760
      %2239 = vmatpush1.msra.mxu0 %v2238
      %2240 = vmatprep.subr.mxu0 0.0
      %2241 = vmatpush2.msra.mxu0 0.0
      %2242 = vmatprep.subr.mxu0 0.0
      %2243 = vmatpush2.msra.mxu0 0.0
      %2244 = vmatprep.subr.mxu0 0.0
      %2245 = vmatpush2.msra.mxu0 0.0
      %2246 = vmatprep.subr.mxu0 0.0
      %2247 = vmatpush2.msra.mxu0 0.0
      %2248 = vmatprep.subr.mxu0 0.0
      %2249 = vmatpush2.msra.mxu0 0.0
      %2250 = vmatprep.subr.mxu0 0.0
      %2251 = vmatpush2.msra.mxu0 0.0
      %2252 = vmatprep.subr.mxu0 0.0
      %2253 = vmatpush2.msra.mxu0 0.0
      %2254 = vmatprep.subr.mxu0 0.0
      %2255 = vmatpush2.msra.mxu0 0.0
      %2256 = vmatprep.subr.mxu0 0.0
      %2257 = vmatpush2.msra.mxu0 0.0
      %2258 = vmatprep.subr.mxu0 0.0
      %2259 = vmatpush2.msra.mxu0 0.0
      %2260 = vmatprep.subr.mxu0 0.0
      %2261 = vmatpush2.msra.mxu0 0.0
      %2262 = vmatprep.subr.mxu0 0.0
      %2263 = vmatpush2.msra.mxu0 0.0
      %2264 = vmatprep.subr.mxu0 0.0
      %2265 = vmatpush2.msra.mxu0 0.0
      %2266 = vmatprep.subr.mxu0 0.0
      %2267 = vmatpush2.msra.mxu0 0.0
      %2268 = vmatprep.subr.mxu0 0.0
      %2269 = vmatpush2.msra.mxu0 0.0
      %2270 = vmatprep.subr.mxu0 0.0
      %2271 = vmatpush2.msra.mxu0 0.0
      %2272 = vmatprep.mubr.f32.mxu0 0.0
      %v2273 = vand.u32 %v2076, 4294901760
      %2274 = vmatmul.mubr.f32.gmra.mxu0 %v2273
      %v2275 = vpop.f32.mrf.mxu0
      %v2276 = vadd.f32 %v2161, %v2275
      %v2277 = vpop.f32.mrf.mxu0
      %v2278 = vadd.f32 %v2163, %v2277
      %2279 = vmatprep.mubr.f32.mxu0 0.0
      %v2280 = vand.u32 %v2079, 4294901760
      %2281 = vmatmul.mubr.f32.gmra.mxu0 %v2280
      %v2282 = vpop.f32.mrf.mxu0
      %v2283 = vadd.f32 %v2172, %v2282
      %v2284 = vpop.f32.mrf.mxu0
      %v2285 = vadd.f32 %v2174, %v2284
      %2286 = vmatprep.mubr.f32.mxu0 0.0
      %v2287 = vand.u32 %v2082, 4294901760
      %2288 = vmatmul.mubr.f32.gmra.mxu0 %v2287
      %v2289 = vpop.f32.mrf.mxu0
      %v2290 = vadd.f32 %v2183, %v2289
      %v2291 = vpop.f32.mrf.mxu0
      %v2292 = vadd.f32 %v2185, %v2291
      %2293 = vmatprep.mubr.f32.mxu0 0.0
      %v2294 = vand.u32 %v2085, 4294901760
      %2295 = vmatmul.mubr.f32.gmra.mxu0 %v2294
      %v2296 = vpop.f32.mrf.mxu0
      %v2297 = vadd.f32 %v2194, %v2296
      %v2298 = vpop.f32.mrf.mxu0
      %v2299 = vadd.f32 %v2196, %v2298
      %2300 = vdwg.mxu0
      %2301 = vmatprep.subr.mxu0 0.0
      %2302 = vmatpush1.msra.mxu0 0.0
      %2303 = vmatprep.subr.mxu0 0.0
      %2304 = vmatpush1.msra.mxu0 0.0
      %2305 = vmatprep.subr.mxu0 0.0
      %2306 = vmatpush1.msra.mxu0 0.0
      %2307 = vmatprep.subr.mxu0 0.0
      %2308 = vmatpush1.msra.mxu0 0.0
      %2309 = vmatprep.subr.mxu0 0.0
      %2310 = vmatpush1.msra.mxu0 0.0
      %2311 = vmatprep.subr.mxu0 0.0
      %2312 = vmatpush1.msra.mxu0 0.0
      %2313 = vmatprep.subr.mxu0 0.0
      %2314 = vmatpush1.msra.mxu0 0.0
      %2315 = vmatprep.subr.mxu0 0.0
      %2316 = vmatpush1.msra.mxu0 0.0
      %2317 = vmatprep.subr.mxu0 0.0
      %2318 = vmatpush1.msra.mxu0 0.0
      %2319 = vmatprep.subr.mxu0 0.0
      %2320 = vmatpush1.msra.mxu0 0.0
      %2321 = vmatprep.subr.mxu0 0.0
      %2322 = vmatpush1.msra.mxu0 0.0
      %2323 = vmatprep.subr.mxu0 0.0
      %2324 = vmatpush1.msra.mxu0 0.0
      %2325 = vmatprep.subr.mxu0 0.0
      %2326 = vmatpush1.msra.mxu0 0.0
      %2327 = vmatprep.subr.mxu0 0.0
      %2328 = vmatpush1.msra.mxu0 0.0
      %2329 = vmatprep.subr.mxu0 0.0
      %2330 = vmatpush1.msra.mxu0 0.0
      %v2331 = vand.u32 %v268, 4294901760
      %v2332 = vsub.f32 %v268, %v2331
      %2333 = vmatprep.subr.mxu0 %v2332
      %v2334 = vand.u32 %v267, 4294901760
      %v2335 = vsub.f32 %v267, %v2334
      %2336 = vmatpush1.msra.mxu0 %v2335
      %2337 = vmatprep.subr.mxu0 0.0
      %2338 = vmatpush2.msra.mxu0 0.0
      %2339 = vmatprep.subr.mxu0 0.0
      %2340 = vmatpush2.msra.mxu0 0.0
      %2341 = vmatprep.subr.mxu0 0.0
      %2342 = vmatpush2.msra.mxu0 0.0
      %2343 = vmatprep.subr.mxu0 0.0
      %2344 = vmatpush2.msra.mxu0 0.0
      %2345 = vmatprep.subr.mxu0 0.0
      %2346 = vmatpush2.msra.mxu0 0.0
      %2347 = vmatprep.subr.mxu0 0.0
      %2348 = vmatpush2.msra.mxu0 0.0
      %2349 = vmatprep.subr.mxu0 0.0
      %2350 = vmatpush2.msra.mxu0 0.0
      %2351 = vmatprep.subr.mxu0 0.0
      %2352 = vmatpush2.msra.mxu0 0.0
      %2353 = vmatprep.subr.mxu0 0.0
      %2354 = vmatpush2.msra.mxu0 0.0
      %2355 = vmatprep.subr.mxu0 0.0
      %2356 = vmatpush2.msra.mxu0 0.0
      %2357 = vmatprep.subr.mxu0 0.0
      %2358 = vmatpush2.msra.mxu0 0.0
      %2359 = vmatprep.subr.mxu0 0.0
      %2360 = vmatpush2.msra.mxu0 0.0
      %2361 = vmatprep.subr.mxu0 0.0
      %2362 = vmatpush2.msra.mxu0 0.0
      %2363 = vmatprep.subr.mxu0 0.0
      %2364 = vmatpush2.msra.mxu0 0.0
      %2365 = vmatprep.subr.mxu0 0.0
      %2366 = vmatpush2.msra.mxu0 0.0
      %2367 = vmatprep.subr.mxu0 0.0
      %2368 = vmatpush2.msra.mxu0 0.0
      %2369 = vmatprep.mubr.f32.mxu0 0.0
      %v2370 = vand.u32 %v2076, 4294901760
      %v2371 = vsub.f32 %v2076, %v2370
      %2372 = vmatmul.mubr.f32.gmra.mxu0 %v2371
      %v2373 = vpop.f32.mrf.mxu0
      %v2374 = vadd.f32 %v2276, %v2373
      %v2375 = vpop.f32.mrf.mxu0
      %v2376 = vadd.f32 %v2278, %v2375
      %2377 = vmatprep.mubr.f32.mxu0 0.0
      %v2378 = vand.u32 %v2079, 4294901760
      %v2379 = vsub.f32 %v2079, %v2378
      %2380 = vmatmul.mubr.f32.gmra.mxu0 %v2379
      %v2381 = vpop.f32.mrf.mxu0
      %v2382 = vadd.f32 %v2283, %v2381
      %v2383 = vpop.f32.mrf.mxu0
      %v2384 = vadd.f32 %v2285, %v2383
      %2385 = vmatprep.mubr.f32.mxu0 0.0
      %v2386 = vand.u32 %v2082, 4294901760
      %v2387 = vsub.f32 %v2082, %v2386
      %2388 = vmatmul.mubr.f32.gmra.mxu0 %v2387
      %v2389 = vpop.f32.mrf.mxu0
      %v2390 = vadd.f32 %v2290, %v2389
      %v2391 = vpop.f32.mrf.mxu0
      %v2392 = vadd.f32 %v2292, %v2391
      %2393 = vmatprep.mubr.f32.mxu0 0.0
      %v2394 = vand.u32 %v2085, 4294901760
      %v2395 = vsub.f32 %v2085, %v2394
      %2396 = vmatmul.mubr.f32.gmra.mxu0 %v2395
      %v2397 = vpop.f32.mrf.mxu0
      %v2398 = vadd.f32 %v2297, %v2397
      %v2399 = vpop.f32.mrf.mxu0
      %v2400 = vadd.f32 %v2299, %v2399
      %2401 = vdwg.mxu0
      %2402 = vmatprep.subr.mxu0 0.0
      %2403 = vmatpush1.msra.mxu0 0.0
      %2404 = vmatprep.subr.mxu0 0.0
      %2405 = vmatpush1.msra.mxu0 0.0
      %2406 = vmatprep.subr.mxu0 0.0
      %2407 = vmatpush1.msra.mxu0 0.0
      %2408 = vmatprep.subr.mxu0 0.0
      %2409 = vmatpush1.msra.mxu0 0.0
      %2410 = vmatprep.subr.mxu0 0.0
      %2411 = vmatpush1.msra.mxu0 0.0
      %2412 = vmatprep.subr.mxu0 0.0
      %2413 = vmatpush1.msra.mxu0 0.0
      %2414 = vmatprep.subr.mxu0 0.0
      %2415 = vmatpush1.msra.mxu0 0.0
      %2416 = vmatprep.subr.mxu0 0.0
      %2417 = vmatpush1.msra.mxu0 0.0
      %2418 = vmatprep.subr.mxu0 0.0
      %2419 = vmatpush1.msra.mxu0 0.0
      %2420 = vmatprep.subr.mxu0 0.0
      %2421 = vmatpush1.msra.mxu0 0.0
      %2422 = vmatprep.subr.mxu0 0.0
      %2423 = vmatpush1.msra.mxu0 0.0
      %2424 = vmatprep.subr.mxu0 0.0
      %2425 = vmatpush1.msra.mxu0 0.0
      %2426 = vmatprep.subr.mxu0 0.0
      %2427 = vmatpush1.msra.mxu0 0.0
      %2428 = vmatprep.subr.mxu0 0.0
      %2429 = vmatpush1.msra.mxu0 0.0
      %2430 = vmatprep.subr.mxu0 0.0
      %2431 = vmatpush1.msra.mxu0 0.0
      %v2432 = vand.u32 %v268, 4294901760
      %2433 = vmatprep.subr.mxu0 %v2432
      %v2434 = vand.u32 %v267, 4294901760
      %2435 = vmatpush1.msra.mxu0 %v2434
      %2436 = vmatprep.subr.mxu0 0.0
      %2437 = vmatpush2.msra.mxu0 0.0
      %2438 = vmatprep.subr.mxu0 0.0
      %2439 = vmatpush2.msra.mxu0 0.0
      %2440 = vmatprep.subr.mxu0 0.0
      %2441 = vmatpush2.msra.mxu0 0.0
      %2442 = vmatprep.subr.mxu0 0.0
      %2443 = vmatpush2.msra.mxu0 0.0
      %2444 = vmatprep.subr.mxu0 0.0
      %2445 = vmatpush2.msra.mxu0 0.0
      %2446 = vmatprep.subr.mxu0 0.0
      %2447 = vmatpush2.msra.mxu0 0.0
      %2448 = vmatprep.subr.mxu0 0.0
      %2449 = vmatpush2.msra.mxu0 0.0
      %2450 = vmatprep.subr.mxu0 0.0
      %2451 = vmatpush2.msra.mxu0 0.0
      %2452 = vmatprep.subr.mxu0 0.0
      %2453 = vmatpush2.msra.mxu0 0.0
      %2454 = vmatprep.subr.mxu0 0.0
      %2455 = vmatpush2.msra.mxu0 0.0
      %2456 = vmatprep.subr.mxu0 0.0
      %2457 = vmatpush2.msra.mxu0 0.0
      %2458 = vmatprep.subr.mxu0 0.0
      %2459 = vmatpush2.msra.mxu0 0.0
      %2460 = vmatprep.subr.mxu0 0.0
      %2461 = vmatpush2.msra.mxu0 0.0
      %2462 = vmatprep.subr.mxu0 0.0
      %2463 = vmatpush2.msra.mxu0 0.0
      %2464 = vmatprep.subr.mxu0 0.0
      %2465 = vmatpush2.msra.mxu0 0.0
      %2466 = vmatprep.subr.mxu0 0.0
      %2467 = vmatpush2.msra.mxu0 0.0
      %2468 = vmatprep.mubr.f32.mxu0 0.0
      %v2469 = vand.u32 %v2076, 4294901760
      %v2470 = vsub.f32 %v2076, %v2469
      %v2471 = vand.u32 %v2470, 4294901760
      %2472 = vmatmul.mubr.f32.gmra.mxu0 %v2471
      %v2473 = vpop.f32.mrf.mxu0
      %v2474 = vadd.f32 %v2374, %v2473
      %v2475 = vpop.f32.mrf.mxu0
      %v2476 = vadd.f32 %v2376, %v2475
      %2477 = vmatprep.mubr.f32.mxu0 0.0
      %v2478 = vand.u32 %v2079, 4294901760
      %v2479 = vsub.f32 %v2079, %v2478
      %v2480 = vand.u32 %v2479, 4294901760
      %2481 = vmatmul.mubr.f32.gmra.mxu0 %v2480
      %v2482 = vpop.f32.mrf.mxu0
      %v2483 = vadd.f32 %v2382, %v2482
      %v2484 = vpop.f32.mrf.mxu0
      %v2485 = vadd.f32 %v2384, %v2484
      %2486 = vmatprep.mubr.f32.mxu0 0.0
      %v2487 = vand.u32 %v2082, 4294901760
      %v2488 = vsub.f32 %v2082, %v2487
      %v2489 = vand.u32 %v2488, 4294901760
      %2490 = vmatmul.mubr.f32.gmra.mxu0 %v2489
      %v2491 = vpop.f32.mrf.mxu0
      %v2492 = vadd.f32 %v2390, %v2491
      %v2493 = vpop.f32.mrf.mxu0
      %v2494 = vadd.f32 %v2392, %v2493
      %2495 = vmatprep.mubr.f32.mxu0 0.0
      %v2496 = vand.u32 %v2085, 4294901760
      %v2497 = vsub.f32 %v2085, %v2496
      %v2498 = vand.u32 %v2497, 4294901760
      %2499 = vmatmul.mubr.f32.gmra.mxu0 %v2498
      %v2500 = vpop.f32.mrf.mxu0
      %v2501 = vadd.f32 %v2398, %v2500
      %v2502 = vpop.f32.mrf.mxu0
      %v2503 = vadd.f32 %v2400, %v2502
      %2504 = vdwg.mxu0
      %2505 = vmatprep.subr.mxu0 0.0
      %2506 = vmatpush1.msra.mxu0 0.0
      %2507 = vmatprep.subr.mxu0 0.0
      %2508 = vmatpush1.msra.mxu0 0.0
      %2509 = vmatprep.subr.mxu0 0.0
      %2510 = vmatpush1.msra.mxu0 0.0
      %2511 = vmatprep.subr.mxu0 0.0
      %2512 = vmatpush1.msra.mxu0 0.0
      %2513 = vmatprep.subr.mxu0 0.0
      %2514 = vmatpush1.msra.mxu0 0.0
      %2515 = vmatprep.subr.mxu0 0.0
      %2516 = vmatpush1.msra.mxu0 0.0
      %2517 = vmatprep.subr.mxu0 0.0
      %2518 = vmatpush1.msra.mxu0 0.0
      %2519 = vmatprep.subr.mxu0 0.0
      %2520 = vmatpush1.msra.mxu0 0.0
      %2521 = vmatprep.subr.mxu0 0.0
      %2522 = vmatpush1.msra.mxu0 0.0
      %2523 = vmatprep.subr.mxu0 0.0
      %2524 = vmatpush1.msra.mxu0 0.0
      %2525 = vmatprep.subr.mxu0 0.0
      %2526 = vmatpush1.msra.mxu0 0.0
      %2527 = vmatprep.subr.mxu0 0.0
      %2528 = vmatpush1.msra.mxu0 0.0
      %2529 = vmatprep.subr.mxu0 0.0
      %2530 = vmatpush1.msra.mxu0 0.0
      %2531 = vmatprep.subr.mxu0 0.0
      %2532 = vmatpush1.msra.mxu0 0.0
      %2533 = vmatprep.subr.mxu0 0.0
      %2534 = vmatpush1.msra.mxu0 0.0
      %v2535 = vand.u32 %v268, 4294901760
      %v2536 = vsub.f32 %v268, %v2535
      %v2537 = vand.u32 %v2536, 4294901760
      %2538 = vmatprep.subr.mxu0 %v2537
      %v2539 = vand.u32 %v267, 4294901760
      %v2540 = vsub.f32 %v267, %v2539
      %v2541 = vand.u32 %v2540, 4294901760
      %2542 = vmatpush1.msra.mxu0 %v2541
      %2543 = vmatprep.subr.mxu0 0.0
      %2544 = vmatpush2.msra.mxu0 0.0
      %2545 = vmatprep.subr.mxu0 0.0
      %2546 = vmatpush2.msra.mxu0 0.0
      %2547 = vmatprep.subr.mxu0 0.0
      %2548 = vmatpush2.msra.mxu0 0.0
      %2549 = vmatprep.subr.mxu0 0.0
      %2550 = vmatpush2.msra.mxu0 0.0
      %2551 = vmatprep.subr.mxu0 0.0
      %2552 = vmatpush2.msra.mxu0 0.0
      %2553 = vmatprep.subr.mxu0 0.0
      %2554 = vmatpush2.msra.mxu0 0.0
      %2555 = vmatprep.subr.mxu0 0.0
      %2556 = vmatpush2.msra.mxu0 0.0
      %2557 = vmatprep.subr.mxu0 0.0
      %2558 = vmatpush2.msra.mxu0 0.0
      %2559 = vmatprep.subr.mxu0 0.0
      %2560 = vmatpush2.msra.mxu0 0.0
      %2561 = vmatprep.subr.mxu0 0.0
      %2562 = vmatpush2.msra.mxu0 0.0
      %2563 = vmatprep.subr.mxu0 0.0
      %2564 = vmatpush2.msra.mxu0 0.0
      %2565 = vmatprep.subr.mxu0 0.0
      %2566 = vmatpush2.msra.mxu0 0.0
      %2567 = vmatprep.subr.mxu0 0.0
      %2568 = vmatpush2.msra.mxu0 0.0
      %2569 = vmatprep.subr.mxu0 0.0
      %2570 = vmatpush2.msra.mxu0 0.0
      %2571 = vmatprep.subr.mxu0 0.0
      %2572 = vmatpush2.msra.mxu0 0.0
      %2573 = vmatprep.subr.mxu0 0.0
      %2574 = vmatpush2.msra.mxu0 0.0
      %2575 = vmatprep.mubr.f32.mxu0 0.0
      %v2576 = vand.u32 %v2076, 4294901760
      %2577 = vmatmul.mubr.f32.gmra.mxu0 %v2576
      %v2578 = vpop.f32.mrf.mxu0
      %v2579 = vadd.f32 %v2474, %v2578
      %v2580 = vpop.f32.mrf.mxu0
      %v2581 = vadd.f32 %v2476, %v2580
      %2582 = vmatprep.mubr.f32.mxu0 0.0
      %v2583 = vand.u32 %v2079, 4294901760
      %2584 = vmatmul.mubr.f32.gmra.mxu0 %v2583
      %v2585 = vpop.f32.mrf.mxu0
      %v2586 = vadd.f32 %v2483, %v2585
      %v2587 = vpop.f32.mrf.mxu0
      %v2588 = vadd.f32 %v2485, %v2587
      %2589 = vmatprep.mubr.f32.mxu0 0.0
      %v2590 = vand.u32 %v2082, 4294901760
      %2591 = vmatmul.mubr.f32.gmra.mxu0 %v2590
      %v2592 = vpop.f32.mrf.mxu0
      %v2593 = vadd.f32 %v2492, %v2592
      %v2594 = vpop.f32.mrf.mxu0
      %v2595 = vadd.f32 %v2494, %v2594
      %2596 = vmatprep.mubr.f32.mxu0 0.0
      %v2597 = vand.u32 %v2085, 4294901760
      %2598 = vmatmul.mubr.f32.gmra.mxu0 %v2597
      %v2599 = vpop.f32.mrf.mxu0
      %v2600 = vadd.f32 %v2501, %v2599
      %v2601 = vpop.f32.mrf.mxu0
      %v2602 = vadd.f32 %v2503, %v2601
      %2603 = vdwg.mxu0
      %2604 = vmatprep.subr.mxu0 0.0
      %2605 = vmatpush1.msra.mxu0 0.0
      %2606 = vmatprep.subr.mxu0 0.0
      %2607 = vmatpush1.msra.mxu0 0.0
      %2608 = vmatprep.subr.mxu0 0.0
      %2609 = vmatpush1.msra.mxu0 0.0
      %2610 = vmatprep.subr.mxu0 0.0
      %2611 = vmatpush1.msra.mxu0 0.0
      %2612 = vmatprep.subr.mxu0 0.0
      %2613 = vmatpush1.msra.mxu0 0.0
      %2614 = vmatprep.subr.mxu0 0.0
      %2615 = vmatpush1.msra.mxu0 0.0
      %2616 = vmatprep.subr.mxu0 0.0
      %2617 = vmatpush1.msra.mxu0 0.0
      %2618 = vmatprep.subr.mxu0 0.0
      %2619 = vmatpush1.msra.mxu0 0.0
      %2620 = vmatprep.subr.mxu0 0.0
      %2621 = vmatpush1.msra.mxu0 0.0
      %2622 = vmatprep.subr.mxu0 0.0
      %2623 = vmatpush1.msra.mxu0 0.0
      %2624 = vmatprep.subr.mxu0 0.0
      %2625 = vmatpush1.msra.mxu0 0.0
      %2626 = vmatprep.subr.mxu0 0.0
      %2627 = vmatpush1.msra.mxu0 0.0
      %2628 = vmatprep.subr.mxu0 0.0
      %2629 = vmatpush1.msra.mxu0 0.0
      %2630 = vmatprep.subr.mxu0 0.0
      %2631 = vmatpush1.msra.mxu0 0.0
      %2632 = vmatprep.subr.mxu0 0.0
      %2633 = vmatpush1.msra.mxu0 0.0
      %v2634 = vand.u32 %v268, 4294901760
      %2635 = vmatprep.subr.mxu0 %v2634
      %v2636 = vand.u32 %v267, 4294901760
      %2637 = vmatpush1.msra.mxu0 %v2636
      %2638 = vmatprep.subr.mxu0 0.0
      %2639 = vmatpush2.msra.mxu0 0.0
      %2640 = vmatprep.subr.mxu0 0.0
      %2641 = vmatpush2.msra.mxu0 0.0
      %2642 = vmatprep.subr.mxu0 0.0
      %2643 = vmatpush2.msra.mxu0 0.0
      %2644 = vmatprep.subr.mxu0 0.0
      %2645 = vmatpush2.msra.mxu0 0.0
      %2646 = vmatprep.subr.mxu0 0.0
      %2647 = vmatpush2.msra.mxu0 0.0
      %2648 = vmatprep.subr.mxu0 0.0
      %2649 = vmatpush2.msra.mxu0 0.0
      %2650 = vmatprep.subr.mxu0 0.0
      %2651 = vmatpush2.msra.mxu0 0.0
      %2652 = vmatprep.subr.mxu0 0.0
      %2653 = vmatpush2.msra.mxu0 0.0
      %2654 = vmatprep.subr.mxu0 0.0
      %2655 = vmatpush2.msra.mxu0 0.0
      %2656 = vmatprep.subr.mxu0 0.0
      %2657 = vmatpush2.msra.mxu0 0.0
      %2658 = vmatprep.subr.mxu0 0.0
      %2659 = vmatpush2.msra.mxu0 0.0
      %2660 = vmatprep.subr.mxu0 0.0
      %2661 = vmatpush2.msra.mxu0 0.0
      %2662 = vmatprep.subr.mxu0 0.0
      %2663 = vmatpush2.msra.mxu0 0.0
      %2664 = vmatprep.subr.mxu0 0.0
      %2665 = vmatpush2.msra.mxu0 0.0
      %2666 = vmatprep.subr.mxu0 0.0
      %2667 = vmatpush2.msra.mxu0 0.0
      %2668 = vmatprep.subr.mxu0 0.0
      %2669 = vmatpush2.msra.mxu0 0.0
      %2670 = vmatprep.mubr.f32.mxu0 0.0
      %v2671 = vand.u32 %v2076, 4294901760
      %2672 = vmatmul.mubr.f32.gmra.mxu0 %v2671
      %v2673 = vpop.f32.mrf.mxu0
      %v2674 = vadd.f32 %v2579, %v2673
      %v2675 = vpop.f32.mrf.mxu0
      %v2676 = vadd.f32 %v2581, %v2675
      %2677 = vmatprep.mubr.f32.mxu0 0.0
      %v2678 = vand.u32 %v2079, 4294901760
      %2679 = vmatmul.mubr.f32.gmra.mxu0 %v2678
      %v2680 = vpop.f32.mrf.mxu0
      %v2681 = vadd.f32 %v2586, %v2680
      %v2682 = vpop.f32.mrf.mxu0
      %v2683 = vadd.f32 %v2588, %v2682
      %2684 = vmatprep.mubr.f32.mxu0 0.0
      %v2685 = vand.u32 %v2082, 4294901760
      %2686 = vmatmul.mubr.f32.gmra.mxu0 %v2685
      %v2687 = vpop.f32.mrf.mxu0
      %v2688 = vadd.f32 %v2593, %v2687
      %v2689 = vpop.f32.mrf.mxu0
      %v2690 = vadd.f32 %v2595, %v2689
      %2691 = vmatprep.mubr.f32.mxu0 0.0
      %v2692 = vand.u32 %v2085, 4294901760
      %2693 = vmatmul.mubr.f32.gmra.mxu0 %v2692
      %v2694 = vpop.f32.mrf.mxu0
      %v2695 = vadd.f32 %v2600, %v2694
      %v2696 = vpop.f32.mrf.mxu0
      %v2697 = vadd.f32 %v2602, %v2696
      %2698 = vdwg.mxu0
      %2699 = vmatprep.subr.mxu0 0.0
      %2700 = vmatpush1.msra.mxu0 0.0
      %2701 = vmatprep.subr.mxu0 0.0
      %2702 = vmatpush1.msra.mxu0 0.0
      %2703 = vmatprep.subr.mxu0 0.0
      %2704 = vmatpush1.msra.mxu0 0.0
      %2705 = vmatprep.subr.mxu0 0.0
      %2706 = vmatpush1.msra.mxu0 0.0
      %2707 = vmatprep.subr.mxu0 0.0
      %2708 = vmatpush1.msra.mxu0 0.0
      %2709 = vmatprep.subr.mxu0 0.0
      %2710 = vmatpush1.msra.mxu0 0.0
      %2711 = vmatprep.subr.mxu0 0.0
      %2712 = vmatpush1.msra.mxu0 0.0
      %2713 = vmatprep.subr.mxu0 0.0
      %2714 = vmatpush1.msra.mxu0 0.0
      %2715 = vmatprep.subr.mxu0 0.0
      %2716 = vmatpush1.msra.mxu0 0.0
      %2717 = vmatprep.subr.mxu0 0.0
      %2718 = vmatpush1.msra.mxu0 0.0
      %2719 = vmatprep.subr.mxu0 0.0
      %2720 = vmatpush1.msra.mxu0 0.0
      %2721 = vmatprep.subr.mxu0 0.0
      %2722 = vmatpush1.msra.mxu0 0.0
      %2723 = vmatprep.subr.mxu0 0.0
      %2724 = vmatpush1.msra.mxu0 0.0
      %2725 = vmatprep.subr.mxu0 0.0
      %2726 = vmatpush1.msra.mxu0 0.0
      %2727 = vmatprep.subr.mxu0 0.0
      %2728 = vmatpush1.msra.mxu0 0.0
      %2729 = vmatprep.subr.mxu0 0.0
      %v2730 = vand.u32 %v269, 4294901760
      %2731 = vmatpush1.msra.mxu0 %v2730
      %2732 = vmatprep.subr.mxu0 0.0
      %2733 = vmatpush2.msra.mxu0 0.0
      %2734 = vmatprep.subr.mxu0 0.0
      %2735 = vmatpush2.msra.mxu0 0.0
      %2736 = vmatprep.subr.mxu0 0.0
      %2737 = vmatpush2.msra.mxu0 0.0
      %2738 = vmatprep.subr.mxu0 0.0
      %2739 = vmatpush2.msra.mxu0 0.0
      %2740 = vmatprep.subr.mxu0 0.0
      %2741 = vmatpush2.msra.mxu0 0.0
      %2742 = vmatprep.subr.mxu0 0.0
      %2743 = vmatpush2.msra.mxu0 0.0
      %2744 = vmatprep.subr.mxu0 0.0
      %2745 = vmatpush2.msra.mxu0 0.0
      %2746 = vmatprep.subr.mxu0 0.0
      %2747 = vmatpush2.msra.mxu0 0.0
      %2748 = vmatprep.subr.mxu0 0.0
      %2749 = vmatpush2.msra.mxu0 0.0
      %2750 = vmatprep.subr.mxu0 0.0
      %2751 = vmatpush2.msra.mxu0 0.0
      %2752 = vmatprep.subr.mxu0 0.0
      %2753 = vmatpush2.msra.mxu0 0.0
      %2754 = vmatprep.subr.mxu0 0.0
      %2755 = vmatpush2.msra.mxu0 0.0
      %2756 = vmatprep.subr.mxu0 0.0
      %2757 = vmatpush2.msra.mxu0 0.0
      %2758 = vmatprep.subr.mxu0 0.0
      %2759 = vmatpush2.msra.mxu0 0.0
      %2760 = vmatprep.subr.mxu0 0.0
      %2761 = vmatpush2.msra.mxu0 0.0
      %2762 = vmatprep.subr.mxu0 0.0
      %2763 = vmatpush2.msra.mxu0 0.0
      %2764 = vmatprep.mubr.f32.mxu0 0.0
      %v2765 = vand.u32 %v2076, 4294901760
      %v2766 = vsub.f32 %v2076, %v2765
      %v2767 = vand.u32 %v2766, 4294901760
      %v2768 = vsub.f32 %v2766, %v2767
      %v2769 = vand.u32 %v2768, 4294901760
      %2770 = vmatmul.mubr.f32.gmra.mxu0 %v2769
      %v2771 = vpop.f32.mrf.mxu0
      %v2772 = vadd.f32 0.0, %v2771
      %v2773 = vpop.f32.mrf.mxu0
      %2774 = vmatprep.mubr.f32.mxu0 0.0
      %v2775 = vand.u32 %v2079, 4294901760
      %v2776 = vsub.f32 %v2079, %v2775
      %v2777 = vand.u32 %v2776, 4294901760
      %v2778 = vsub.f32 %v2776, %v2777
      %v2779 = vand.u32 %v2778, 4294901760
      %2780 = vmatmul.mubr.f32.gmra.mxu0 %v2779
      %v2781 = vpop.f32.mrf.mxu0
      %v2782 = vadd.f32 0.0, %v2781
      %v2783 = vpop.f32.mrf.mxu0
      %2784 = vmatprep.mubr.f32.mxu0 0.0
      %v2785 = vand.u32 %v2082, 4294901760
      %v2786 = vsub.f32 %v2082, %v2785
      %v2787 = vand.u32 %v2786, 4294901760
      %v2788 = vsub.f32 %v2786, %v2787
      %v2789 = vand.u32 %v2788, 4294901760
      %2790 = vmatmul.mubr.f32.gmra.mxu0 %v2789
      %v2791 = vpop.f32.mrf.mxu0
      %v2792 = vadd.f32 0.0, %v2791
      %v2793 = vpop.f32.mrf.mxu0
      %2794 = vmatprep.mubr.f32.mxu0 0.0
      %v2795 = vand.u32 %v2085, 4294901760
      %v2796 = vsub.f32 %v2085, %v2795
      %v2797 = vand.u32 %v2796, 4294901760
      %v2798 = vsub.f32 %v2796, %v2797
      %v2799 = vand.u32 %v2798, 4294901760
      %2800 = vmatmul.mubr.f32.gmra.mxu0 %v2799
      %v2801 = vpop.f32.mrf.mxu0
      %v2802 = vadd.f32 0.0, %v2801
      %v2803 = vpop.f32.mrf.mxu0
      %2804 = vdwg.mxu0
      %2805 = vmatprep.subr.mxu0 0.0
      %2806 = vmatpush1.msra.mxu0 0.0
      %2807 = vmatprep.subr.mxu0 0.0
      %2808 = vmatpush1.msra.mxu0 0.0
      %2809 = vmatprep.subr.mxu0 0.0
      %2810 = vmatpush1.msra.mxu0 0.0
      %2811 = vmatprep.subr.mxu0 0.0
      %2812 = vmatpush1.msra.mxu0 0.0
      %2813 = vmatprep.subr.mxu0 0.0
      %2814 = vmatpush1.msra.mxu0 0.0
      %2815 = vmatprep.subr.mxu0 0.0
      %2816 = vmatpush1.msra.mxu0 0.0
      %2817 = vmatprep.subr.mxu0 0.0
      %2818 = vmatpush1.msra.mxu0 0.0
      %2819 = vmatprep.subr.mxu0 0.0
      %2820 = vmatpush1.msra.mxu0 0.0
      %2821 = vmatprep.subr.mxu0 0.0
      %2822 = vmatpush1.msra.mxu0 0.0
      %2823 = vmatprep.subr.mxu0 0.0
      %2824 = vmatpush1.msra.mxu0 0.0
      %2825 = vmatprep.subr.mxu0 0.0
      %2826 = vmatpush1.msra.mxu0 0.0
      %2827 = vmatprep.subr.mxu0 0.0
      %2828 = vmatpush1.msra.mxu0 0.0
      %2829 = vmatprep.subr.mxu0 0.0
      %2830 = vmatpush1.msra.mxu0 0.0
      %2831 = vmatprep.subr.mxu0 0.0
      %2832 = vmatpush1.msra.mxu0 0.0
      %2833 = vmatprep.subr.mxu0 0.0
      %2834 = vmatpush1.msra.mxu0 0.0
      %2835 = vmatprep.subr.mxu0 0.0
      %v2836 = vand.u32 %v269, 4294901760
      %v2837 = vsub.f32 %v269, %v2836
      %v2838 = vand.u32 %v2837, 4294901760
      %v2839 = vsub.f32 %v2837, %v2838
      %v2840 = vand.u32 %v2839, 4294901760
      %2841 = vmatpush1.msra.mxu0 %v2840
      %2842 = vmatprep.subr.mxu0 0.0
      %2843 = vmatpush2.msra.mxu0 0.0
      %2844 = vmatprep.subr.mxu0 0.0
      %2845 = vmatpush2.msra.mxu0 0.0
      %2846 = vmatprep.subr.mxu0 0.0
      %2847 = vmatpush2.msra.mxu0 0.0
      %2848 = vmatprep.subr.mxu0 0.0
      %2849 = vmatpush2.msra.mxu0 0.0
      %2850 = vmatprep.subr.mxu0 0.0
      %2851 = vmatpush2.msra.mxu0 0.0
      %2852 = vmatprep.subr.mxu0 0.0
      %2853 = vmatpush2.msra.mxu0 0.0
      %2854 = vmatprep.subr.mxu0 0.0
      %2855 = vmatpush2.msra.mxu0 0.0
      %2856 = vmatprep.subr.mxu0 0.0
      %2857 = vmatpush2.msra.mxu0 0.0
      %2858 = vmatprep.subr.mxu0 0.0
      %2859 = vmatpush2.msra.mxu0 0.0
      %2860 = vmatprep.subr.mxu0 0.0
      %2861 = vmatpush2.msra.mxu0 0.0
      %2862 = vmatprep.subr.mxu0 0.0
      %2863 = vmatpush2.msra.mxu0 0.0
      %2864 = vmatprep.subr.mxu0 0.0
      %2865 = vmatpush2.msra.mxu0 0.0
      %2866 = vmatprep.subr.mxu0 0.0
      %2867 = vmatpush2.msra.mxu0 0.0
      %2868 = vmatprep.subr.mxu0 0.0
      %2869 = vmatpush2.msra.mxu0 0.0
      %2870 = vmatprep.subr.mxu0 0.0
      %2871 = vmatpush2.msra.mxu0 0.0
      %2872 = vmatprep.subr.mxu0 0.0
      %2873 = vmatpush2.msra.mxu0 0.0
      %2874 = vmatprep.mubr.f32.mxu0 0.0
      %v2875 = vand.u32 %v2076, 4294901760
      %2876 = vmatmul.mubr.f32.gmra.mxu0 %v2875
      %v2877 = vpop.f32.mrf.mxu0
      %v2878 = vadd.f32 %v2772, %v2877
      %v2879 = vpop.f32.mrf.mxu0
      %2880 = vmatprep.mubr.f32.mxu0 0.0
      %v2881 = vand.u32 %v2079, 4294901760
      %2882 = vmatmul.mubr.f32.gmra.mxu0 %v2881
      %v2883 = vpop.f32.mrf.mxu0
      %v2884 = vadd.f32 %v2782, %v2883
      %v2885 = vpop.f32.mrf.mxu0
      %2886 = vmatprep.mubr.f32.mxu0 0.0
      %v2887 = vand.u32 %v2082, 4294901760
      %2888 = vmatmul.mubr.f32.gmra.mxu0 %v2887
      %v2889 = vpop.f32.mrf.mxu0
      %v2890 = vadd.f32 %v2792, %v2889
      %v2891 = vpop.f32.mrf.mxu0
      %2892 = vmatprep.mubr.f32.mxu0 0.0
      %v2893 = vand.u32 %v2085, 4294901760
      %2894 = vmatmul.mubr.f32.gmra.mxu0 %v2893
      %v2895 = vpop.f32.mrf.mxu0
      %v2896 = vadd.f32 %v2802, %v2895
      %v2897 = vpop.f32.mrf.mxu0
      %2898 = vdwg.mxu0
      %2899 = vmatprep.subr.mxu0 0.0
      %2900 = vmatpush1.msra.mxu0 0.0
      %2901 = vmatprep.subr.mxu0 0.0
      %2902 = vmatpush1.msra.mxu0 0.0
      %2903 = vmatprep.subr.mxu0 0.0
      %2904 = vmatpush1.msra.mxu0 0.0
      %2905 = vmatprep.subr.mxu0 0.0
      %2906 = vmatpush1.msra.mxu0 0.0
      %2907 = vmatprep.subr.mxu0 0.0
      %2908 = vmatpush1.msra.mxu0 0.0
      %2909 = vmatprep.subr.mxu0 0.0
      %2910 = vmatpush1.msra.mxu0 0.0
      %2911 = vmatprep.subr.mxu0 0.0
      %2912 = vmatpush1.msra.mxu0 0.0
      %2913 = vmatprep.subr.mxu0 0.0
      %2914 = vmatpush1.msra.mxu0 0.0
      %2915 = vmatprep.subr.mxu0 0.0
      %2916 = vmatpush1.msra.mxu0 0.0
      %2917 = vmatprep.subr.mxu0 0.0
      %2918 = vmatpush1.msra.mxu0 0.0
      %2919 = vmatprep.subr.mxu0 0.0
      %2920 = vmatpush1.msra.mxu0 0.0
      %2921 = vmatprep.subr.mxu0 0.0
      %2922 = vmatpush1.msra.mxu0 0.0
      %2923 = vmatprep.subr.mxu0 0.0
      %2924 = vmatpush1.msra.mxu0 0.0
      %2925 = vmatprep.subr.mxu0 0.0
      %2926 = vmatpush1.msra.mxu0 0.0
      %2927 = vmatprep.subr.mxu0 0.0
      %2928 = vmatpush1.msra.mxu0 0.0
      %2929 = vmatprep.subr.mxu0 0.0
      %v2930 = vand.u32 %v269, 4294901760
      %v2931 = vsub.f32 %v269, %v2930
      %2932 = vmatpush1.msra.mxu0 %v2931
      %2933 = vmatprep.subr.mxu0 0.0
      %2934 = vmatpush2.msra.mxu0 0.0
      %2935 = vmatprep.subr.mxu0 0.0
      %2936 = vmatpush2.msra.mxu0 0.0
      %2937 = vmatprep.subr.mxu0 0.0
      %2938 = vmatpush2.msra.mxu0 0.0
      %2939 = vmatprep.subr.mxu0 0.0
      %2940 = vmatpush2.msra.mxu0 0.0
      %2941 = vmatprep.subr.mxu0 0.0
      %2942 = vmatpush2.msra.mxu0 0.0
      %2943 = vmatprep.subr.mxu0 0.0
      %2944 = vmatpush2.msra.mxu0 0.0
      %2945 = vmatprep.subr.mxu0 0.0
      %2946 = vmatpush2.msra.mxu0 0.0
      %2947 = vmatprep.subr.mxu0 0.0
      %2948 = vmatpush2.msra.mxu0 0.0
      %2949 = vmatprep.subr.mxu0 0.0
      %2950 = vmatpush2.msra.mxu0 0.0
      %2951 = vmatprep.subr.mxu0 0.0
      %2952 = vmatpush2.msra.mxu0 0.0
      %2953 = vmatprep.subr.mxu0 0.0
      %2954 = vmatpush2.msra.mxu0 0.0
      %2955 = vmatprep.subr.mxu0 0.0
      %2956 = vmatpush2.msra.mxu0 0.0
      %2957 = vmatprep.subr.mxu0 0.0
      %2958 = vmatpush2.msra.mxu0 0.0
      %2959 = vmatprep.subr.mxu0 0.0
      %2960 = vmatpush2.msra.mxu0 0.0
      %2961 = vmatprep.subr.mxu0 0.0
      %2962 = vmatpush2.msra.mxu0 0.0
      %2963 = vmatprep.subr.mxu0 0.0
      %2964 = vmatpush2.msra.mxu0 0.0
      %2965 = vmatprep.mubr.f32.mxu0 0.0
      %v2966 = vand.u32 %v2076, 4294901760
      %v2967 = vsub.f32 %v2076, %v2966
      %2968 = vmatmul.mubr.f32.gmra.mxu0 %v2967
      %v2969 = vpop.f32.mrf.mxu0
      %v2970 = vadd.f32 %v2878, %v2969
      %v2971 = vpop.f32.mrf.mxu0
      %2972 = vmatprep.mubr.f32.mxu0 0.0
      %v2973 = vand.u32 %v2079, 4294901760
      %v2974 = vsub.f32 %v2079, %v2973
      %2975 = vmatmul.mubr.f32.gmra.mxu0 %v2974
      %v2976 = vpop.f32.mrf.mxu0
      %v2977 = vadd.f32 %v2884, %v2976
      %v2978 = vpop.f32.mrf.mxu0
      %2979 = vmatprep.mubr.f32.mxu0 0.0
      %v2980 = vand.u32 %v2082, 4294901760
      %v2981 = vsub.f32 %v2082, %v2980
      %2982 = vmatmul.mubr.f32.gmra.mxu0 %v2981
      %v2983 = vpop.f32.mrf.mxu0
      %v2984 = vadd.f32 %v2890, %v2983
      %v2985 = vpop.f32.mrf.mxu0
      %2986 = vmatprep.mubr.f32.mxu0 0.0
      %v2987 = vand.u32 %v2085, 4294901760
      %v2988 = vsub.f32 %v2085, %v2987
      %2989 = vmatmul.mubr.f32.gmra.mxu0 %v2988
      %v2990 = vpop.f32.mrf.mxu0
      %v2991 = vadd.f32 %v2896, %v2990
      %v2992 = vpop.f32.mrf.mxu0
      %2993 = vdwg.mxu0
      %2994 = vmatprep.subr.mxu0 0.0
      %2995 = vmatpush1.msra.mxu0 0.0
      %2996 = vmatprep.subr.mxu0 0.0
      %2997 = vmatpush1.msra.mxu0 0.0
      %2998 = vmatprep.subr.mxu0 0.0
      %2999 = vmatpush1.msra.mxu0 0.0
      %3000 = vmatprep.subr.mxu0 0.0
      %3001 = vmatpush1.msra.mxu0 0.0
      %3002 = vmatprep.subr.mxu0 0.0
      %3003 = vmatpush1.msra.mxu0 0.0
      %3004 = vmatprep.subr.mxu0 0.0
      %3005 = vmatpush1.msra.mxu0 0.0
      %3006 = vmatprep.subr.mxu0 0.0
      %3007 = vmatpush1.msra.mxu0 0.0
      %3008 = vmatprep.subr.mxu0 0.0
      %3009 = vmatpush1.msra.mxu0 0.0
      %3010 = vmatprep.subr.mxu0 0.0
      %3011 = vmatpush1.msra.mxu0 0.0
      %3012 = vmatprep.subr.mxu0 0.0
      %3013 = vmatpush1.msra.mxu0 0.0
      %3014 = vmatprep.subr.mxu0 0.0
      %3015 = vmatpush1.msra.mxu0 0.0
      %3016 = vmatprep.subr.mxu0 0.0
      %3017 = vmatpush1.msra.mxu0 0.0
      %3018 = vmatprep.subr.mxu0 0.0
      %3019 = vmatpush1.msra.mxu0 0.0
      %3020 = vmatprep.subr.mxu0 0.0
      %3021 = vmatpush1.msra.mxu0 0.0
      %3022 = vmatprep.subr.mxu0 0.0
      %3023 = vmatpush1.msra.mxu0 0.0
      %3024 = vmatprep.subr.mxu0 0.0
      %v3025 = vand.u32 %v269, 4294901760
      %3026 = vmatpush1.msra.mxu0 %v3025
      %3027 = vmatprep.subr.mxu0 0.0
      %3028 = vmatpush2.msra.mxu0 0.0
      %3029 = vmatprep.subr.mxu0 0.0
      %3030 = vmatpush2.msra.mxu0 0.0
      %3031 = vmatprep.subr.mxu0 0.0
      %3032 = vmatpush2.msra.mxu0 0.0
      %3033 = vmatprep.subr.mxu0 0.0
      %3034 = vmatpush2.msra.mxu0 0.0
      %3035 = vmatprep.subr.mxu0 0.0
      %3036 = vmatpush2.msra.mxu0 0.0
      %3037 = vmatprep.subr.mxu0 0.0
      %3038 = vmatpush2.msra.mxu0 0.0
      %3039 = vmatprep.subr.mxu0 0.0
      %3040 = vmatpush2.msra.mxu0 0.0
      %3041 = vmatprep.subr.mxu0 0.0
      %3042 = vmatpush2.msra.mxu0 0.0
      %3043 = vmatprep.subr.mxu0 0.0
      %3044 = vmatpush2.msra.mxu0 0.0
      %3045 = vmatprep.subr.mxu0 0.0
      %3046 = vmatpush2.msra.mxu0 0.0
      %3047 = vmatprep.subr.mxu0 0.0
      %3048 = vmatpush2.msra.mxu0 0.0
      %3049 = vmatprep.subr.mxu0 0.0
      %3050 = vmatpush2.msra.mxu0 0.0
      %3051 = vmatprep.subr.mxu0 0.0
      %3052 = vmatpush2.msra.mxu0 0.0
      %3053 = vmatprep.subr.mxu0 0.0
      %3054 = vmatpush2.msra.mxu0 0.0
      %3055 = vmatprep.subr.mxu0 0.0
      %3056 = vmatpush2.msra.mxu0 0.0
      %3057 = vmatprep.subr.mxu0 0.0
      %3058 = vmatpush2.msra.mxu0 0.0
      %3059 = vmatprep.mubr.f32.mxu0 0.0
      %v3060 = vand.u32 %v2076, 4294901760
      %v3061 = vsub.f32 %v2076, %v3060
      %v3062 = vand.u32 %v3061, 4294901760
      %3063 = vmatmul.mubr.f32.gmra.mxu0 %v3062
      %v3064 = vpop.f32.mrf.mxu0
      %v3065 = vadd.f32 %v2970, %v3064
      %v3066 = vpop.f32.mrf.mxu0
      %3067 = vmatprep.mubr.f32.mxu0 0.0
      %v3068 = vand.u32 %v2079, 4294901760
      %v3069 = vsub.f32 %v2079, %v3068
      %v3070 = vand.u32 %v3069, 4294901760
      %3071 = vmatmul.mubr.f32.gmra.mxu0 %v3070
      %v3072 = vpop.f32.mrf.mxu0
      %v3073 = vadd.f32 %v2977, %v3072
      %v3074 = vpop.f32.mrf.mxu0
      %3075 = vmatprep.mubr.f32.mxu0 0.0
      %v3076 = vand.u32 %v2082, 4294901760
      %v3077 = vsub.f32 %v2082, %v3076
      %v3078 = vand.u32 %v3077, 4294901760
      %3079 = vmatmul.mubr.f32.gmra.mxu0 %v3078
      %v3080 = vpop.f32.mrf.mxu0
      %v3081 = vadd.f32 %v2984, %v3080
      %v3082 = vpop.f32.mrf.mxu0
      %3083 = vmatprep.mubr.f32.mxu0 0.0
      %v3084 = vand.u32 %v2085, 4294901760
      %v3085 = vsub.f32 %v2085, %v3084
      %v3086 = vand.u32 %v3085, 4294901760
      %3087 = vmatmul.mubr.f32.gmra.mxu0 %v3086
      %v3088 = vpop.f32.mrf.mxu0
      %v3089 = vadd.f32 %v2991, %v3088
      %v3090 = vpop.f32.mrf.mxu0
      %3091 = vdwg.mxu0
      %3092 = vmatprep.subr.mxu0 0.0
      %3093 = vmatpush1.msra.mxu0 0.0
      %3094 = vmatprep.subr.mxu0 0.0
      %3095 = vmatpush1.msra.mxu0 0.0
      %3096 = vmatprep.subr.mxu0 0.0
      %3097 = vmatpush1.msra.mxu0 0.0
      %3098 = vmatprep.subr.mxu0 0.0
      %3099 = vmatpush1.msra.mxu0 0.0
      %3100 = vmatprep.subr.mxu0 0.0
      %3101 = vmatpush1.msra.mxu0 0.0
      %3102 = vmatprep.subr.mxu0 0.0
      %3103 = vmatpush1.msra.mxu0 0.0
      %3104 = vmatprep.subr.mxu0 0.0
      %3105 = vmatpush1.msra.mxu0 0.0
      %3106 = vmatprep.subr.mxu0 0.0
      %3107 = vmatpush1.msra.mxu0 0.0
      %3108 = vmatprep.subr.mxu0 0.0
      %3109 = vmatpush1.msra.mxu0 0.0
      %3110 = vmatprep.subr.mxu0 0.0
      %3111 = vmatpush1.msra.mxu0 0.0
      %3112 = vmatprep.subr.mxu0 0.0
      %3113 = vmatpush1.msra.mxu0 0.0
      %3114 = vmatprep.subr.mxu0 0.0
      %3115 = vmatpush1.msra.mxu0 0.0
      %3116 = vmatprep.subr.mxu0 0.0
      %3117 = vmatpush1.msra.mxu0 0.0
      %3118 = vmatprep.subr.mxu0 0.0
      %3119 = vmatpush1.msra.mxu0 0.0
      %3120 = vmatprep.subr.mxu0 0.0
      %3121 = vmatpush1.msra.mxu0 0.0
      %3122 = vmatprep.subr.mxu0 0.0
      %v3123 = vand.u32 %v269, 4294901760
      %v3124 = vsub.f32 %v269, %v3123
      %v3125 = vand.u32 %v3124, 4294901760
      %3126 = vmatpush1.msra.mxu0 %v3125
      %3127 = vmatprep.subr.mxu0 0.0
      %3128 = vmatpush2.msra.mxu0 0.0
      %3129 = vmatprep.subr.mxu0 0.0
      %3130 = vmatpush2.msra.mxu0 0.0
      %3131 = vmatprep.subr.mxu0 0.0
      %3132 = vmatpush2.msra.mxu0 0.0
      %3133 = vmatprep.subr.mxu0 0.0
      %3134 = vmatpush2.msra.mxu0 0.0
      %3135 = vmatprep.subr.mxu0 0.0
      %3136 = vmatpush2.msra.mxu0 0.0
      %3137 = vmatprep.subr.mxu0 0.0
      %3138 = vmatpush2.msra.mxu0 0.0
      %3139 = vmatprep.subr.mxu0 0.0
      %3140 = vmatpush2.msra.mxu0 0.0
      %3141 = vmatprep.subr.mxu0 0.0
      %3142 = vmatpush2.msra.mxu0 0.0
      %3143 = vmatprep.subr.mxu0 0.0
      %3144 = vmatpush2.msra.mxu0 0.0
      %3145 = vmatprep.subr.mxu0 0.0
      %3146 = vmatpush2.msra.mxu0 0.0
      %3147 = vmatprep.subr.mxu0 0.0
      %3148 = vmatpush2.msra.mxu0 0.0
      %3149 = vmatprep.subr.mxu0 0.0
      %3150 = vmatpush2.msra.mxu0 0.0
      %3151 = vmatprep.subr.mxu0 0.0
      %3152 = vmatpush2.msra.mxu0 0.0
      %3153 = vmatprep.subr.mxu0 0.0
      %3154 = vmatpush2.msra.mxu0 0.0
      %3155 = vmatprep.subr.mxu0 0.0
      %3156 = vmatpush2.msra.mxu0 0.0
      %3157 = vmatprep.subr.mxu0 0.0
      %3158 = vmatpush2.msra.mxu0 0.0
      %3159 = vmatprep.mubr.f32.mxu0 0.0
      %v3160 = vand.u32 %v2076, 4294901760
      %3161 = vmatmul.mubr.f32.gmra.mxu0 %v3160
      %v3162 = vpop.f32.mrf.mxu0
      %v3163 = vadd.f32 %v3065, %v3162
      %v3164 = vpop.f32.mrf.mxu0
      %3165 = vmatprep.mubr.f32.mxu0 0.0
      %v3166 = vand.u32 %v2079, 4294901760
      %3167 = vmatmul.mubr.f32.gmra.mxu0 %v3166
      %v3168 = vpop.f32.mrf.mxu0
      %v3169 = vadd.f32 %v3073, %v3168
      %v3170 = vpop.f32.mrf.mxu0
      %3171 = vmatprep.mubr.f32.mxu0 0.0
      %v3172 = vand.u32 %v2082, 4294901760
      %3173 = vmatmul.mubr.f32.gmra.mxu0 %v3172
      %v3174 = vpop.f32.mrf.mxu0
      %v3175 = vadd.f32 %v3081, %v3174
      %v3176 = vpop.f32.mrf.mxu0
      %3177 = vmatprep.mubr.f32.mxu0 0.0
      %v3178 = vand.u32 %v2085, 4294901760
      %3179 = vmatmul.mubr.f32.gmra.mxu0 %v3178
      %v3180 = vpop.f32.mrf.mxu0
      %v3181 = vadd.f32 %v3089, %v3180
      %v3182 = vpop.f32.mrf.mxu0
      %3183 = vdwg.mxu0
      %3184 = vmatprep.subr.mxu0 0.0
      %3185 = vmatpush1.msra.mxu0 0.0
      %3186 = vmatprep.subr.mxu0 0.0
      %3187 = vmatpush1.msra.mxu0 0.0
      %3188 = vmatprep.subr.mxu0 0.0
      %3189 = vmatpush1.msra.mxu0 0.0
      %3190 = vmatprep.subr.mxu0 0.0
      %3191 = vmatpush1.msra.mxu0 0.0
      %3192 = vmatprep.subr.mxu0 0.0
      %3193 = vmatpush1.msra.mxu0 0.0
      %3194 = vmatprep.subr.mxu0 0.0
      %3195 = vmatpush1.msra.mxu0 0.0
      %3196 = vmatprep.subr.mxu0 0.0
      %3197 = vmatpush1.msra.mxu0 0.0
      %3198 = vmatprep.subr.mxu0 0.0
      %3199 = vmatpush1.msra.mxu0 0.0
      %3200 = vmatprep.subr.mxu0 0.0
      %3201 = vmatpush1.msra.mxu0 0.0
      %3202 = vmatprep.subr.mxu0 0.0
      %3203 = vmatpush1.msra.mxu0 0.0
      %3204 = vmatprep.subr.mxu0 0.0
      %3205 = vmatpush1.msra.mxu0 0.0
      %3206 = vmatprep.subr.mxu0 0.0
      %3207 = vmatpush1.msra.mxu0 0.0
      %3208 = vmatprep.subr.mxu0 0.0
      %3209 = vmatpush1.msra.mxu0 0.0
      %3210 = vmatprep.subr.mxu0 0.0
      %3211 = vmatpush1.msra.mxu0 0.0
      %3212 = vmatprep.subr.mxu0 0.0
      %3213 = vmatpush1.msra.mxu0 0.0
      %3214 = vmatprep.subr.mxu0 0.0
      %v3215 = vand.u32 %v269, 4294901760
      %3216 = vmatpush1.msra.mxu0 %v3215
      %3217 = vmatprep.subr.mxu0 0.0
      %3218 = vmatpush2.msra.mxu0 0.0
      %3219 = vmatprep.subr.mxu0 0.0
      %3220 = vmatpush2.msra.mxu0 0.0
      %3221 = vmatprep.subr.mxu0 0.0
      %3222 = vmatpush2.msra.mxu0 0.0
      %3223 = vmatprep.subr.mxu0 0.0
      %3224 = vmatpush2.msra.mxu0 0.0
      %3225 = vmatprep.subr.mxu0 0.0
      %3226 = vmatpush2.msra.mxu0 0.0
      %3227 = vmatprep.subr.mxu0 0.0
      %3228 = vmatpush2.msra.mxu0 0.0
      %3229 = vmatprep.subr.mxu0 0.0
      %3230 = vmatpush2.msra.mxu0 0.0
      %3231 = vmatprep.subr.mxu0 0.0
      %3232 = vmatpush2.msra.mxu0 0.0
      %3233 = vmatprep.subr.mxu0 0.0
      %3234 = vmatpush2.msra.mxu0 0.0
      %3235 = vmatprep.subr.mxu0 0.0
      %3236 = vmatpush2.msra.mxu0 0.0
      %3237 = vmatprep.subr.mxu0 0.0
      %3238 = vmatpush2.msra.mxu0 0.0
      %3239 = vmatprep.subr.mxu0 0.0
      %3240 = vmatpush2.msra.mxu0 0.0
      %3241 = vmatprep.subr.mxu0 0.0
      %3242 = vmatpush2.msra.mxu0 0.0
      %3243 = vmatprep.subr.mxu0 0.0
      %3244 = vmatpush2.msra.mxu0 0.0
      %3245 = vmatprep.subr.mxu0 0.0
      %3246 = vmatpush2.msra.mxu0 0.0
      %3247 = vmatprep.subr.mxu0 0.0
      %3248 = vmatpush2.msra.mxu0 0.0
      %3249 = vmatprep.mubr.f32.mxu0 0.0
      %v3250 = vand.u32 %v2076, 4294901760
      %3251 = vmatmul.mubr.f32.gmra.mxu0 %v3250
      %v3252 = vpop.f32.mrf.mxu0
      %v3253 = vadd.f32 %v3163, %v3252
      %v3254 = vpop.f32.mrf.mxu0
      %3255 = vmatprep.mubr.f32.mxu0 0.0
      %v3256 = vand.u32 %v2079, 4294901760
      %3257 = vmatmul.mubr.f32.gmra.mxu0 %v3256
      %v3258 = vpop.f32.mrf.mxu0
      %v3259 = vadd.f32 %v3169, %v3258
      %v3260 = vpop.f32.mrf.mxu0
      %3261 = vmatprep.mubr.f32.mxu0 0.0
      %v3262 = vand.u32 %v2082, 4294901760
      %3263 = vmatmul.mubr.f32.gmra.mxu0 %v3262
      %v3264 = vpop.f32.mrf.mxu0
      %v3265 = vadd.f32 %v3175, %v3264
      %v3266 = vpop.f32.mrf.mxu0
      %3267 = vmatprep.mubr.f32.mxu0 0.0
      %v3268 = vand.u32 %v2085, 4294901760
      %3269 = vmatmul.mubr.f32.gmra.mxu0 %v3268
      %v3270 = vpop.f32.mrf.mxu0
      %v3271 = vadd.f32 %v3181, %v3270
      %v3272 = vpop.f32.mrf.mxu0
      %3273 = vdwg.mxu0
      %v3274 = vsub.f32 %v206, %v2674
      %v3275 = vsub.f32 %v207, %v2676
      %v3276 = vsub.f32 %v208, %v3253
      %v3277 = vsub.f32 %v209, %v2681
      %v3278 = vsub.f32 %v210, %v2683
      %v3279 = vsub.f32 %v211, %v3259
      %v3280 = vsub.f32 %v212, %v2688
      %v3281 = vsub.f32 %v213, %v2690
      %v3282 = vsub.f32 %v214, %v3265
      %v3283 = vsub.f32 %v215, %v2695
      %v3284 = vsub.f32 %v216, %v2697
      %v3285 = vsub.f32 %v217, %v3271
      %v3286 = vmul.f32 %v3274, %v3274
      %v3287 = vmul.f32 %v3275, %v3275
      %v3288 = vmul.f32 %v3276, %v3276
      %v3289 = vmul.f32 %v3277, %v3277
      %v3290 = vmul.f32 %v3278, %v3278
      %v3291 = vmul.f32 %v3279, %v3279
      %v3292 = vmul.f32 %v3280, %v3280
      %v3293 = vmul.f32 %v3281, %v3281
      %v3294 = vmul.f32 %v3282, %v3282
      %v3295 = vmul.f32 %v3283, %v3283
      %v3296 = vmul.f32 %v3284, %v3284
      %v3297 = vmul.f32 %v3285, %v3285
      %3298 = vmatprep.subr.mxu0 0.0
      %v3299 = vand.u32 %v234, 4294901760
      %3300 = vmatpush1.msra.mxu0 %v3299
      %3301 = vmatprep.subr.mxu0 0.0
      %v3302 = vand.u32 %v233, 4294901760
      %3303 = vmatpush1.msra.mxu0 %v3302
      %3304 = vmatprep.subr.mxu0 0.0
      %v3305 = vand.u32 %v232, 4294901760
      %3306 = vmatpush1.msra.mxu0 %v3305
      %3307 = vmatprep.subr.mxu0 0.0
      %v3308 = vand.u32 %v231, 4294901760
      %3309 = vmatpush1.msra.mxu0 %v3308
      %3310 = vmatprep.subr.mxu0 0.0
      %v3311 = vand.u32 %v230, 4294901760
      %3312 = vmatpush1.msra.mxu0 %v3311
      %3313 = vmatprep.subr.mxu0 0.0
      %v3314 = vand.u32 %v229, 4294901760
      %3315 = vmatpush1.msra.mxu0 %v3314
      %3316 = vmatprep.subr.mxu0 0.0
      %v3317 = vand.u32 %v228, 4294901760
      %3318 = vmatpush1.msra.mxu0 %v3317
      %3319 = vmatprep.subr.mxu0 0.0
      %v3320 = vand.u32 %v227, 4294901760
      %3321 = vmatpush1.msra.mxu0 %v3320
      %3322 = vmatprep.subr.mxu0 0.0
      %v3323 = vand.u32 %v226, 4294901760
      %3324 = vmatpush1.msra.mxu0 %v3323
      %3325 = vmatprep.subr.mxu0 0.0
      %v3326 = vand.u32 %v225, 4294901760
      %3327 = vmatpush1.msra.mxu0 %v3326
      %3328 = vmatprep.subr.mxu0 0.0
      %v3329 = vand.u32 %v224, 4294901760
      %3330 = vmatpush1.msra.mxu0 %v3329
      %3331 = vmatprep.subr.mxu0 0.0
      %v3332 = vand.u32 %v223, 4294901760
      %3333 = vmatpush1.msra.mxu0 %v3332
      %3334 = vmatprep.subr.mxu0 0.0
      %v3335 = vand.u32 %v222, 4294901760
      %3336 = vmatpush1.msra.mxu0 %v3335
      %3337 = vmatprep.subr.mxu0 0.0
      %v3338 = vand.u32 %v221, 4294901760
      %3339 = vmatpush1.msra.mxu0 %v3338
      %3340 = vmatprep.subr.mxu0 0.0
      %v3341 = vand.u32 %v220, 4294901760
      %3342 = vmatpush1.msra.mxu0 %v3341
      %3343 = vmatprep.subr.mxu0 0.0
      %v3344 = vand.u32 %v219, 4294901760
      %3345 = vmatpush1.msra.mxu0 %v3344
      %3346 = vmatprep.subr.mxu0 0.0
      %v3347 = vand.u32 %v250, 4294901760
      %3348 = vmatpush2.msra.mxu0 %v3347
      %3349 = vmatprep.subr.mxu0 0.0
      %v3350 = vand.u32 %v249, 4294901760
      %3351 = vmatpush2.msra.mxu0 %v3350
      %3352 = vmatprep.subr.mxu0 0.0
      %v3353 = vand.u32 %v248, 4294901760
      %3354 = vmatpush2.msra.mxu0 %v3353
      %3355 = vmatprep.subr.mxu0 0.0
      %v3356 = vand.u32 %v247, 4294901760
      %3357 = vmatpush2.msra.mxu0 %v3356
      %3358 = vmatprep.subr.mxu0 0.0
      %v3359 = vand.u32 %v246, 4294901760
      %3360 = vmatpush2.msra.mxu0 %v3359
      %3361 = vmatprep.subr.mxu0 0.0
      %v3362 = vand.u32 %v245, 4294901760
      %3363 = vmatpush2.msra.mxu0 %v3362
      %3364 = vmatprep.subr.mxu0 0.0
      %v3365 = vand.u32 %v244, 4294901760
      %3366 = vmatpush2.msra.mxu0 %v3365
      %3367 = vmatprep.subr.mxu0 0.0
      %v3368 = vand.u32 %v243, 4294901760
      %3369 = vmatpush2.msra.mxu0 %v3368
      %3370 = vmatprep.subr.mxu0 0.0
      %v3371 = vand.u32 %v242, 4294901760
      %3372 = vmatpush2.msra.mxu0 %v3371
      %3373 = vmatprep.subr.mxu0 0.0
      %v3374 = vand.u32 %v241, 4294901760
      %3375 = vmatpush2.msra.mxu0 %v3374
      %3376 = vmatprep.subr.mxu0 0.0
      %v3377 = vand.u32 %v240, 4294901760
      %3378 = vmatpush2.msra.mxu0 %v3377
      %3379 = vmatprep.subr.mxu0 0.0
      %v3380 = vand.u32 %v239, 4294901760
      %3381 = vmatpush2.msra.mxu0 %v3380
      %3382 = vmatprep.subr.mxu0 0.0
      %v3383 = vand.u32 %v238, 4294901760
      %3384 = vmatpush2.msra.mxu0 %v3383
      %3385 = vmatprep.subr.mxu0 0.0
      %v3386 = vand.u32 %v237, 4294901760
      %3387 = vmatpush2.msra.mxu0 %v3386
      %3388 = vmatprep.subr.mxu0 0.0
      %v3389 = vand.u32 %v236, 4294901760
      %3390 = vmatpush2.msra.mxu0 %v3389
      %3391 = vmatprep.subr.mxu0 0.0
      %v3392 = vand.u32 %v235, 4294901760
      %3393 = vmatpush2.msra.mxu0 %v3392
      %v3394 = vand.u32 %v3287, 4294901760
      %v3395 = vsub.f32 %v3287, %v3394
      %v3396 = vand.u32 %v3395, 4294901760
      %v3397 = vsub.f32 %v3395, %v3396
      %v3398 = vand.u32 %v3397, 4294901760
      %3399 = vmatprep.mubr.f32.mxu0 %v3398
      %v3400 = vand.u32 %v3286, 4294901760
      %v3401 = vsub.f32 %v3286, %v3400
      %v3402 = vand.u32 %v3401, 4294901760
      %v3403 = vsub.f32 %v3401, %v3402
      %v3404 = vand.u32 %v3403, 4294901760
      %3405 = vmatmul.mubr.f32.gmra.mxu0 %v3404
      %v3406 = vpop.f32.mrf.mxu0
      %v3407 = vadd.f32 0.0, %v3406
      %v3408 = vpop.f32.mrf.mxu0
      %v3409 = vand.u32 %v3290, 4294901760
      %v3410 = vsub.f32 %v3290, %v3409
      %v3411 = vand.u32 %v3410, 4294901760
      %v3412 = vsub.f32 %v3410, %v3411
      %v3413 = vand.u32 %v3412, 4294901760
      %3414 = vmatprep.mubr.f32.mxu0 %v3413
      %v3415 = vand.u32 %v3289, 4294901760
      %v3416 = vsub.f32 %v3289, %v3415
      %v3417 = vand.u32 %v3416, 4294901760
      %v3418 = vsub.f32 %v3416, %v3417
      %v3419 = vand.u32 %v3418, 4294901760
      %3420 = vmatmul.mubr.f32.gmra.mxu0 %v3419
      %v3421 = vpop.f32.mrf.mxu0
      %v3422 = vadd.f32 0.0, %v3421
      %v3423 = vpop.f32.mrf.mxu0
      %v3424 = vand.u32 %v3293, 4294901760
      %v3425 = vsub.f32 %v3293, %v3424
      %v3426 = vand.u32 %v3425, 4294901760
      %v3427 = vsub.f32 %v3425, %v3426
      %v3428 = vand.u32 %v3427, 4294901760
      %3429 = vmatprep.mubr.f32.mxu0 %v3428
      %v3430 = vand.u32 %v3292, 4294901760
      %v3431 = vsub.f32 %v3292, %v3430
      %v3432 = vand.u32 %v3431, 4294901760
      %v3433 = vsub.f32 %v3431, %v3432
      %v3434 = vand.u32 %v3433, 4294901760
      %3435 = vmatmul.mubr.f32.gmra.mxu0 %v3434
      %v3436 = vpop.f32.mrf.mxu0
      %v3437 = vadd.f32 0.0, %v3436
      %v3438 = vpop.f32.mrf.mxu0
      %v3439 = vand.u32 %v3296, 4294901760
      %v3440 = vsub.f32 %v3296, %v3439
      %v3441 = vand.u32 %v3440, 4294901760
      %v3442 = vsub.f32 %v3440, %v3441
      %v3443 = vand.u32 %v3442, 4294901760
      %3444 = vmatprep.mubr.f32.mxu0 %v3443
      %v3445 = vand.u32 %v3295, 4294901760
      %v3446 = vsub.f32 %v3295, %v3445
      %v3447 = vand.u32 %v3446, 4294901760
      %v3448 = vsub.f32 %v3446, %v3447
      %v3449 = vand.u32 %v3448, 4294901760
      %3450 = vmatmul.mubr.f32.gmra.mxu0 %v3449
      %v3451 = vpop.f32.mrf.mxu0
      %v3452 = vadd.f32 0.0, %v3451
      %v3453 = vpop.f32.mrf.mxu0
      %3454 = vdwg.mxu0
      %3455 = vmatprep.subr.mxu0 0.0
      %v3456 = vand.u32 %v234, 4294901760
      %v3457 = vsub.f32 %v234, %v3456
      %v3458 = vand.u32 %v3457, 4294901760
      %v3459 = vsub.f32 %v3457, %v3458
      %v3460 = vand.u32 %v3459, 4294901760
      %3461 = vmatpush1.msra.mxu0 %v3460
      %3462 = vmatprep.subr.mxu0 0.0
      %v3463 = vand.u32 %v233, 4294901760
      %v3464 = vsub.f32 %v233, %v3463
      %v3465 = vand.u32 %v3464, 4294901760
      %v3466 = vsub.f32 %v3464, %v3465
      %v3467 = vand.u32 %v3466, 4294901760
      %3468 = vmatpush1.msra.mxu0 %v3467
      %3469 = vmatprep.subr.mxu0 0.0
      %v3470 = vand.u32 %v232, 4294901760
      %v3471 = vsub.f32 %v232, %v3470
      %v3472 = vand.u32 %v3471, 4294901760
      %v3473 = vsub.f32 %v3471, %v3472
      %v3474 = vand.u32 %v3473, 4294901760
      %3475 = vmatpush1.msra.mxu0 %v3474
      %3476 = vmatprep.subr.mxu0 0.0
      %v3477 = vand.u32 %v231, 4294901760
      %v3478 = vsub.f32 %v231, %v3477
      %v3479 = vand.u32 %v3478, 4294901760
      %v3480 = vsub.f32 %v3478, %v3479
      %v3481 = vand.u32 %v3480, 4294901760
      %3482 = vmatpush1.msra.mxu0 %v3481
      %3483 = vmatprep.subr.mxu0 0.0
      %v3484 = vand.u32 %v230, 4294901760
      %v3485 = vsub.f32 %v230, %v3484
      %v3486 = vand.u32 %v3485, 4294901760
      %v3487 = vsub.f32 %v3485, %v3486
      %v3488 = vand.u32 %v3487, 4294901760
      %3489 = vmatpush1.msra.mxu0 %v3488
      %3490 = vmatprep.subr.mxu0 0.0
      %v3491 = vand.u32 %v229, 4294901760
      %v3492 = vsub.f32 %v229, %v3491
      %v3493 = vand.u32 %v3492, 4294901760
      %v3494 = vsub.f32 %v3492, %v3493
      %v3495 = vand.u32 %v3494, 4294901760
      %3496 = vmatpush1.msra.mxu0 %v3495
      %3497 = vmatprep.subr.mxu0 0.0
      %v3498 = vand.u32 %v228, 4294901760
      %v3499 = vsub.f32 %v228, %v3498
      %v3500 = vand.u32 %v3499, 4294901760
      %v3501 = vsub.f32 %v3499, %v3500
      %v3502 = vand.u32 %v3501, 4294901760
      %3503 = vmatpush1.msra.mxu0 %v3502
      %3504 = vmatprep.subr.mxu0 0.0
      %v3505 = vand.u32 %v227, 4294901760
      %v3506 = vsub.f32 %v227, %v3505
      %v3507 = vand.u32 %v3506, 4294901760
      %v3508 = vsub.f32 %v3506, %v3507
      %v3509 = vand.u32 %v3508, 4294901760
      %3510 = vmatpush1.msra.mxu0 %v3509
      %3511 = vmatprep.subr.mxu0 0.0
      %v3512 = vand.u32 %v226, 4294901760
      %v3513 = vsub.f32 %v226, %v3512
      %v3514 = vand.u32 %v3513, 4294901760
      %v3515 = vsub.f32 %v3513, %v3514
      %v3516 = vand.u32 %v3515, 4294901760
      %3517 = vmatpush1.msra.mxu0 %v3516
      %3518 = vmatprep.subr.mxu0 0.0
      %v3519 = vand.u32 %v225, 4294901760
      %v3520 = vsub.f32 %v225, %v3519
      %v3521 = vand.u32 %v3520, 4294901760
      %v3522 = vsub.f32 %v3520, %v3521
      %v3523 = vand.u32 %v3522, 4294901760
      %3524 = vmatpush1.msra.mxu0 %v3523
      %3525 = vmatprep.subr.mxu0 0.0
      %v3526 = vand.u32 %v224, 4294901760
      %v3527 = vsub.f32 %v224, %v3526
      %v3528 = vand.u32 %v3527, 4294901760
      %v3529 = vsub.f32 %v3527, %v3528
      %v3530 = vand.u32 %v3529, 4294901760
      %3531 = vmatpush1.msra.mxu0 %v3530
      %3532 = vmatprep.subr.mxu0 0.0
      %v3533 = vand.u32 %v223, 4294901760
      %v3534 = vsub.f32 %v223, %v3533
      %v3535 = vand.u32 %v3534, 4294901760
      %v3536 = vsub.f32 %v3534, %v3535
      %v3537 = vand.u32 %v3536, 4294901760
      %3538 = vmatpush1.msra.mxu0 %v3537
      %3539 = vmatprep.subr.mxu0 0.0
      %v3540 = vand.u32 %v222, 4294901760
      %v3541 = vsub.f32 %v222, %v3540
      %v3542 = vand.u32 %v3541, 4294901760
      %v3543 = vsub.f32 %v3541, %v3542
      %v3544 = vand.u32 %v3543, 4294901760
      %3545 = vmatpush1.msra.mxu0 %v3544
      %3546 = vmatprep.subr.mxu0 0.0
      %v3547 = vand.u32 %v221, 4294901760
      %v3548 = vsub.f32 %v221, %v3547
      %v3549 = vand.u32 %v3548, 4294901760
      %v3550 = vsub.f32 %v3548, %v3549
      %v3551 = vand.u32 %v3550, 4294901760
      %3552 = vmatpush1.msra.mxu0 %v3551
      %3553 = vmatprep.subr.mxu0 0.0
      %v3554 = vand.u32 %v220, 4294901760
      %v3555 = vsub.f32 %v220, %v3554
      %v3556 = vand.u32 %v3555, 4294901760
      %v3557 = vsub.f32 %v3555, %v3556
      %v3558 = vand.u32 %v3557, 4294901760
      %3559 = vmatpush1.msra.mxu0 %v3558
      %3560 = vmatprep.subr.mxu0 0.0
      %v3561 = vand.u32 %v219, 4294901760
      %v3562 = vsub.f32 %v219, %v3561
      %v3563 = vand.u32 %v3562, 4294901760
      %v3564 = vsub.f32 %v3562, %v3563
      %v3565 = vand.u32 %v3564, 4294901760
      %3566 = vmatpush1.msra.mxu0 %v3565
      %3567 = vmatprep.subr.mxu0 0.0
      %v3568 = vand.u32 %v250, 4294901760
      %v3569 = vsub.f32 %v250, %v3568
      %v3570 = vand.u32 %v3569, 4294901760
      %v3571 = vsub.f32 %v3569, %v3570
      %v3572 = vand.u32 %v3571, 4294901760
      %3573 = vmatpush2.msra.mxu0 %v3572
      %3574 = vmatprep.subr.mxu0 0.0
      %v3575 = vand.u32 %v249, 4294901760
      %v3576 = vsub.f32 %v249, %v3575
      %v3577 = vand.u32 %v3576, 4294901760
      %v3578 = vsub.f32 %v3576, %v3577
      %v3579 = vand.u32 %v3578, 4294901760
      %3580 = vmatpush2.msra.mxu0 %v3579
      %3581 = vmatprep.subr.mxu0 0.0
      %v3582 = vand.u32 %v248, 4294901760
      %v3583 = vsub.f32 %v248, %v3582
      %v3584 = vand.u32 %v3583, 4294901760
      %v3585 = vsub.f32 %v3583, %v3584
      %v3586 = vand.u32 %v3585, 4294901760
      %3587 = vmatpush2.msra.mxu0 %v3586
      %3588 = vmatprep.subr.mxu0 0.0
      %v3589 = vand.u32 %v247, 4294901760
      %v3590 = vsub.f32 %v247, %v3589
      %v3591 = vand.u32 %v3590, 4294901760
      %v3592 = vsub.f32 %v3590, %v3591
      %v3593 = vand.u32 %v3592, 4294901760
      %3594 = vmatpush2.msra.mxu0 %v3593
      %3595 = vmatprep.subr.mxu0 0.0
      %v3596 = vand.u32 %v246, 4294901760
      %v3597 = vsub.f32 %v246, %v3596
      %v3598 = vand.u32 %v3597, 4294901760
      %v3599 = vsub.f32 %v3597, %v3598
      %v3600 = vand.u32 %v3599, 4294901760
      %3601 = vmatpush2.msra.mxu0 %v3600
      %3602 = vmatprep.subr.mxu0 0.0
      %v3603 = vand.u32 %v245, 4294901760
      %v3604 = vsub.f32 %v245, %v3603
      %v3605 = vand.u32 %v3604, 4294901760
      %v3606 = vsub.f32 %v3604, %v3605
      %v3607 = vand.u32 %v3606, 4294901760
      %3608 = vmatpush2.msra.mxu0 %v3607
      %3609 = vmatprep.subr.mxu0 0.0
      %v3610 = vand.u32 %v244, 4294901760
      %v3611 = vsub.f32 %v244, %v3610
      %v3612 = vand.u32 %v3611, 4294901760
      %v3613 = vsub.f32 %v3611, %v3612
      %v3614 = vand.u32 %v3613, 4294901760
      %3615 = vmatpush2.msra.mxu0 %v3614
      %3616 = vmatprep.subr.mxu0 0.0
      %v3617 = vand.u32 %v243, 4294901760
      %v3618 = vsub.f32 %v243, %v3617
      %v3619 = vand.u32 %v3618, 4294901760
      %v3620 = vsub.f32 %v3618, %v3619
      %v3621 = vand.u32 %v3620, 4294901760
      %3622 = vmatpush2.msra.mxu0 %v3621
      %3623 = vmatprep.subr.mxu0 0.0
      %v3624 = vand.u32 %v242, 4294901760
      %v3625 = vsub.f32 %v242, %v3624
      %v3626 = vand.u32 %v3625, 4294901760
      %v3627 = vsub.f32 %v3625, %v3626
      %v3628 = vand.u32 %v3627, 4294901760
      %3629 = vmatpush2.msra.mxu0 %v3628
      %3630 = vmatprep.subr.mxu0 0.0
      %v3631 = vand.u32 %v241, 4294901760
      %v3632 = vsub.f32 %v241, %v3631
      %v3633 = vand.u32 %v3632, 4294901760
      %v3634 = vsub.f32 %v3632, %v3633
      %v3635 = vand.u32 %v3634, 4294901760
      %3636 = vmatpush2.msra.mxu0 %v3635
      %3637 = vmatprep.subr.mxu0 0.0
      %v3638 = vand.u32 %v240, 4294901760
      %v3639 = vsub.f32 %v240, %v3638
      %v3640 = vand.u32 %v3639, 4294901760
      %v3641 = vsub.f32 %v3639, %v3640
      %v3642 = vand.u32 %v3641, 4294901760
      %3643 = vmatpush2.msra.mxu0 %v3642
      %3644 = vmatprep.subr.mxu0 0.0
      %v3645 = vand.u32 %v239, 4294901760
      %v3646 = vsub.f32 %v239, %v3645
      %v3647 = vand.u32 %v3646, 4294901760
      %v3648 = vsub.f32 %v3646, %v3647
      %v3649 = vand.u32 %v3648, 4294901760
      %3650 = vmatpush2.msra.mxu0 %v3649
      %3651 = vmatprep.subr.mxu0 0.0
      %v3652 = vand.u32 %v238, 4294901760
      %v3653 = vsub.f32 %v238, %v3652
      %v3654 = vand.u32 %v3653, 4294901760
      %v3655 = vsub.f32 %v3653, %v3654
      %v3656 = vand.u32 %v3655, 4294901760
      %3657 = vmatpush2.msra.mxu0 %v3656
      %3658 = vmatprep.subr.mxu0 0.0
      %v3659 = vand.u32 %v237, 4294901760
      %v3660 = vsub.f32 %v237, %v3659
      %v3661 = vand.u32 %v3660, 4294901760
      %v3662 = vsub.f32 %v3660, %v3661
      %v3663 = vand.u32 %v3662, 4294901760
      %3664 = vmatpush2.msra.mxu0 %v3663
      %3665 = vmatprep.subr.mxu0 0.0
      %v3666 = vand.u32 %v236, 4294901760
      %v3667 = vsub.f32 %v236, %v3666
      %v3668 = vand.u32 %v3667, 4294901760
      %v3669 = vsub.f32 %v3667, %v3668
      %v3670 = vand.u32 %v3669, 4294901760
      %3671 = vmatpush2.msra.mxu0 %v3670
      %3672 = vmatprep.subr.mxu0 0.0
      %v3673 = vand.u32 %v235, 4294901760
      %v3674 = vsub.f32 %v235, %v3673
      %v3675 = vand.u32 %v3674, 4294901760
      %v3676 = vsub.f32 %v3674, %v3675
      %v3677 = vand.u32 %v3676, 4294901760
      %3678 = vmatpush2.msra.mxu0 %v3677
      %v3679 = vand.u32 %v3287, 4294901760
      %3680 = vmatprep.mubr.f32.mxu0 %v3679
      %v3681 = vand.u32 %v3286, 4294901760
      %3682 = vmatmul.mubr.f32.gmra.mxu0 %v3681
      %v3683 = vpop.f32.mrf.mxu0
      %v3684 = vadd.f32 %v3407, %v3683
      %v3685 = vpop.f32.mrf.mxu0
      %v3686 = vand.u32 %v3290, 4294901760
      %3687 = vmatprep.mubr.f32.mxu0 %v3686
      %v3688 = vand.u32 %v3289, 4294901760
      %3689 = vmatmul.mubr.f32.gmra.mxu0 %v3688
      %v3690 = vpop.f32.mrf.mxu0
      %v3691 = vadd.f32 %v3422, %v3690
      %v3692 = vpop.f32.mrf.mxu0
      %v3693 = vand.u32 %v3293, 4294901760
      %3694 = vmatprep.mubr.f32.mxu0 %v3693
      %v3695 = vand.u32 %v3292, 4294901760
      %3696 = vmatmul.mubr.f32.gmra.mxu0 %v3695
      %v3697 = vpop.f32.mrf.mxu0
      %v3698 = vadd.f32 %v3437, %v3697
      %v3699 = vpop.f32.mrf.mxu0
      %v3700 = vand.u32 %v3296, 4294901760
      %3701 = vmatprep.mubr.f32.mxu0 %v3700
      %v3702 = vand.u32 %v3295, 4294901760
      %3703 = vmatmul.mubr.f32.gmra.mxu0 %v3702
      %v3704 = vpop.f32.mrf.mxu0
      %v3705 = vadd.f32 %v3452, %v3704
      %v3706 = vpop.f32.mrf.mxu0
      %3707 = vdwg.mxu0
      %3708 = vmatprep.subr.mxu0 0.0
      %v3709 = vand.u32 %v234, 4294901760
      %v3710 = vsub.f32 %v234, %v3709
      %3711 = vmatpush1.msra.mxu0 %v3710
      %3712 = vmatprep.subr.mxu0 0.0
      %v3713 = vand.u32 %v233, 4294901760
      %v3714 = vsub.f32 %v233, %v3713
      %3715 = vmatpush1.msra.mxu0 %v3714
      %3716 = vmatprep.subr.mxu0 0.0
      %v3717 = vand.u32 %v232, 4294901760
      %v3718 = vsub.f32 %v232, %v3717
      %3719 = vmatpush1.msra.mxu0 %v3718
      %3720 = vmatprep.subr.mxu0 0.0
      %v3721 = vand.u32 %v231, 4294901760
      %v3722 = vsub.f32 %v231, %v3721
      %3723 = vmatpush1.msra.mxu0 %v3722
      %3724 = vmatprep.subr.mxu0 0.0
      %v3725 = vand.u32 %v230, 4294901760
      %v3726 = vsub.f32 %v230, %v3725
      %3727 = vmatpush1.msra.mxu0 %v3726
      %3728 = vmatprep.subr.mxu0 0.0
      %v3729 = vand.u32 %v229, 4294901760
      %v3730 = vsub.f32 %v229, %v3729
      %3731 = vmatpush1.msra.mxu0 %v3730
      %3732 = vmatprep.subr.mxu0 0.0
      %v3733 = vand.u32 %v228, 4294901760
      %v3734 = vsub.f32 %v228, %v3733
      %3735 = vmatpush1.msra.mxu0 %v3734
      %3736 = vmatprep.subr.mxu0 0.0
      %v3737 = vand.u32 %v227, 4294901760
      %v3738 = vsub.f32 %v227, %v3737
      %3739 = vmatpush1.msra.mxu0 %v3738
      %3740 = vmatprep.subr.mxu0 0.0
      %v3741 = vand.u32 %v226, 4294901760
      %v3742 = vsub.f32 %v226, %v3741
      %3743 = vmatpush1.msra.mxu0 %v3742
      %3744 = vmatprep.subr.mxu0 0.0
      %v3745 = vand.u32 %v225, 4294901760
      %v3746 = vsub.f32 %v225, %v3745
      %3747 = vmatpush1.msra.mxu0 %v3746
      %3748 = vmatprep.subr.mxu0 0.0
      %v3749 = vand.u32 %v224, 4294901760
      %v3750 = vsub.f32 %v224, %v3749
      %3751 = vmatpush1.msra.mxu0 %v3750
      %3752 = vmatprep.subr.mxu0 0.0
      %v3753 = vand.u32 %v223, 4294901760
      %v3754 = vsub.f32 %v223, %v3753
      %3755 = vmatpush1.msra.mxu0 %v3754
      %3756 = vmatprep.subr.mxu0 0.0
      %v3757 = vand.u32 %v222, 4294901760
      %v3758 = vsub.f32 %v222, %v3757
      %3759 = vmatpush1.msra.mxu0 %v3758
      %3760 = vmatprep.subr.mxu0 0.0
      %v3761 = vand.u32 %v221, 4294901760
      %v3762 = vsub.f32 %v221, %v3761
      %3763 = vmatpush1.msra.mxu0 %v3762
      %3764 = vmatprep.subr.mxu0 0.0
      %v3765 = vand.u32 %v220, 4294901760
      %v3766 = vsub.f32 %v220, %v3765
      %3767 = vmatpush1.msra.mxu0 %v3766
      %3768 = vmatprep.subr.mxu0 0.0
      %v3769 = vand.u32 %v219, 4294901760
      %v3770 = vsub.f32 %v219, %v3769
      %3771 = vmatpush1.msra.mxu0 %v3770
      %3772 = vmatprep.subr.mxu0 0.0
      %v3773 = vand.u32 %v250, 4294901760
      %v3774 = vsub.f32 %v250, %v3773
      %3775 = vmatpush2.msra.mxu0 %v3774
      %3776 = vmatprep.subr.mxu0 0.0
      %v3777 = vand.u32 %v249, 4294901760
      %v3778 = vsub.f32 %v249, %v3777
      %3779 = vmatpush2.msra.mxu0 %v3778
      %3780 = vmatprep.subr.mxu0 0.0
      %v3781 = vand.u32 %v248, 4294901760
      %v3782 = vsub.f32 %v248, %v3781
      %3783 = vmatpush2.msra.mxu0 %v3782
      %3784 = vmatprep.subr.mxu0 0.0
      %v3785 = vand.u32 %v247, 4294901760
      %v3786 = vsub.f32 %v247, %v3785
      %3787 = vmatpush2.msra.mxu0 %v3786
      %3788 = vmatprep.subr.mxu0 0.0
      %v3789 = vand.u32 %v246, 4294901760
      %v3790 = vsub.f32 %v246, %v3789
      %3791 = vmatpush2.msra.mxu0 %v3790
      %3792 = vmatprep.subr.mxu0 0.0
      %v3793 = vand.u32 %v245, 4294901760
      %v3794 = vsub.f32 %v245, %v3793
      %3795 = vmatpush2.msra.mxu0 %v3794
      %3796 = vmatprep.subr.mxu0 0.0
      %v3797 = vand.u32 %v244, 4294901760
      %v3798 = vsub.f32 %v244, %v3797
      %3799 = vmatpush2.msra.mxu0 %v3798
      %3800 = vmatprep.subr.mxu0 0.0
      %v3801 = vand.u32 %v243, 4294901760
      %v3802 = vsub.f32 %v243, %v3801
      %3803 = vmatpush2.msra.mxu0 %v3802
      %3804 = vmatprep.subr.mxu0 0.0
      %v3805 = vand.u32 %v242, 4294901760
      %v3806 = vsub.f32 %v242, %v3805
      %3807 = vmatpush2.msra.mxu0 %v3806
      %3808 = vmatprep.subr.mxu0 0.0
      %v3809 = vand.u32 %v241, 4294901760
      %v3810 = vsub.f32 %v241, %v3809
      %3811 = vmatpush2.msra.mxu0 %v3810
      %3812 = vmatprep.subr.mxu0 0.0
      %v3813 = vand.u32 %v240, 4294901760
      %v3814 = vsub.f32 %v240, %v3813
      %3815 = vmatpush2.msra.mxu0 %v3814
      %3816 = vmatprep.subr.mxu0 0.0
      %v3817 = vand.u32 %v239, 4294901760
      %v3818 = vsub.f32 %v239, %v3817
      %3819 = vmatpush2.msra.mxu0 %v3818
      %3820 = vmatprep.subr.mxu0 0.0
      %v3821 = vand.u32 %v238, 4294901760
      %v3822 = vsub.f32 %v238, %v3821
      %3823 = vmatpush2.msra.mxu0 %v3822
      %3824 = vmatprep.subr.mxu0 0.0
      %v3825 = vand.u32 %v237, 4294901760
      %v3826 = vsub.f32 %v237, %v3825
      %3827 = vmatpush2.msra.mxu0 %v3826
      %3828 = vmatprep.subr.mxu0 0.0
      %v3829 = vand.u32 %v236, 4294901760
      %v3830 = vsub.f32 %v236, %v3829
      %3831 = vmatpush2.msra.mxu0 %v3830
      %3832 = vmatprep.subr.mxu0 0.0
      %v3833 = vand.u32 %v235, 4294901760
      %v3834 = vsub.f32 %v235, %v3833
      %3835 = vmatpush2.msra.mxu0 %v3834
      %v3836 = vand.u32 %v3287, 4294901760
      %v3837 = vsub.f32 %v3287, %v3836
      %3838 = vmatprep.mubr.f32.mxu0 %v3837
      %v3839 = vand.u32 %v3286, 4294901760
      %v3840 = vsub.f32 %v3286, %v3839
      %3841 = vmatmul.mubr.f32.gmra.mxu0 %v3840
      %v3842 = vpop.f32.mrf.mxu0
      %v3843 = vadd.f32 %v3684, %v3842
      %v3844 = vpop.f32.mrf.mxu0
      %v3845 = vand.u32 %v3290, 4294901760
      %v3846 = vsub.f32 %v3290, %v3845
      %3847 = vmatprep.mubr.f32.mxu0 %v3846
      %v3848 = vand.u32 %v3289, 4294901760
      %v3849 = vsub.f32 %v3289, %v3848
      %3850 = vmatmul.mubr.f32.gmra.mxu0 %v3849
      %v3851 = vpop.f32.mrf.mxu0
      %v3852 = vadd.f32 %v3691, %v3851
      %v3853 = vpop.f32.mrf.mxu0
      %v3854 = vand.u32 %v3293, 4294901760
      %v3855 = vsub.f32 %v3293, %v3854
      %3856 = vmatprep.mubr.f32.mxu0 %v3855
      %v3857 = vand.u32 %v3292, 4294901760
      %v3858 = vsub.f32 %v3292, %v3857
      %3859 = vmatmul.mubr.f32.gmra.mxu0 %v3858
      %v3860 = vpop.f32.mrf.mxu0
      %v3861 = vadd.f32 %v3698, %v3860
      %v3862 = vpop.f32.mrf.mxu0
      %v3863 = vand.u32 %v3296, 4294901760
      %v3864 = vsub.f32 %v3296, %v3863
      %3865 = vmatprep.mubr.f32.mxu0 %v3864
      %v3866 = vand.u32 %v3295, 4294901760
      %v3867 = vsub.f32 %v3295, %v3866
      %3868 = vmatmul.mubr.f32.gmra.mxu0 %v3867
      %v3869 = vpop.f32.mrf.mxu0
      %v3870 = vadd.f32 %v3705, %v3869
      %v3871 = vpop.f32.mrf.mxu0
      %3872 = vdwg.mxu0
      %3873 = vmatprep.subr.mxu0 0.0
      %v3874 = vand.u32 %v234, 4294901760
      %3875 = vmatpush1.msra.mxu0 %v3874
      %3876 = vmatprep.subr.mxu0 0.0
      %v3877 = vand.u32 %v233, 4294901760
      %3878 = vmatpush1.msra.mxu0 %v3877
      %3879 = vmatprep.subr.mxu0 0.0
      %v3880 = vand.u32 %v232, 4294901760
      %3881 = vmatpush1.msra.mxu0 %v3880
      %3882 = vmatprep.subr.mxu0 0.0
      %v3883 = vand.u32 %v231, 4294901760
      %3884 = vmatpush1.msra.mxu0 %v3883
      %3885 = vmatprep.subr.mxu0 0.0
      %v3886 = vand.u32 %v230, 4294901760
      %3887 = vmatpush1.msra.mxu0 %v3886
      %3888 = vmatprep.subr.mxu0 0.0
      %v3889 = vand.u32 %v229, 4294901760
      %3890 = vmatpush1.msra.mxu0 %v3889
      %3891 = vmatprep.subr.mxu0 0.0
      %v3892 = vand.u32 %v228, 4294901760
      %3893 = vmatpush1.msra.mxu0 %v3892
      %3894 = vmatprep.subr.mxu0 0.0
      %v3895 = vand.u32 %v227, 4294901760
      %3896 = vmatpush1.msra.mxu0 %v3895
      %3897 = vmatprep.subr.mxu0 0.0
      %v3898 = vand.u32 %v226, 4294901760
      %3899 = vmatpush1.msra.mxu0 %v3898
      %3900 = vmatprep.subr.mxu0 0.0
      %v3901 = vand.u32 %v225, 4294901760
      %3902 = vmatpush1.msra.mxu0 %v3901
      %3903 = vmatprep.subr.mxu0 0.0
      %v3904 = vand.u32 %v224, 4294901760
      %3905 = vmatpush1.msra.mxu0 %v3904
      %3906 = vmatprep.subr.mxu0 0.0
      %v3907 = vand.u32 %v223, 4294901760
      %3908 = vmatpush1.msra.mxu0 %v3907
      %3909 = vmatprep.subr.mxu0 0.0
      %v3910 = vand.u32 %v222, 4294901760
      %3911 = vmatpush1.msra.mxu0 %v3910
      %3912 = vmatprep.subr.mxu0 0.0
      %v3913 = vand.u32 %v221, 4294901760
      %3914 = vmatpush1.msra.mxu0 %v3913
      %3915 = vmatprep.subr.mxu0 0.0
      %v3916 = vand.u32 %v220, 4294901760
      %3917 = vmatpush1.msra.mxu0 %v3916
      %3918 = vmatprep.subr.mxu0 0.0
      %v3919 = vand.u32 %v219, 4294901760
      %3920 = vmatpush1.msra.mxu0 %v3919
      %3921 = vmatprep.subr.mxu0 0.0
      %v3922 = vand.u32 %v250, 4294901760
      %3923 = vmatpush2.msra.mxu0 %v3922
      %3924 = vmatprep.subr.mxu0 0.0
      %v3925 = vand.u32 %v249, 4294901760
      %3926 = vmatpush2.msra.mxu0 %v3925
      %3927 = vmatprep.subr.mxu0 0.0
      %v3928 = vand.u32 %v248, 4294901760
      %3929 = vmatpush2.msra.mxu0 %v3928
      %3930 = vmatprep.subr.mxu0 0.0
      %v3931 = vand.u32 %v247, 4294901760
      %3932 = vmatpush2.msra.mxu0 %v3931
      %3933 = vmatprep.subr.mxu0 0.0
      %v3934 = vand.u32 %v246, 4294901760
      %3935 = vmatpush2.msra.mxu0 %v3934
      %3936 = vmatprep.subr.mxu0 0.0
      %v3937 = vand.u32 %v245, 4294901760
      %3938 = vmatpush2.msra.mxu0 %v3937
      %3939 = vmatprep.subr.mxu0 0.0
      %v3940 = vand.u32 %v244, 4294901760
      %3941 = vmatpush2.msra.mxu0 %v3940
      %3942 = vmatprep.subr.mxu0 0.0
      %v3943 = vand.u32 %v243, 4294901760
      %3944 = vmatpush2.msra.mxu0 %v3943
      %3945 = vmatprep.subr.mxu0 0.0
      %v3946 = vand.u32 %v242, 4294901760
      %3947 = vmatpush2.msra.mxu0 %v3946
      %3948 = vmatprep.subr.mxu0 0.0
      %v3949 = vand.u32 %v241, 4294901760
      %3950 = vmatpush2.msra.mxu0 %v3949
      %3951 = vmatprep.subr.mxu0 0.0
      %v3952 = vand.u32 %v240, 4294901760
      %3953 = vmatpush2.msra.mxu0 %v3952
      %3954 = vmatprep.subr.mxu0 0.0
      %v3955 = vand.u32 %v239, 4294901760
      %3956 = vmatpush2.msra.mxu0 %v3955
      %3957 = vmatprep.subr.mxu0 0.0
      %v3958 = vand.u32 %v238, 4294901760
      %3959 = vmatpush2.msra.mxu0 %v3958
      %3960 = vmatprep.subr.mxu0 0.0
      %v3961 = vand.u32 %v237, 4294901760
      %3962 = vmatpush2.msra.mxu0 %v3961
      %3963 = vmatprep.subr.mxu0 0.0
      %v3964 = vand.u32 %v236, 4294901760
      %3965 = vmatpush2.msra.mxu0 %v3964
      %3966 = vmatprep.subr.mxu0 0.0
      %v3967 = vand.u32 %v235, 4294901760
      %3968 = vmatpush2.msra.mxu0 %v3967
      %v3969 = vand.u32 %v3287, 4294901760
      %v3970 = vsub.f32 %v3287, %v3969
      %v3971 = vand.u32 %v3970, 4294901760
      %3972 = vmatprep.mubr.f32.mxu0 %v3971
      %v3973 = vand.u32 %v3286, 4294901760
      %v3974 = vsub.f32 %v3286, %v3973
      %v3975 = vand.u32 %v3974, 4294901760
      %3976 = vmatmul.mubr.f32.gmra.mxu0 %v3975
      %v3977 = vpop.f32.mrf.mxu0
      %v3978 = vadd.f32 %v3843, %v3977
      %v3979 = vpop.f32.mrf.mxu0
      %v3980 = vand.u32 %v3290, 4294901760
      %v3981 = vsub.f32 %v3290, %v3980
      %v3982 = vand.u32 %v3981, 4294901760
      %3983 = vmatprep.mubr.f32.mxu0 %v3982
      %v3984 = vand.u32 %v3289, 4294901760
      %v3985 = vsub.f32 %v3289, %v3984
      %v3986 = vand.u32 %v3985, 4294901760
      %3987 = vmatmul.mubr.f32.gmra.mxu0 %v3986
      %v3988 = vpop.f32.mrf.mxu0
      %v3989 = vadd.f32 %v3852, %v3988
      %v3990 = vpop.f32.mrf.mxu0
      %v3991 = vand.u32 %v3293, 4294901760
      %v3992 = vsub.f32 %v3293, %v3991
      %v3993 = vand.u32 %v3992, 4294901760
      %3994 = vmatprep.mubr.f32.mxu0 %v3993
      %v3995 = vand.u32 %v3292, 4294901760
      %v3996 = vsub.f32 %v3292, %v3995
      %v3997 = vand.u32 %v3996, 4294901760
      %3998 = vmatmul.mubr.f32.gmra.mxu0 %v3997
      %v3999 = vpop.f32.mrf.mxu0
      %v4000 = vadd.f32 %v3861, %v3999
      %v4001 = vpop.f32.mrf.mxu0
      %v4002 = vand.u32 %v3296, 4294901760
      %v4003 = vsub.f32 %v3296, %v4002
      %v4004 = vand.u32 %v4003, 4294901760
      %4005 = vmatprep.mubr.f32.mxu0 %v4004
      %v4006 = vand.u32 %v3295, 4294901760
      %v4007 = vsub.f32 %v3295, %v4006
      %v4008 = vand.u32 %v4007, 4294901760
      %4009 = vmatmul.mubr.f32.gmra.mxu0 %v4008
      %v4010 = vpop.f32.mrf.mxu0
      %v4011 = vadd.f32 %v3870, %v4010
      %v4012 = vpop.f32.mrf.mxu0
      %4013 = vdwg.mxu0
      %4014 = vmatprep.subr.mxu0 0.0
      %v4015 = vand.u32 %v234, 4294901760
      %v4016 = vsub.f32 %v234, %v4015
      %v4017 = vand.u32 %v4016, 4294901760
      %4018 = vmatpush1.msra.mxu0 %v4017
      %4019 = vmatprep.subr.mxu0 0.0
      %v4020 = vand.u32 %v233, 4294901760
      %v4021 = vsub.f32 %v233, %v4020
      %v4022 = vand.u32 %v4021, 4294901760
      %4023 = vmatpush1.msra.mxu0 %v4022
      %4024 = vmatprep.subr.mxu0 0.0
      %v4025 = vand.u32 %v232, 4294901760
      %v4026 = vsub.f32 %v232, %v4025
      %v4027 = vand.u32 %v4026, 4294901760
      %4028 = vmatpush1.msra.mxu0 %v4027
      %4029 = vmatprep.subr.mxu0 0.0
      %v4030 = vand.u32 %v231, 4294901760
      %v4031 = vsub.f32 %v231, %v4030
      %v4032 = vand.u32 %v4031, 4294901760
      %4033 = vmatpush1.msra.mxu0 %v4032
      %4034 = vmatprep.subr.mxu0 0.0
      %v4035 = vand.u32 %v230, 4294901760
      %v4036 = vsub.f32 %v230, %v4035
      %v4037 = vand.u32 %v4036, 4294901760
      %4038 = vmatpush1.msra.mxu0 %v4037
      %4039 = vmatprep.subr.mxu0 0.0
      %v4040 = vand.u32 %v229, 4294901760
      %v4041 = vsub.f32 %v229, %v4040
      %v4042 = vand.u32 %v4041, 4294901760
      %4043 = vmatpush1.msra.mxu0 %v4042
      %4044 = vmatprep.subr.mxu0 0.0
      %v4045 = vand.u32 %v228, 4294901760
      %v4046 = vsub.f32 %v228, %v4045
      %v4047 = vand.u32 %v4046, 4294901760
      %4048 = vmatpush1.msra.mxu0 %v4047
      %4049 = vmatprep.subr.mxu0 0.0
      %v4050 = vand.u32 %v227, 4294901760
      %v4051 = vsub.f32 %v227, %v4050
      %v4052 = vand.u32 %v4051, 4294901760
      %4053 = vmatpush1.msra.mxu0 %v4052
      %4054 = vmatprep.subr.mxu0 0.0
      %v4055 = vand.u32 %v226, 4294901760
      %v4056 = vsub.f32 %v226, %v4055
      %v4057 = vand.u32 %v4056, 4294901760
      %4058 = vmatpush1.msra.mxu0 %v4057
      %4059 = vmatprep.subr.mxu0 0.0
      %v4060 = vand.u32 %v225, 4294901760
      %v4061 = vsub.f32 %v225, %v4060
      %v4062 = vand.u32 %v4061, 4294901760
      %4063 = vmatpush1.msra.mxu0 %v4062
      %4064 = vmatprep.subr.mxu0 0.0
      %v4065 = vand.u32 %v224, 4294901760
      %v4066 = vsub.f32 %v224, %v4065
      %v4067 = vand.u32 %v4066, 4294901760
      %4068 = vmatpush1.msra.mxu0 %v4067
      %4069 = vmatprep.subr.mxu0 0.0
      %v4070 = vand.u32 %v223, 4294901760
      %v4071 = vsub.f32 %v223, %v4070
      %v4072 = vand.u32 %v4071, 4294901760
      %4073 = vmatpush1.msra.mxu0 %v4072
      %4074 = vmatprep.subr.mxu0 0.0
      %v4075 = vand.u32 %v222, 4294901760
      %v4076 = vsub.f32 %v222, %v4075
      %v4077 = vand.u32 %v4076, 4294901760
      %4078 = vmatpush1.msra.mxu0 %v4077
      %4079 = vmatprep.subr.mxu0 0.0
      %v4080 = vand.u32 %v221, 4294901760
      %v4081 = vsub.f32 %v221, %v4080
      %v4082 = vand.u32 %v4081, 4294901760
      %4083 = vmatpush1.msra.mxu0 %v4082
      %4084 = vmatprep.subr.mxu0 0.0
      %v4085 = vand.u32 %v220, 4294901760
      %v4086 = vsub.f32 %v220, %v4085
      %v4087 = vand.u32 %v4086, 4294901760
      %4088 = vmatpush1.msra.mxu0 %v4087
      %4089 = vmatprep.subr.mxu0 0.0
      %v4090 = vand.u32 %v219, 4294901760
      %v4091 = vsub.f32 %v219, %v4090
      %v4092 = vand.u32 %v4091, 4294901760
      %4093 = vmatpush1.msra.mxu0 %v4092
      %4094 = vmatprep.subr.mxu0 0.0
      %v4095 = vand.u32 %v250, 4294901760
      %v4096 = vsub.f32 %v250, %v4095
      %v4097 = vand.u32 %v4096, 4294901760
      %4098 = vmatpush2.msra.mxu0 %v4097
      %4099 = vmatprep.subr.mxu0 0.0
      %v4100 = vand.u32 %v249, 4294901760
      %v4101 = vsub.f32 %v249, %v4100
      %v4102 = vand.u32 %v4101, 4294901760
      %4103 = vmatpush2.msra.mxu0 %v4102
      %4104 = vmatprep.subr.mxu0 0.0
      %v4105 = vand.u32 %v248, 4294901760
      %v4106 = vsub.f32 %v248, %v4105
      %v4107 = vand.u32 %v4106, 4294901760
      %4108 = vmatpush2.msra.mxu0 %v4107
      %4109 = vmatprep.subr.mxu0 0.0
      %v4110 = vand.u32 %v247, 4294901760
      %v4111 = vsub.f32 %v247, %v4110
      %v4112 = vand.u32 %v4111, 4294901760
      %4113 = vmatpush2.msra.mxu0 %v4112
      %4114 = vmatprep.subr.mxu0 0.0
      %v4115 = vand.u32 %v246, 4294901760
      %v4116 = vsub.f32 %v246, %v4115
      %v4117 = vand.u32 %v4116, 4294901760
      %4118 = vmatpush2.msra.mxu0 %v4117
      %4119 = vmatprep.subr.mxu0 0.0
      %v4120 = vand.u32 %v245, 4294901760
      %v4121 = vsub.f32 %v245, %v4120
      %v4122 = vand.u32 %v4121, 4294901760
      %4123 = vmatpush2.msra.mxu0 %v4122
      %4124 = vmatprep.subr.mxu0 0.0
      %v4125 = vand.u32 %v244, 4294901760
      %v4126 = vsub.f32 %v244, %v4125
      %v4127 = vand.u32 %v4126, 4294901760
      %4128 = vmatpush2.msra.mxu0 %v4127
      %4129 = vmatprep.subr.mxu0 0.0
      %v4130 = vand.u32 %v243, 4294901760
      %v4131 = vsub.f32 %v243, %v4130
      %v4132 = vand.u32 %v4131, 4294901760
      %4133 = vmatpush2.msra.mxu0 %v4132
      %4134 = vmatprep.subr.mxu0 0.0
      %v4135 = vand.u32 %v242, 4294901760
      %v4136 = vsub.f32 %v242, %v4135
      %v4137 = vand.u32 %v4136, 4294901760
      %4138 = vmatpush2.msra.mxu0 %v4137
      %4139 = vmatprep.subr.mxu0 0.0
      %v4140 = vand.u32 %v241, 4294901760
      %v4141 = vsub.f32 %v241, %v4140
      %v4142 = vand.u32 %v4141, 4294901760
      %4143 = vmatpush2.msra.mxu0 %v4142
      %4144 = vmatprep.subr.mxu0 0.0
      %v4145 = vand.u32 %v240, 4294901760
      %v4146 = vsub.f32 %v240, %v4145
      %v4147 = vand.u32 %v4146, 4294901760
      %4148 = vmatpush2.msra.mxu0 %v4147
      %4149 = vmatprep.subr.mxu0 0.0
      %v4150 = vand.u32 %v239, 4294901760
      %v4151 = vsub.f32 %v239, %v4150
      %v4152 = vand.u32 %v4151, 4294901760
      %4153 = vmatpush2.msra.mxu0 %v4152
      %4154 = vmatprep.subr.mxu0 0.0
      %v4155 = vand.u32 %v238, 4294901760
      %v4156 = vsub.f32 %v238, %v4155
      %v4157 = vand.u32 %v4156, 4294901760
      %4158 = vmatpush2.msra.mxu0 %v4157
      %4159 = vmatprep.subr.mxu0 0.0
      %v4160 = vand.u32 %v237, 4294901760
      %v4161 = vsub.f32 %v237, %v4160
      %v4162 = vand.u32 %v4161, 4294901760
      %4163 = vmatpush2.msra.mxu0 %v4162
      %4164 = vmatprep.subr.mxu0 0.0
      %v4165 = vand.u32 %v236, 4294901760
      %v4166 = vsub.f32 %v236, %v4165
      %v4167 = vand.u32 %v4166, 4294901760
      %4168 = vmatpush2.msra.mxu0 %v4167
      %4169 = vmatprep.subr.mxu0 0.0
      %v4170 = vand.u32 %v235, 4294901760
      %v4171 = vsub.f32 %v235, %v4170
      %v4172 = vand.u32 %v4171, 4294901760
      %4173 = vmatpush2.msra.mxu0 %v4172
      %v4174 = vand.u32 %v3287, 4294901760
      %4175 = vmatprep.mubr.f32.mxu0 %v4174
      %v4176 = vand.u32 %v3286, 4294901760
      %4177 = vmatmul.mubr.f32.gmra.mxu0 %v4176
      %v4178 = vpop.f32.mrf.mxu0
      %v4179 = vadd.f32 %v3978, %v4178
      %v4180 = vpop.f32.mrf.mxu0
      %v4181 = vand.u32 %v3290, 4294901760
      %4182 = vmatprep.mubr.f32.mxu0 %v4181
      %v4183 = vand.u32 %v3289, 4294901760
      %4184 = vmatmul.mubr.f32.gmra.mxu0 %v4183
      %v4185 = vpop.f32.mrf.mxu0
      %v4186 = vadd.f32 %v3989, %v4185
      %v4187 = vpop.f32.mrf.mxu0
      %v4188 = vand.u32 %v3293, 4294901760
      %4189 = vmatprep.mubr.f32.mxu0 %v4188
      %v4190 = vand.u32 %v3292, 4294901760
      %4191 = vmatmul.mubr.f32.gmra.mxu0 %v4190
      %v4192 = vpop.f32.mrf.mxu0
      %v4193 = vadd.f32 %v4000, %v4192
      %v4194 = vpop.f32.mrf.mxu0
      %v4195 = vand.u32 %v3296, 4294901760
      %4196 = vmatprep.mubr.f32.mxu0 %v4195
      %v4197 = vand.u32 %v3295, 4294901760
      %4198 = vmatmul.mubr.f32.gmra.mxu0 %v4197
      %v4199 = vpop.f32.mrf.mxu0
      %v4200 = vadd.f32 %v4011, %v4199
      %v4201 = vpop.f32.mrf.mxu0
      %4202 = vdwg.mxu0
      %4203 = vmatprep.subr.mxu0 0.0
      %v4204 = vand.u32 %v234, 4294901760
      %4205 = vmatpush1.msra.mxu0 %v4204
      %4206 = vmatprep.subr.mxu0 0.0
      %v4207 = vand.u32 %v233, 4294901760
      %4208 = vmatpush1.msra.mxu0 %v4207
      %4209 = vmatprep.subr.mxu0 0.0
      %v4210 = vand.u32 %v232, 4294901760
      %4211 = vmatpush1.msra.mxu0 %v4210
      %4212 = vmatprep.subr.mxu0 0.0
      %v4213 = vand.u32 %v231, 4294901760
      %4214 = vmatpush1.msra.mxu0 %v4213
      %4215 = vmatprep.subr.mxu0 0.0
      %v4216 = vand.u32 %v230, 4294901760
      %4217 = vmatpush1.msra.mxu0 %v4216
      %4218 = vmatprep.subr.mxu0 0.0
      %v4219 = vand.u32 %v229, 4294901760
      %4220 = vmatpush1.msra.mxu0 %v4219
      %4221 = vmatprep.subr.mxu0 0.0
      %v4222 = vand.u32 %v228, 4294901760
      %4223 = vmatpush1.msra.mxu0 %v4222
      %4224 = vmatprep.subr.mxu0 0.0
      %v4225 = vand.u32 %v227, 4294901760
      %4226 = vmatpush1.msra.mxu0 %v4225
      %4227 = vmatprep.subr.mxu0 0.0
      %v4228 = vand.u32 %v226, 4294901760
      %4229 = vmatpush1.msra.mxu0 %v4228
      %4230 = vmatprep.subr.mxu0 0.0
      %v4231 = vand.u32 %v225, 4294901760
      %4232 = vmatpush1.msra.mxu0 %v4231
      %4233 = vmatprep.subr.mxu0 0.0
      %v4234 = vand.u32 %v224, 4294901760
      %4235 = vmatpush1.msra.mxu0 %v4234
      %4236 = vmatprep.subr.mxu0 0.0
      %v4237 = vand.u32 %v223, 4294901760
      %4238 = vmatpush1.msra.mxu0 %v4237
      %4239 = vmatprep.subr.mxu0 0.0
      %v4240 = vand.u32 %v222, 4294901760
      %4241 = vmatpush1.msra.mxu0 %v4240
      %4242 = vmatprep.subr.mxu0 0.0
      %v4243 = vand.u32 %v221, 4294901760
      %4244 = vmatpush1.msra.mxu0 %v4243
      %4245 = vmatprep.subr.mxu0 0.0
      %v4246 = vand.u32 %v220, 4294901760
      %4247 = vmatpush1.msra.mxu0 %v4246
      %4248 = vmatprep.subr.mxu0 0.0
      %v4249 = vand.u32 %v219, 4294901760
      %4250 = vmatpush1.msra.mxu0 %v4249
      %4251 = vmatprep.subr.mxu0 0.0
      %v4252 = vand.u32 %v250, 4294901760
      %4253 = vmatpush2.msra.mxu0 %v4252
      %4254 = vmatprep.subr.mxu0 0.0
      %v4255 = vand.u32 %v249, 4294901760
      %4256 = vmatpush2.msra.mxu0 %v4255
      %4257 = vmatprep.subr.mxu0 0.0
      %v4258 = vand.u32 %v248, 4294901760
      %4259 = vmatpush2.msra.mxu0 %v4258
      %4260 = vmatprep.subr.mxu0 0.0
      %v4261 = vand.u32 %v247, 4294901760
      %4262 = vmatpush2.msra.mxu0 %v4261
      %4263 = vmatprep.subr.mxu0 0.0
      %v4264 = vand.u32 %v246, 4294901760
      %4265 = vmatpush2.msra.mxu0 %v4264
      %4266 = vmatprep.subr.mxu0 0.0
      %v4267 = vand.u32 %v245, 4294901760
      %4268 = vmatpush2.msra.mxu0 %v4267
      %4269 = vmatprep.subr.mxu0 0.0
      %v4270 = vand.u32 %v244, 4294901760
      %4271 = vmatpush2.msra.mxu0 %v4270
      %4272 = vmatprep.subr.mxu0 0.0
      %v4273 = vand.u32 %v243, 4294901760
      %4274 = vmatpush2.msra.mxu0 %v4273
      %4275 = vmatprep.subr.mxu0 0.0
      %v4276 = vand.u32 %v242, 4294901760
      %4277 = vmatpush2.msra.mxu0 %v4276
      %4278 = vmatprep.subr.mxu0 0.0
      %v4279 = vand.u32 %v241, 4294901760
      %4280 = vmatpush2.msra.mxu0 %v4279
      %4281 = vmatprep.subr.mxu0 0.0
      %v4282 = vand.u32 %v240, 4294901760
      %4283 = vmatpush2.msra.mxu0 %v4282
      %4284 = vmatprep.subr.mxu0 0.0
      %v4285 = vand.u32 %v239, 4294901760
      %4286 = vmatpush2.msra.mxu0 %v4285
      %4287 = vmatprep.subr.mxu0 0.0
      %v4288 = vand.u32 %v238, 4294901760
      %4289 = vmatpush2.msra.mxu0 %v4288
      %4290 = vmatprep.subr.mxu0 0.0
      %v4291 = vand.u32 %v237, 4294901760
      %4292 = vmatpush2.msra.mxu0 %v4291
      %4293 = vmatprep.subr.mxu0 0.0
      %v4294 = vand.u32 %v236, 4294901760
      %4295 = vmatpush2.msra.mxu0 %v4294
      %4296 = vmatprep.subr.mxu0 0.0
      %v4297 = vand.u32 %v235, 4294901760
      %4298 = vmatpush2.msra.mxu0 %v4297
      %v4299 = vand.u32 %v3287, 4294901760
      %4300 = vmatprep.mubr.f32.mxu0 %v4299
      %v4301 = vand.u32 %v3286, 4294901760
      %4302 = vmatmul.mubr.f32.gmra.mxu0 %v4301
      %v4303 = vpop.f32.mrf.mxu0
      %v4304 = vadd.f32 %v4179, %v4303
      %v4305 = vpop.f32.mrf.mxu0
      %v4306 = vand.u32 %v3290, 4294901760
      %4307 = vmatprep.mubr.f32.mxu0 %v4306
      %v4308 = vand.u32 %v3289, 4294901760
      %4309 = vmatmul.mubr.f32.gmra.mxu0 %v4308
      %v4310 = vpop.f32.mrf.mxu0
      %v4311 = vadd.f32 %v4186, %v4310
      %v4312 = vpop.f32.mrf.mxu0
      %v4313 = vand.u32 %v3293, 4294901760
      %4314 = vmatprep.mubr.f32.mxu0 %v4313
      %v4315 = vand.u32 %v3292, 4294901760
      %4316 = vmatmul.mubr.f32.gmra.mxu0 %v4315
      %v4317 = vpop.f32.mrf.mxu0
      %v4318 = vadd.f32 %v4193, %v4317
      %v4319 = vpop.f32.mrf.mxu0
      %v4320 = vand.u32 %v3296, 4294901760
      %4321 = vmatprep.mubr.f32.mxu0 %v4320
      %v4322 = vand.u32 %v3295, 4294901760
      %4323 = vmatmul.mubr.f32.gmra.mxu0 %v4322
      %v4324 = vpop.f32.mrf.mxu0
      %v4325 = vadd.f32 %v4200, %v4324
      %v4326 = vpop.f32.mrf.mxu0
      %4327 = vdwg.mxu0
      %4328 = vmatprep.subr.mxu0 0.0
      %v4329 = vand.u32 %v266, 4294901760
      %4330 = vmatpush1.msra.mxu0 %v4329
      %4331 = vmatprep.subr.mxu0 0.0
      %v4332 = vand.u32 %v265, 4294901760
      %4333 = vmatpush1.msra.mxu0 %v4332
      %4334 = vmatprep.subr.mxu0 0.0
      %v4335 = vand.u32 %v264, 4294901760
      %4336 = vmatpush1.msra.mxu0 %v4335
      %4337 = vmatprep.subr.mxu0 0.0
      %v4338 = vand.u32 %v263, 4294901760
      %4339 = vmatpush1.msra.mxu0 %v4338
      %4340 = vmatprep.subr.mxu0 0.0
      %v4341 = vand.u32 %v262, 4294901760
      %4342 = vmatpush1.msra.mxu0 %v4341
      %4343 = vmatprep.subr.mxu0 0.0
      %v4344 = vand.u32 %v261, 4294901760
      %4345 = vmatpush1.msra.mxu0 %v4344
      %4346 = vmatprep.subr.mxu0 0.0
      %v4347 = vand.u32 %v260, 4294901760
      %4348 = vmatpush1.msra.mxu0 %v4347
      %4349 = vmatprep.subr.mxu0 0.0
      %v4350 = vand.u32 %v259, 4294901760
      %4351 = vmatpush1.msra.mxu0 %v4350
      %4352 = vmatprep.subr.mxu0 0.0
      %v4353 = vand.u32 %v258, 4294901760
      %4354 = vmatpush1.msra.mxu0 %v4353
      %4355 = vmatprep.subr.mxu0 0.0
      %v4356 = vand.u32 %v257, 4294901760
      %4357 = vmatpush1.msra.mxu0 %v4356
      %4358 = vmatprep.subr.mxu0 0.0
      %v4359 = vand.u32 %v256, 4294901760
      %4360 = vmatpush1.msra.mxu0 %v4359
      %4361 = vmatprep.subr.mxu0 0.0
      %v4362 = vand.u32 %v255, 4294901760
      %4363 = vmatpush1.msra.mxu0 %v4362
      %4364 = vmatprep.subr.mxu0 0.0
      %v4365 = vand.u32 %v254, 4294901760
      %4366 = vmatpush1.msra.mxu0 %v4365
      %4367 = vmatprep.subr.mxu0 0.0
      %v4368 = vand.u32 %v253, 4294901760
      %4369 = vmatpush1.msra.mxu0 %v4368
      %4370 = vmatprep.subr.mxu0 0.0
      %v4371 = vand.u32 %v252, 4294901760
      %4372 = vmatpush1.msra.mxu0 %v4371
      %4373 = vmatprep.subr.mxu0 0.0
      %v4374 = vand.u32 %v251, 4294901760
      %4375 = vmatpush1.msra.mxu0 %v4374
      %4376 = vmatprep.subr.mxu0 0.0
      %4377 = vmatpush2.msra.mxu0 0.0
      %4378 = vmatprep.subr.mxu0 0.0
      %4379 = vmatpush2.msra.mxu0 0.0
      %4380 = vmatprep.subr.mxu0 0.0
      %4381 = vmatpush2.msra.mxu0 0.0
      %4382 = vmatprep.subr.mxu0 0.0
      %4383 = vmatpush2.msra.mxu0 0.0
      %4384 = vmatprep.subr.mxu0 0.0
      %4385 = vmatpush2.msra.mxu0 0.0
      %4386 = vmatprep.subr.mxu0 0.0
      %4387 = vmatpush2.msra.mxu0 0.0
      %4388 = vmatprep.subr.mxu0 0.0
      %4389 = vmatpush2.msra.mxu0 0.0
      %4390 = vmatprep.subr.mxu0 0.0
      %4391 = vmatpush2.msra.mxu0 0.0
      %4392 = vmatprep.subr.mxu0 0.0
      %4393 = vmatpush2.msra.mxu0 0.0
      %4394 = vmatprep.subr.mxu0 0.0
      %4395 = vmatpush2.msra.mxu0 0.0
      %4396 = vmatprep.subr.mxu0 0.0
      %4397 = vmatpush2.msra.mxu0 0.0
      %4398 = vmatprep.subr.mxu0 0.0
      %4399 = vmatpush2.msra.mxu0 0.0
      %4400 = vmatprep.subr.mxu0 0.0
      %4401 = vmatpush2.msra.mxu0 0.0
      %4402 = vmatprep.subr.mxu0 0.0
      %4403 = vmatpush2.msra.mxu0 0.0
      %4404 = vmatprep.subr.mxu0 0.0
      %4405 = vmatpush2.msra.mxu0 0.0
      %4406 = vmatprep.subr.mxu0 0.0
      %4407 = vmatpush2.msra.mxu0 0.0
      %4408 = vmatprep.mubr.f32.mxu0 0.0
      %v4409 = vand.u32 %v3288, 4294901760
      %v4410 = vsub.f32 %v3288, %v4409
      %v4411 = vand.u32 %v4410, 4294901760
      %v4412 = vsub.f32 %v4410, %v4411
      %v4413 = vand.u32 %v4412, 4294901760
      %4414 = vmatmul.mubr.f32.gmra.mxu0 %v4413
      %v4415 = vpop.f32.mrf.mxu0
      %v4416 = vadd.f32 %v4304, %v4415
      %v4417 = vpop.f32.mrf.mxu0
      %4418 = vmatprep.mubr.f32.mxu0 0.0
      %v4419 = vand.u32 %v3291, 4294901760
      %v4420 = vsub.f32 %v3291, %v4419
      %v4421 = vand.u32 %v4420, 4294901760
      %v4422 = vsub.f32 %v4420, %v4421
      %v4423 = vand.u32 %v4422, 4294901760
      %4424 = vmatmul.mubr.f32.gmra.mxu0 %v4423
      %v4425 = vpop.f32.mrf.mxu0
      %v4426 = vadd.f32 %v4311, %v4425
      %v4427 = vpop.f32.mrf.mxu0
      %4428 = vmatprep.mubr.f32.mxu0 0.0
      %v4429 = vand.u32 %v3294, 4294901760
      %v4430 = vsub.f32 %v3294, %v4429
      %v4431 = vand.u32 %v4430, 4294901760
      %v4432 = vsub.f32 %v4430, %v4431
      %v4433 = vand.u32 %v4432, 4294901760
      %4434 = vmatmul.mubr.f32.gmra.mxu0 %v4433
      %v4435 = vpop.f32.mrf.mxu0
      %v4436 = vadd.f32 %v4318, %v4435
      %v4437 = vpop.f32.mrf.mxu0
      %4438 = vmatprep.mubr.f32.mxu0 0.0
      %v4439 = vand.u32 %v3297, 4294901760
      %v4440 = vsub.f32 %v3297, %v4439
      %v4441 = vand.u32 %v4440, 4294901760
      %v4442 = vsub.f32 %v4440, %v4441
      %v4443 = vand.u32 %v4442, 4294901760
      %4444 = vmatmul.mubr.f32.gmra.mxu0 %v4443
      %v4445 = vpop.f32.mrf.mxu0
      %v4446 = vadd.f32 %v4325, %v4445
      %v4447 = vpop.f32.mrf.mxu0
      %4448 = vdwg.mxu0
      %4449 = vmatprep.subr.mxu0 0.0
      %v4450 = vand.u32 %v266, 4294901760
      %v4451 = vsub.f32 %v266, %v4450
      %v4452 = vand.u32 %v4451, 4294901760
      %v4453 = vsub.f32 %v4451, %v4452
      %v4454 = vand.u32 %v4453, 4294901760
      %4455 = vmatpush1.msra.mxu0 %v4454
      %4456 = vmatprep.subr.mxu0 0.0
      %v4457 = vand.u32 %v265, 4294901760
      %v4458 = vsub.f32 %v265, %v4457
      %v4459 = vand.u32 %v4458, 4294901760
      %v4460 = vsub.f32 %v4458, %v4459
      %v4461 = vand.u32 %v4460, 4294901760
      %4462 = vmatpush1.msra.mxu0 %v4461
      %4463 = vmatprep.subr.mxu0 0.0
      %v4464 = vand.u32 %v264, 4294901760
      %v4465 = vsub.f32 %v264, %v4464
      %v4466 = vand.u32 %v4465, 4294901760
      %v4467 = vsub.f32 %v4465, %v4466
      %v4468 = vand.u32 %v4467, 4294901760
      %4469 = vmatpush1.msra.mxu0 %v4468
      %4470 = vmatprep.subr.mxu0 0.0
      %v4471 = vand.u32 %v263, 4294901760
      %v4472 = vsub.f32 %v263, %v4471
      %v4473 = vand.u32 %v4472, 4294901760
      %v4474 = vsub.f32 %v4472, %v4473
      %v4475 = vand.u32 %v4474, 4294901760
      %4476 = vmatpush1.msra.mxu0 %v4475
      %4477 = vmatprep.subr.mxu0 0.0
      %v4478 = vand.u32 %v262, 4294901760
      %v4479 = vsub.f32 %v262, %v4478
      %v4480 = vand.u32 %v4479, 4294901760
      %v4481 = vsub.f32 %v4479, %v4480
      %v4482 = vand.u32 %v4481, 4294901760
      %4483 = vmatpush1.msra.mxu0 %v4482
      %4484 = vmatprep.subr.mxu0 0.0
      %v4485 = vand.u32 %v261, 4294901760
      %v4486 = vsub.f32 %v261, %v4485
      %v4487 = vand.u32 %v4486, 4294901760
      %v4488 = vsub.f32 %v4486, %v4487
      %v4489 = vand.u32 %v4488, 4294901760
      %4490 = vmatpush1.msra.mxu0 %v4489
      %4491 = vmatprep.subr.mxu0 0.0
      %v4492 = vand.u32 %v260, 4294901760
      %v4493 = vsub.f32 %v260, %v4492
      %v4494 = vand.u32 %v4493, 4294901760
      %v4495 = vsub.f32 %v4493, %v4494
      %v4496 = vand.u32 %v4495, 4294901760
      %4497 = vmatpush1.msra.mxu0 %v4496
      %4498 = vmatprep.subr.mxu0 0.0
      %v4499 = vand.u32 %v259, 4294901760
      %v4500 = vsub.f32 %v259, %v4499
      %v4501 = vand.u32 %v4500, 4294901760
      %v4502 = vsub.f32 %v4500, %v4501
      %v4503 = vand.u32 %v4502, 4294901760
      %4504 = vmatpush1.msra.mxu0 %v4503
      %4505 = vmatprep.subr.mxu0 0.0
      %v4506 = vand.u32 %v258, 4294901760
      %v4507 = vsub.f32 %v258, %v4506
      %v4508 = vand.u32 %v4507, 4294901760
      %v4509 = vsub.f32 %v4507, %v4508
      %v4510 = vand.u32 %v4509, 4294901760
      %4511 = vmatpush1.msra.mxu0 %v4510
      %4512 = vmatprep.subr.mxu0 0.0
      %v4513 = vand.u32 %v257, 4294901760
      %v4514 = vsub.f32 %v257, %v4513
      %v4515 = vand.u32 %v4514, 4294901760
      %v4516 = vsub.f32 %v4514, %v4515
      %v4517 = vand.u32 %v4516, 4294901760
      %4518 = vmatpush1.msra.mxu0 %v4517
      %4519 = vmatprep.subr.mxu0 0.0
      %v4520 = vand.u32 %v256, 4294901760
      %v4521 = vsub.f32 %v256, %v4520
      %v4522 = vand.u32 %v4521, 4294901760
      %v4523 = vsub.f32 %v4521, %v4522
      %v4524 = vand.u32 %v4523, 4294901760
      %4525 = vmatpush1.msra.mxu0 %v4524
      %4526 = vmatprep.subr.mxu0 0.0
      %v4527 = vand.u32 %v255, 4294901760
      %v4528 = vsub.f32 %v255, %v4527
      %v4529 = vand.u32 %v4528, 4294901760
      %v4530 = vsub.f32 %v4528, %v4529
      %v4531 = vand.u32 %v4530, 4294901760
      %4532 = vmatpush1.msra.mxu0 %v4531
      %4533 = vmatprep.subr.mxu0 0.0
      %v4534 = vand.u32 %v254, 4294901760
      %v4535 = vsub.f32 %v254, %v4534
      %v4536 = vand.u32 %v4535, 4294901760
      %v4537 = vsub.f32 %v4535, %v4536
      %v4538 = vand.u32 %v4537, 4294901760
      %4539 = vmatpush1.msra.mxu0 %v4538
      %4540 = vmatprep.subr.mxu0 0.0
      %v4541 = vand.u32 %v253, 4294901760
      %v4542 = vsub.f32 %v253, %v4541
      %v4543 = vand.u32 %v4542, 4294901760
      %v4544 = vsub.f32 %v4542, %v4543
      %v4545 = vand.u32 %v4544, 4294901760
      %4546 = vmatpush1.msra.mxu0 %v4545
      %4547 = vmatprep.subr.mxu0 0.0
      %v4548 = vand.u32 %v252, 4294901760
      %v4549 = vsub.f32 %v252, %v4548
      %v4550 = vand.u32 %v4549, 4294901760
      %v4551 = vsub.f32 %v4549, %v4550
      %v4552 = vand.u32 %v4551, 4294901760
      %4553 = vmatpush1.msra.mxu0 %v4552
      %4554 = vmatprep.subr.mxu0 0.0
      %v4555 = vand.u32 %v251, 4294901760
      %v4556 = vsub.f32 %v251, %v4555
      %v4557 = vand.u32 %v4556, 4294901760
      %v4558 = vsub.f32 %v4556, %v4557
      %v4559 = vand.u32 %v4558, 4294901760
      %4560 = vmatpush1.msra.mxu0 %v4559
      %4561 = vmatprep.subr.mxu0 0.0
      %4562 = vmatpush2.msra.mxu0 0.0
      %4563 = vmatprep.subr.mxu0 0.0
      %4564 = vmatpush2.msra.mxu0 0.0
      %4565 = vmatprep.subr.mxu0 0.0
      %4566 = vmatpush2.msra.mxu0 0.0
      %4567 = vmatprep.subr.mxu0 0.0
      %4568 = vmatpush2.msra.mxu0 0.0
      %4569 = vmatprep.subr.mxu0 0.0
      %4570 = vmatpush2.msra.mxu0 0.0
      %4571 = vmatprep.subr.mxu0 0.0
      %4572 = vmatpush2.msra.mxu0 0.0
      %4573 = vmatprep.subr.mxu0 0.0
      %4574 = vmatpush2.msra.mxu0 0.0
      %4575 = vmatprep.subr.mxu0 0.0
      %4576 = vmatpush2.msra.mxu0 0.0
      %4577 = vmatprep.subr.mxu0 0.0
      %4578 = vmatpush2.msra.mxu0 0.0
      %4579 = vmatprep.subr.mxu0 0.0
      %4580 = vmatpush2.msra.mxu0 0.0
      %4581 = vmatprep.subr.mxu0 0.0
      %4582 = vmatpush2.msra.mxu0 0.0
      %4583 = vmatprep.subr.mxu0 0.0
      %4584 = vmatpush2.msra.mxu0 0.0
      %4585 = vmatprep.subr.mxu0 0.0
      %4586 = vmatpush2.msra.mxu0 0.0
      %4587 = vmatprep.subr.mxu0 0.0
      %4588 = vmatpush2.msra.mxu0 0.0
      %4589 = vmatprep.subr.mxu0 0.0
      %4590 = vmatpush2.msra.mxu0 0.0
      %4591 = vmatprep.subr.mxu0 0.0
      %4592 = vmatpush2.msra.mxu0 0.0
      %4593 = vmatprep.mubr.f32.mxu0 0.0
      %v4594 = vand.u32 %v3288, 4294901760
      %4595 = vmatmul.mubr.f32.gmra.mxu0 %v4594
      %v4596 = vpop.f32.mrf.mxu0
      %v4597 = vadd.f32 %v4416, %v4596
      %v4598 = vpop.f32.mrf.mxu0
      %4599 = vmatprep.mubr.f32.mxu0 0.0
      %v4600 = vand.u32 %v3291, 4294901760
      %4601 = vmatmul.mubr.f32.gmra.mxu0 %v4600
      %v4602 = vpop.f32.mrf.mxu0
      %v4603 = vadd.f32 %v4426, %v4602
      %v4604 = vpop.f32.mrf.mxu0
      %4605 = vmatprep.mubr.f32.mxu0 0.0
      %v4606 = vand.u32 %v3294, 4294901760
      %4607 = vmatmul.mubr.f32.gmra.mxu0 %v4606
      %v4608 = vpop.f32.mrf.mxu0
      %v4609 = vadd.f32 %v4436, %v4608
      %v4610 = vpop.f32.mrf.mxu0
      %4611 = vmatprep.mubr.f32.mxu0 0.0
      %v4612 = vand.u32 %v3297, 4294901760
      %4613 = vmatmul.mubr.f32.gmra.mxu0 %v4612
      %v4614 = vpop.f32.mrf.mxu0
      %v4615 = vadd.f32 %v4446, %v4614
      %v4616 = vpop.f32.mrf.mxu0
      %4617 = vdwg.mxu0
      %4618 = vmatprep.subr.mxu0 0.0
      %v4619 = vand.u32 %v266, 4294901760
      %v4620 = vsub.f32 %v266, %v4619
      %4621 = vmatpush1.msra.mxu0 %v4620
      %4622 = vmatprep.subr.mxu0 0.0
      %v4623 = vand.u32 %v265, 4294901760
      %v4624 = vsub.f32 %v265, %v4623
      %4625 = vmatpush1.msra.mxu0 %v4624
      %4626 = vmatprep.subr.mxu0 0.0
      %v4627 = vand.u32 %v264, 4294901760
      %v4628 = vsub.f32 %v264, %v4627
      %4629 = vmatpush1.msra.mxu0 %v4628
      %4630 = vmatprep.subr.mxu0 0.0
      %v4631 = vand.u32 %v263, 4294901760
      %v4632 = vsub.f32 %v263, %v4631
      %4633 = vmatpush1.msra.mxu0 %v4632
      %4634 = vmatprep.subr.mxu0 0.0
      %v4635 = vand.u32 %v262, 4294901760
      %v4636 = vsub.f32 %v262, %v4635
      %4637 = vmatpush1.msra.mxu0 %v4636
      %4638 = vmatprep.subr.mxu0 0.0
      %v4639 = vand.u32 %v261, 4294901760
      %v4640 = vsub.f32 %v261, %v4639
      %4641 = vmatpush1.msra.mxu0 %v4640
      %4642 = vmatprep.subr.mxu0 0.0
      %v4643 = vand.u32 %v260, 4294901760
      %v4644 = vsub.f32 %v260, %v4643
      %4645 = vmatpush1.msra.mxu0 %v4644
      %4646 = vmatprep.subr.mxu0 0.0
      %v4647 = vand.u32 %v259, 4294901760
      %v4648 = vsub.f32 %v259, %v4647
      %4649 = vmatpush1.msra.mxu0 %v4648
      %4650 = vmatprep.subr.mxu0 0.0
      %v4651 = vand.u32 %v258, 4294901760
      %v4652 = vsub.f32 %v258, %v4651
      %4653 = vmatpush1.msra.mxu0 %v4652
      %4654 = vmatprep.subr.mxu0 0.0
      %v4655 = vand.u32 %v257, 4294901760
      %v4656 = vsub.f32 %v257, %v4655
      %4657 = vmatpush1.msra.mxu0 %v4656
      %4658 = vmatprep.subr.mxu0 0.0
      %v4659 = vand.u32 %v256, 4294901760
      %v4660 = vsub.f32 %v256, %v4659
      %4661 = vmatpush1.msra.mxu0 %v4660
      %4662 = vmatprep.subr.mxu0 0.0
      %v4663 = vand.u32 %v255, 4294901760
      %v4664 = vsub.f32 %v255, %v4663
      %4665 = vmatpush1.msra.mxu0 %v4664
      %4666 = vmatprep.subr.mxu0 0.0
      %v4667 = vand.u32 %v254, 4294901760
      %v4668 = vsub.f32 %v254, %v4667
      %4669 = vmatpush1.msra.mxu0 %v4668
      %4670 = vmatprep.subr.mxu0 0.0
      %v4671 = vand.u32 %v253, 4294901760
      %v4672 = vsub.f32 %v253, %v4671
      %4673 = vmatpush1.msra.mxu0 %v4672
      %4674 = vmatprep.subr.mxu0 0.0
      %v4675 = vand.u32 %v252, 4294901760
      %v4676 = vsub.f32 %v252, %v4675
      %4677 = vmatpush1.msra.mxu0 %v4676
      %4678 = vmatprep.subr.mxu0 0.0
      %v4679 = vand.u32 %v251, 4294901760
      %v4680 = vsub.f32 %v251, %v4679
      %4681 = vmatpush1.msra.mxu0 %v4680
      %4682 = vmatprep.subr.mxu0 0.0
      %4683 = vmatpush2.msra.mxu0 0.0
      %4684 = vmatprep.subr.mxu0 0.0
      %4685 = vmatpush2.msra.mxu0 0.0
      %4686 = vmatprep.subr.mxu0 0.0
      %4687 = vmatpush2.msra.mxu0 0.0
      %4688 = vmatprep.subr.mxu0 0.0
      %4689 = vmatpush2.msra.mxu0 0.0
      %4690 = vmatprep.subr.mxu0 0.0
      %4691 = vmatpush2.msra.mxu0 0.0
      %4692 = vmatprep.subr.mxu0 0.0
      %4693 = vmatpush2.msra.mxu0 0.0
      %4694 = vmatprep.subr.mxu0 0.0
      %4695 = vmatpush2.msra.mxu0 0.0
      %4696 = vmatprep.subr.mxu0 0.0
      %4697 = vmatpush2.msra.mxu0 0.0
      %4698 = vmatprep.subr.mxu0 0.0
      %4699 = vmatpush2.msra.mxu0 0.0
      %4700 = vmatprep.subr.mxu0 0.0
      %4701 = vmatpush2.msra.mxu0 0.0
      %4702 = vmatprep.subr.mxu0 0.0
      %4703 = vmatpush2.msra.mxu0 0.0
      %4704 = vmatprep.subr.mxu0 0.0
      %4705 = vmatpush2.msra.mxu0 0.0
      %4706 = vmatprep.subr.mxu0 0.0
      %4707 = vmatpush2.msra.mxu0 0.0
      %4708 = vmatprep.subr.mxu0 0.0
      %4709 = vmatpush2.msra.mxu0 0.0
      %4710 = vmatprep.subr.mxu0 0.0
      %4711 = vmatpush2.msra.mxu0 0.0
      %4712 = vmatprep.subr.mxu0 0.0
      %4713 = vmatpush2.msra.mxu0 0.0
      %4714 = vmatprep.mubr.f32.mxu0 0.0
      %v4715 = vand.u32 %v3288, 4294901760
      %v4716 = vsub.f32 %v3288, %v4715
      %4717 = vmatmul.mubr.f32.gmra.mxu0 %v4716
      %v4718 = vpop.f32.mrf.mxu0
      %v4719 = vadd.f32 %v4597, %v4718
      %v4720 = vpop.f32.mrf.mxu0
      %4721 = vmatprep.mubr.f32.mxu0 0.0
      %v4722 = vand.u32 %v3291, 4294901760
      %v4723 = vsub.f32 %v3291, %v4722
      %4724 = vmatmul.mubr.f32.gmra.mxu0 %v4723
      %v4725 = vpop.f32.mrf.mxu0
      %v4726 = vadd.f32 %v4603, %v4725
      %v4727 = vpop.f32.mrf.mxu0
      %4728 = vmatprep.mubr.f32.mxu0 0.0
      %v4729 = vand.u32 %v3294, 4294901760
      %v4730 = vsub.f32 %v3294, %v4729
      %4731 = vmatmul.mubr.f32.gmra.mxu0 %v4730
      %v4732 = vpop.f32.mrf.mxu0
      %v4733 = vadd.f32 %v4609, %v4732
      %v4734 = vpop.f32.mrf.mxu0
      %4735 = vmatprep.mubr.f32.mxu0 0.0
      %v4736 = vand.u32 %v3297, 4294901760
      %v4737 = vsub.f32 %v3297, %v4736
      %4738 = vmatmul.mubr.f32.gmra.mxu0 %v4737
      %v4739 = vpop.f32.mrf.mxu0
      %v4740 = vadd.f32 %v4615, %v4739
      %v4741 = vpop.f32.mrf.mxu0
      %4742 = vdwg.mxu0
      %4743 = vmatprep.subr.mxu0 0.0
      %v4744 = vand.u32 %v266, 4294901760
      %4745 = vmatpush1.msra.mxu0 %v4744
      %4746 = vmatprep.subr.mxu0 0.0
      %v4747 = vand.u32 %v265, 4294901760
      %4748 = vmatpush1.msra.mxu0 %v4747
      %4749 = vmatprep.subr.mxu0 0.0
      %v4750 = vand.u32 %v264, 4294901760
      %4751 = vmatpush1.msra.mxu0 %v4750
      %4752 = vmatprep.subr.mxu0 0.0
      %v4753 = vand.u32 %v263, 4294901760
      %4754 = vmatpush1.msra.mxu0 %v4753
      %4755 = vmatprep.subr.mxu0 0.0
      %v4756 = vand.u32 %v262, 4294901760
      %4757 = vmatpush1.msra.mxu0 %v4756
      %4758 = vmatprep.subr.mxu0 0.0
      %v4759 = vand.u32 %v261, 4294901760
      %4760 = vmatpush1.msra.mxu0 %v4759
      %4761 = vmatprep.subr.mxu0 0.0
      %v4762 = vand.u32 %v260, 4294901760
      %4763 = vmatpush1.msra.mxu0 %v4762
      %4764 = vmatprep.subr.mxu0 0.0
      %v4765 = vand.u32 %v259, 4294901760
      %4766 = vmatpush1.msra.mxu0 %v4765
      %4767 = vmatprep.subr.mxu0 0.0
      %v4768 = vand.u32 %v258, 4294901760
      %4769 = vmatpush1.msra.mxu0 %v4768
      %4770 = vmatprep.subr.mxu0 0.0
      %v4771 = vand.u32 %v257, 4294901760
      %4772 = vmatpush1.msra.mxu0 %v4771
      %4773 = vmatprep.subr.mxu0 0.0
      %v4774 = vand.u32 %v256, 4294901760
      %4775 = vmatpush1.msra.mxu0 %v4774
      %4776 = vmatprep.subr.mxu0 0.0
      %v4777 = vand.u32 %v255, 4294901760
      %4778 = vmatpush1.msra.mxu0 %v4777
      %4779 = vmatprep.subr.mxu0 0.0
      %v4780 = vand.u32 %v254, 4294901760
      %4781 = vmatpush1.msra.mxu0 %v4780
      %4782 = vmatprep.subr.mxu0 0.0
      %v4783 = vand.u32 %v253, 4294901760
      %4784 = vmatpush1.msra.mxu0 %v4783
      %4785 = vmatprep.subr.mxu0 0.0
      %v4786 = vand.u32 %v252, 4294901760
      %4787 = vmatpush1.msra.mxu0 %v4786
      %4788 = vmatprep.subr.mxu0 0.0
      %v4789 = vand.u32 %v251, 4294901760
      %4790 = vmatpush1.msra.mxu0 %v4789
      %4791 = vmatprep.subr.mxu0 0.0
      %4792 = vmatpush2.msra.mxu0 0.0
      %4793 = vmatprep.subr.mxu0 0.0
      %4794 = vmatpush2.msra.mxu0 0.0
      %4795 = vmatprep.subr.mxu0 0.0
      %4796 = vmatpush2.msra.mxu0 0.0
      %4797 = vmatprep.subr.mxu0 0.0
      %4798 = vmatpush2.msra.mxu0 0.0
      %4799 = vmatprep.subr.mxu0 0.0
      %4800 = vmatpush2.msra.mxu0 0.0
      %4801 = vmatprep.subr.mxu0 0.0
      %4802 = vmatpush2.msra.mxu0 0.0
      %4803 = vmatprep.subr.mxu0 0.0
      %4804 = vmatpush2.msra.mxu0 0.0
      %4805 = vmatprep.subr.mxu0 0.0
      %4806 = vmatpush2.msra.mxu0 0.0
      %4807 = vmatprep.subr.mxu0 0.0
      %4808 = vmatpush2.msra.mxu0 0.0
      %4809 = vmatprep.subr.mxu0 0.0
      %4810 = vmatpush2.msra.mxu0 0.0
      %4811 = vmatprep.subr.mxu0 0.0
      %4812 = vmatpush2.msra.mxu0 0.0
      %4813 = vmatprep.subr.mxu0 0.0
      %4814 = vmatpush2.msra.mxu0 0.0
      %4815 = vmatprep.subr.mxu0 0.0
      %4816 = vmatpush2.msra.mxu0 0.0
      %4817 = vmatprep.subr.mxu0 0.0
      %4818 = vmatpush2.msra.mxu0 0.0
      %4819 = vmatprep.subr.mxu0 0.0
      %4820 = vmatpush2.msra.mxu0 0.0
      %4821 = vmatprep.subr.mxu0 0.0
      %4822 = vmatpush2.msra.mxu0 0.0
      %4823 = vmatprep.mubr.f32.mxu0 0.0
      %v4824 = vand.u32 %v3288, 4294901760
      %v4825 = vsub.f32 %v3288, %v4824
      %v4826 = vand.u32 %v4825, 4294901760
      %4827 = vmatmul.mubr.f32.gmra.mxu0 %v4826
      %v4828 = vpop.f32.mrf.mxu0
      %v4829 = vadd.f32 %v4719, %v4828
      %v4830 = vpop.f32.mrf.mxu0
      %4831 = vmatprep.mubr.f32.mxu0 0.0
      %v4832 = vand.u32 %v3291, 4294901760
      %v4833 = vsub.f32 %v3291, %v4832
      %v4834 = vand.u32 %v4833, 4294901760
      %4835 = vmatmul.mubr.f32.gmra.mxu0 %v4834
      %v4836 = vpop.f32.mrf.mxu0
      %v4837 = vadd.f32 %v4726, %v4836
      %v4838 = vpop.f32.mrf.mxu0
      %4839 = vmatprep.mubr.f32.mxu0 0.0
      %v4840 = vand.u32 %v3294, 4294901760
      %v4841 = vsub.f32 %v3294, %v4840
      %v4842 = vand.u32 %v4841, 4294901760
      %4843 = vmatmul.mubr.f32.gmra.mxu0 %v4842
      %v4844 = vpop.f32.mrf.mxu0
      %v4845 = vadd.f32 %v4733, %v4844
      %v4846 = vpop.f32.mrf.mxu0
      %4847 = vmatprep.mubr.f32.mxu0 0.0
      %v4848 = vand.u32 %v3297, 4294901760
      %v4849 = vsub.f32 %v3297, %v4848
      %v4850 = vand.u32 %v4849, 4294901760
      %4851 = vmatmul.mubr.f32.gmra.mxu0 %v4850
      %v4852 = vpop.f32.mrf.mxu0
      %v4853 = vadd.f32 %v4740, %v4852
      %v4854 = vpop.f32.mrf.mxu0
      %4855 = vdwg.mxu0
      %4856 = vmatprep.subr.mxu0 0.0
      %v4857 = vand.u32 %v266, 4294901760
      %v4858 = vsub.f32 %v266, %v4857
      %v4859 = vand.u32 %v4858, 4294901760
      %4860 = vmatpush1.msra.mxu0 %v4859
      %4861 = vmatprep.subr.mxu0 0.0
      %v4862 = vand.u32 %v265, 4294901760
      %v4863 = vsub.f32 %v265, %v4862
      %v4864 = vand.u32 %v4863, 4294901760
      %4865 = vmatpush1.msra.mxu0 %v4864
      %4866 = vmatprep.subr.mxu0 0.0
      %v4867 = vand.u32 %v264, 4294901760
      %v4868 = vsub.f32 %v264, %v4867
      %v4869 = vand.u32 %v4868, 4294901760
      %4870 = vmatpush1.msra.mxu0 %v4869
      %4871 = vmatprep.subr.mxu0 0.0
      %v4872 = vand.u32 %v263, 4294901760
      %v4873 = vsub.f32 %v263, %v4872
      %v4874 = vand.u32 %v4873, 4294901760
      %4875 = vmatpush1.msra.mxu0 %v4874
      %4876 = vmatprep.subr.mxu0 0.0
      %v4877 = vand.u32 %v262, 4294901760
      %v4878 = vsub.f32 %v262, %v4877
      %v4879 = vand.u32 %v4878, 4294901760
      %4880 = vmatpush1.msra.mxu0 %v4879
      %4881 = vmatprep.subr.mxu0 0.0
      %v4882 = vand.u32 %v261, 4294901760
      %v4883 = vsub.f32 %v261, %v4882
      %v4884 = vand.u32 %v4883, 4294901760
      %4885 = vmatpush1.msra.mxu0 %v4884
      %4886 = vmatprep.subr.mxu0 0.0
      %v4887 = vand.u32 %v260, 4294901760
      %v4888 = vsub.f32 %v260, %v4887
      %v4889 = vand.u32 %v4888, 4294901760
      %4890 = vmatpush1.msra.mxu0 %v4889
      %4891 = vmatprep.subr.mxu0 0.0
      %v4892 = vand.u32 %v259, 4294901760
      %v4893 = vsub.f32 %v259, %v4892
      %v4894 = vand.u32 %v4893, 4294901760
      %4895 = vmatpush1.msra.mxu0 %v4894
      %4896 = vmatprep.subr.mxu0 0.0
      %v4897 = vand.u32 %v258, 4294901760
      %v4898 = vsub.f32 %v258, %v4897
      %v4899 = vand.u32 %v4898, 4294901760
      %4900 = vmatpush1.msra.mxu0 %v4899
      %4901 = vmatprep.subr.mxu0 0.0
      %v4902 = vand.u32 %v257, 4294901760
      %v4903 = vsub.f32 %v257, %v4902
      %v4904 = vand.u32 %v4903, 4294901760
      %4905 = vmatpush1.msra.mxu0 %v4904
      %4906 = vmatprep.subr.mxu0 0.0
      %v4907 = vand.u32 %v256, 4294901760
      %v4908 = vsub.f32 %v256, %v4907
      %v4909 = vand.u32 %v4908, 4294901760
      %4910 = vmatpush1.msra.mxu0 %v4909
      %4911 = vmatprep.subr.mxu0 0.0
      %v4912 = vand.u32 %v255, 4294901760
      %v4913 = vsub.f32 %v255, %v4912
      %v4914 = vand.u32 %v4913, 4294901760
      %4915 = vmatpush1.msra.mxu0 %v4914
      %4916 = vmatprep.subr.mxu0 0.0
      %v4917 = vand.u32 %v254, 4294901760
      %v4918 = vsub.f32 %v254, %v4917
      %v4919 = vand.u32 %v4918, 4294901760
      %4920 = vmatpush1.msra.mxu0 %v4919
      %4921 = vmatprep.subr.mxu0 0.0
      %v4922 = vand.u32 %v253, 4294901760
      %v4923 = vsub.f32 %v253, %v4922
      %v4924 = vand.u32 %v4923, 4294901760
      %4925 = vmatpush1.msra.mxu0 %v4924
      %4926 = vmatprep.subr.mxu0 0.0
      %v4927 = vand.u32 %v252, 4294901760
      %v4928 = vsub.f32 %v252, %v4927
      %v4929 = vand.u32 %v4928, 4294901760
      %4930 = vmatpush1.msra.mxu0 %v4929
      %4931 = vmatprep.subr.mxu0 0.0
      %v4932 = vand.u32 %v251, 4294901760
      %v4933 = vsub.f32 %v251, %v4932
      %v4934 = vand.u32 %v4933, 4294901760
      %4935 = vmatpush1.msra.mxu0 %v4934
      %4936 = vmatprep.subr.mxu0 0.0
      %4937 = vmatpush2.msra.mxu0 0.0
      %4938 = vmatprep.subr.mxu0 0.0
      %4939 = vmatpush2.msra.mxu0 0.0
      %4940 = vmatprep.subr.mxu0 0.0
      %4941 = vmatpush2.msra.mxu0 0.0
      %4942 = vmatprep.subr.mxu0 0.0
      %4943 = vmatpush2.msra.mxu0 0.0
      %4944 = vmatprep.subr.mxu0 0.0
      %4945 = vmatpush2.msra.mxu0 0.0
      %4946 = vmatprep.subr.mxu0 0.0
      %4947 = vmatpush2.msra.mxu0 0.0
      %4948 = vmatprep.subr.mxu0 0.0
      %4949 = vmatpush2.msra.mxu0 0.0
      %4950 = vmatprep.subr.mxu0 0.0
      %4951 = vmatpush2.msra.mxu0 0.0
      %4952 = vmatprep.subr.mxu0 0.0
      %4953 = vmatpush2.msra.mxu0 0.0
      %4954 = vmatprep.subr.mxu0 0.0
      %4955 = vmatpush2.msra.mxu0 0.0
      %4956 = vmatprep.subr.mxu0 0.0
      %4957 = vmatpush2.msra.mxu0 0.0
      %4958 = vmatprep.subr.mxu0 0.0
      %4959 = vmatpush2.msra.mxu0 0.0
      %4960 = vmatprep.subr.mxu0 0.0
      %4961 = vmatpush2.msra.mxu0 0.0
      %4962 = vmatprep.subr.mxu0 0.0
      %4963 = vmatpush2.msra.mxu0 0.0
      %4964 = vmatprep.subr.mxu0 0.0
      %4965 = vmatpush2.msra.mxu0 0.0
      %4966 = vmatprep.subr.mxu0 0.0
      %4967 = vmatpush2.msra.mxu0 0.0
      %4968 = vmatprep.mubr.f32.mxu0 0.0
      %v4969 = vand.u32 %v3288, 4294901760
      %4970 = vmatmul.mubr.f32.gmra.mxu0 %v4969
      %v4971 = vpop.f32.mrf.mxu0
      %v4972 = vadd.f32 %v4829, %v4971
      %v4973 = vpop.f32.mrf.mxu0
      %4974 = vmatprep.mubr.f32.mxu0 0.0
      %v4975 = vand.u32 %v3291, 4294901760
      %4976 = vmatmul.mubr.f32.gmra.mxu0 %v4975
      %v4977 = vpop.f32.mrf.mxu0
      %v4978 = vadd.f32 %v4837, %v4977
      %v4979 = vpop.f32.mrf.mxu0
      %4980 = vmatprep.mubr.f32.mxu0 0.0
      %v4981 = vand.u32 %v3294, 4294901760
      %4982 = vmatmul.mubr.f32.gmra.mxu0 %v4981
      %v4983 = vpop.f32.mrf.mxu0
      %v4984 = vadd.f32 %v4845, %v4983
      %v4985 = vpop.f32.mrf.mxu0
      %4986 = vmatprep.mubr.f32.mxu0 0.0
      %v4987 = vand.u32 %v3297, 4294901760
      %4988 = vmatmul.mubr.f32.gmra.mxu0 %v4987
      %v4989 = vpop.f32.mrf.mxu0
      %v4990 = vadd.f32 %v4853, %v4989
      %v4991 = vpop.f32.mrf.mxu0
      %4992 = vdwg.mxu0
      %4993 = vmatprep.subr.mxu0 0.0
      %v4994 = vand.u32 %v266, 4294901760
      %4995 = vmatpush1.msra.mxu0 %v4994
      %4996 = vmatprep.subr.mxu0 0.0
      %v4997 = vand.u32 %v265, 4294901760
      %4998 = vmatpush1.msra.mxu0 %v4997
      %4999 = vmatprep.subr.mxu0 0.0
      %v5000 = vand.u32 %v264, 4294901760
      %5001 = vmatpush1.msra.mxu0 %v5000
      %5002 = vmatprep.subr.mxu0 0.0
      %v5003 = vand.u32 %v263, 4294901760
      %5004 = vmatpush1.msra.mxu0 %v5003
      %5005 = vmatprep.subr.mxu0 0.0
      %v5006 = vand.u32 %v262, 4294901760
      %5007 = vmatpush1.msra.mxu0 %v5006
      %5008 = vmatprep.subr.mxu0 0.0
      %v5009 = vand.u32 %v261, 4294901760
      %5010 = vmatpush1.msra.mxu0 %v5009
      %5011 = vmatprep.subr.mxu0 0.0
      %v5012 = vand.u32 %v260, 4294901760
      %5013 = vmatpush1.msra.mxu0 %v5012
      %5014 = vmatprep.subr.mxu0 0.0
      %v5015 = vand.u32 %v259, 4294901760
      %5016 = vmatpush1.msra.mxu0 %v5015
      %5017 = vmatprep.subr.mxu0 0.0
      %v5018 = vand.u32 %v258, 4294901760
      %5019 = vmatpush1.msra.mxu0 %v5018
      %5020 = vmatprep.subr.mxu0 0.0
      %v5021 = vand.u32 %v257, 4294901760
      %5022 = vmatpush1.msra.mxu0 %v5021
      %5023 = vmatprep.subr.mxu0 0.0
      %v5024 = vand.u32 %v256, 4294901760
      %5025 = vmatpush1.msra.mxu0 %v5024
      %5026 = vmatprep.subr.mxu0 0.0
      %v5027 = vand.u32 %v255, 4294901760
      %5028 = vmatpush1.msra.mxu0 %v5027
      %5029 = vmatprep.subr.mxu0 0.0
      %v5030 = vand.u32 %v254, 4294901760
      %5031 = vmatpush1.msra.mxu0 %v5030
      %5032 = vmatprep.subr.mxu0 0.0
      %v5033 = vand.u32 %v253, 4294901760
      %5034 = vmatpush1.msra.mxu0 %v5033
      %5035 = vmatprep.subr.mxu0 0.0
      %v5036 = vand.u32 %v252, 4294901760
      %5037 = vmatpush1.msra.mxu0 %v5036
      %5038 = vmatprep.subr.mxu0 0.0
      %v5039 = vand.u32 %v251, 4294901760
      %5040 = vmatpush1.msra.mxu0 %v5039
      %5041 = vmatprep.subr.mxu0 0.0
      %5042 = vmatpush2.msra.mxu0 0.0
      %5043 = vmatprep.subr.mxu0 0.0
      %5044 = vmatpush2.msra.mxu0 0.0
      %5045 = vmatprep.subr.mxu0 0.0
      %5046 = vmatpush2.msra.mxu0 0.0
      %5047 = vmatprep.subr.mxu0 0.0
      %5048 = vmatpush2.msra.mxu0 0.0
      %5049 = vmatprep.subr.mxu0 0.0
      %5050 = vmatpush2.msra.mxu0 0.0
      %5051 = vmatprep.subr.mxu0 0.0
      %5052 = vmatpush2.msra.mxu0 0.0
      %5053 = vmatprep.subr.mxu0 0.0
      %5054 = vmatpush2.msra.mxu0 0.0
      %5055 = vmatprep.subr.mxu0 0.0
      %5056 = vmatpush2.msra.mxu0 0.0
      %5057 = vmatprep.subr.mxu0 0.0
      %5058 = vmatpush2.msra.mxu0 0.0
      %5059 = vmatprep.subr.mxu0 0.0
      %5060 = vmatpush2.msra.mxu0 0.0
      %5061 = vmatprep.subr.mxu0 0.0
      %5062 = vmatpush2.msra.mxu0 0.0
      %5063 = vmatprep.subr.mxu0 0.0
      %5064 = vmatpush2.msra.mxu0 0.0
      %5065 = vmatprep.subr.mxu0 0.0
      %5066 = vmatpush2.msra.mxu0 0.0
      %5067 = vmatprep.subr.mxu0 0.0
      %5068 = vmatpush2.msra.mxu0 0.0
      %5069 = vmatprep.subr.mxu0 0.0
      %5070 = vmatpush2.msra.mxu0 0.0
      %5071 = vmatprep.subr.mxu0 0.0
      %5072 = vmatpush2.msra.mxu0 0.0
      %5073 = vmatprep.mubr.f32.mxu0 0.0
      %v5074 = vand.u32 %v3288, 4294901760
      %5075 = vmatmul.mubr.f32.gmra.mxu0 %v5074
      %v5076 = vpop.f32.mrf.mxu0
      %v5077 = vadd.f32 %v4972, %v5076
      %v5078 = vpop.f32.mrf.mxu0
      %5079 = vmatprep.mubr.f32.mxu0 0.0
      %v5080 = vand.u32 %v3291, 4294901760
      %5081 = vmatmul.mubr.f32.gmra.mxu0 %v5080
      %v5082 = vpop.f32.mrf.mxu0
      %v5083 = vadd.f32 %v4978, %v5082
      %v5084 = vpop.f32.mrf.mxu0
      %5085 = vmatprep.mubr.f32.mxu0 0.0
      %v5086 = vand.u32 %v3294, 4294901760
      %5087 = vmatmul.mubr.f32.gmra.mxu0 %v5086
      %v5088 = vpop.f32.mrf.mxu0
      %v5089 = vadd.f32 %v4984, %v5088
      %v5090 = vpop.f32.mrf.mxu0
      %5091 = vmatprep.mubr.f32.mxu0 0.0
      %v5092 = vand.u32 %v3297, 4294901760
      %5093 = vmatmul.mubr.f32.gmra.mxu0 %v5092
      %v5094 = vpop.f32.mrf.mxu0
      %v5095 = vadd.f32 %v4990, %v5094
      %v5096 = vpop.f32.mrf.mxu0
      %5097 = vdwg.mxu0
      %v5098 = vmul.f32 %v5077, 0.020833334
      %v5099 = vmul.f32 %v5083, 0.020833334
      %v5100 = vmul.f32 %v5089, 0.020833334
      %v5101 = vmul.f32 %v5095, 0.020833334
      %v5102 = vadd.f32 %v5098, 1e-05
      %v5103 = vadd.f32 %v5099, 1e-05
      %v5104 = vadd.f32 %v5100, 1e-05
      %v5105 = vadd.f32 %v5101, 1e-05
      %v5106 = vrsqrt.pop %v5102
      %v5107 = vrsqrt.pop %v5103
      %v5108 = vrsqrt.pop %v5104
      %v5109 = vrsqrt.pop %v5105
      %v5111 = vsel %vm2074, %v5106, 0
      %v5114 = vsel %vm2074, %v5107, 0
      %v5117 = vsel %vm2074, %v5108, 0
      %v5120 = vsel %vm2074, %v5109, 0
      %5122 = vmatprep.subr.mxu0 0.0
      %5123 = vmatpush1.msra.mxu0 0.0
      %5124 = vmatprep.subr.mxu0 0.0
      %5125 = vmatpush1.msra.mxu0 0.0
      %5126 = vmatprep.subr.mxu0 0.0
      %5127 = vmatpush1.msra.mxu0 0.0
      %5128 = vmatprep.subr.mxu0 0.0
      %5129 = vmatpush1.msra.mxu0 0.0
      %5130 = vmatprep.subr.mxu0 0.0
      %5131 = vmatpush1.msra.mxu0 0.0
      %5132 = vmatprep.subr.mxu0 0.0
      %5133 = vmatpush1.msra.mxu0 0.0
      %5134 = vmatprep.subr.mxu0 0.0
      %5135 = vmatpush1.msra.mxu0 0.0
      %5136 = vmatprep.subr.mxu0 0.0
      %5137 = vmatpush1.msra.mxu0 0.0
      %5138 = vmatprep.subr.mxu0 0.0
      %5139 = vmatpush1.msra.mxu0 0.0
      %5140 = vmatprep.subr.mxu0 0.0
      %5141 = vmatpush1.msra.mxu0 0.0
      %5142 = vmatprep.subr.mxu0 0.0
      %5143 = vmatpush1.msra.mxu0 0.0
      %5144 = vmatprep.subr.mxu0 0.0
      %5145 = vmatpush1.msra.mxu0 0.0
      %5146 = vmatprep.subr.mxu0 0.0
      %5147 = vmatpush1.msra.mxu0 0.0
      %5148 = vmatprep.subr.mxu0 0.0
      %5149 = vmatpush1.msra.mxu0 0.0
      %5150 = vmatprep.subr.mxu0 0.0
      %5151 = vmatpush1.msra.mxu0 0.0
      %v5152 = vand.u32 %v268, 4294901760
      %5153 = vmatprep.subr.mxu0 %v5152
      %v5154 = vand.u32 %v267, 4294901760
      %5155 = vmatpush1.msra.mxu0 %v5154
      %5156 = vmatprep.subr.mxu0 0.0
      %5157 = vmatpush2.msra.mxu0 0.0
      %5158 = vmatprep.subr.mxu0 0.0
      %5159 = vmatpush2.msra.mxu0 0.0
      %5160 = vmatprep.subr.mxu0 0.0
      %5161 = vmatpush2.msra.mxu0 0.0
      %5162 = vmatprep.subr.mxu0 0.0
      %5163 = vmatpush2.msra.mxu0 0.0
      %5164 = vmatprep.subr.mxu0 0.0
      %5165 = vmatpush2.msra.mxu0 0.0
      %5166 = vmatprep.subr.mxu0 0.0
      %5167 = vmatpush2.msra.mxu0 0.0
      %5168 = vmatprep.subr.mxu0 0.0
      %5169 = vmatpush2.msra.mxu0 0.0
      %5170 = vmatprep.subr.mxu0 0.0
      %5171 = vmatpush2.msra.mxu0 0.0
      %5172 = vmatprep.subr.mxu0 0.0
      %5173 = vmatpush2.msra.mxu0 0.0
      %5174 = vmatprep.subr.mxu0 0.0
      %5175 = vmatpush2.msra.mxu0 0.0
      %5176 = vmatprep.subr.mxu0 0.0
      %5177 = vmatpush2.msra.mxu0 0.0
      %5178 = vmatprep.subr.mxu0 0.0
      %5179 = vmatpush2.msra.mxu0 0.0
      %5180 = vmatprep.subr.mxu0 0.0
      %5181 = vmatpush2.msra.mxu0 0.0
      %5182 = vmatprep.subr.mxu0 0.0
      %5183 = vmatpush2.msra.mxu0 0.0
      %5184 = vmatprep.subr.mxu0 0.0
      %5185 = vmatpush2.msra.mxu0 0.0
      %5186 = vmatprep.subr.mxu0 0.0
      %5187 = vmatpush2.msra.mxu0 0.0
      %5188 = vmatprep.mubr.f32.mxu0 0.0
      %v5189 = vand.u32 %v5111, 4294901760
      %v5190 = vsub.f32 %v5111, %v5189
      %v5191 = vand.u32 %v5190, 4294901760
      %v5192 = vsub.f32 %v5190, %v5191
      %v5193 = vand.u32 %v5192, 4294901760
      %5194 = vmatmul.mubr.f32.gmra.mxu0 %v5193
      %v5195 = vpop.f32.mrf.mxu0
      %v5196 = vadd.f32 0.0, %v5195
      %v5197 = vpop.f32.mrf.mxu0
      %v5198 = vadd.f32 0.0, %v5197
      %5199 = vmatprep.mubr.f32.mxu0 0.0
      %v5200 = vand.u32 %v5114, 4294901760
      %v5201 = vsub.f32 %v5114, %v5200
      %v5202 = vand.u32 %v5201, 4294901760
      %v5203 = vsub.f32 %v5201, %v5202
      %v5204 = vand.u32 %v5203, 4294901760
      %5205 = vmatmul.mubr.f32.gmra.mxu0 %v5204
      %v5206 = vpop.f32.mrf.mxu0
      %v5207 = vadd.f32 0.0, %v5206
      %v5208 = vpop.f32.mrf.mxu0
      %v5209 = vadd.f32 0.0, %v5208
      %5210 = vmatprep.mubr.f32.mxu0 0.0
      %v5211 = vand.u32 %v5117, 4294901760
      %v5212 = vsub.f32 %v5117, %v5211
      %v5213 = vand.u32 %v5212, 4294901760
      %v5214 = vsub.f32 %v5212, %v5213
      %v5215 = vand.u32 %v5214, 4294901760
      %5216 = vmatmul.mubr.f32.gmra.mxu0 %v5215
      %v5217 = vpop.f32.mrf.mxu0
      %v5218 = vadd.f32 0.0, %v5217
      %v5219 = vpop.f32.mrf.mxu0
      %v5220 = vadd.f32 0.0, %v5219
      %5221 = vmatprep.mubr.f32.mxu0 0.0
      %v5222 = vand.u32 %v5120, 4294901760
      %v5223 = vsub.f32 %v5120, %v5222
      %v5224 = vand.u32 %v5223, 4294901760
      %v5225 = vsub.f32 %v5223, %v5224
      %v5226 = vand.u32 %v5225, 4294901760
      %5227 = vmatmul.mubr.f32.gmra.mxu0 %v5226
      %v5228 = vpop.f32.mrf.mxu0
      %v5229 = vadd.f32 0.0, %v5228
      %v5230 = vpop.f32.mrf.mxu0
      %v5231 = vadd.f32 0.0, %v5230
      %5232 = vdwg.mxu0
      %5233 = vmatprep.subr.mxu0 0.0
      %5234 = vmatpush1.msra.mxu0 0.0
      %5235 = vmatprep.subr.mxu0 0.0
      %5236 = vmatpush1.msra.mxu0 0.0
      %5237 = vmatprep.subr.mxu0 0.0
      %5238 = vmatpush1.msra.mxu0 0.0
      %5239 = vmatprep.subr.mxu0 0.0
      %5240 = vmatpush1.msra.mxu0 0.0
      %5241 = vmatprep.subr.mxu0 0.0
      %5242 = vmatpush1.msra.mxu0 0.0
      %5243 = vmatprep.subr.mxu0 0.0
      %5244 = vmatpush1.msra.mxu0 0.0
      %5245 = vmatprep.subr.mxu0 0.0
      %5246 = vmatpush1.msra.mxu0 0.0
      %5247 = vmatprep.subr.mxu0 0.0
      %5248 = vmatpush1.msra.mxu0 0.0
      %5249 = vmatprep.subr.mxu0 0.0
      %5250 = vmatpush1.msra.mxu0 0.0
      %5251 = vmatprep.subr.mxu0 0.0
      %5252 = vmatpush1.msra.mxu0 0.0
      %5253 = vmatprep.subr.mxu0 0.0
      %5254 = vmatpush1.msra.mxu0 0.0
      %5255 = vmatprep.subr.mxu0 0.0
      %5256 = vmatpush1.msra.mxu0 0.0
      %5257 = vmatprep.subr.mxu0 0.0
      %5258 = vmatpush1.msra.mxu0 0.0
      %5259 = vmatprep.subr.mxu0 0.0
      %5260 = vmatpush1.msra.mxu0 0.0
      %5261 = vmatprep.subr.mxu0 0.0
      %5262 = vmatpush1.msra.mxu0 0.0
      %v5263 = vand.u32 %v268, 4294901760
      %v5264 = vsub.f32 %v268, %v5263
      %v5265 = vand.u32 %v5264, 4294901760
      %v5266 = vsub.f32 %v5264, %v5265
      %v5267 = vand.u32 %v5266, 4294901760
      %5268 = vmatprep.subr.mxu0 %v5267
      %v5269 = vand.u32 %v267, 4294901760
      %v5270 = vsub.f32 %v267, %v5269
      %v5271 = vand.u32 %v5270, 4294901760
      %v5272 = vsub.f32 %v5270, %v5271
      %v5273 = vand.u32 %v5272, 4294901760
      %5274 = vmatpush1.msra.mxu0 %v5273
      %5275 = vmatprep.subr.mxu0 0.0
      %5276 = vmatpush2.msra.mxu0 0.0
      %5277 = vmatprep.subr.mxu0 0.0
      %5278 = vmatpush2.msra.mxu0 0.0
      %5279 = vmatprep.subr.mxu0 0.0
      %5280 = vmatpush2.msra.mxu0 0.0
      %5281 = vmatprep.subr.mxu0 0.0
      %5282 = vmatpush2.msra.mxu0 0.0
      %5283 = vmatprep.subr.mxu0 0.0
      %5284 = vmatpush2.msra.mxu0 0.0
      %5285 = vmatprep.subr.mxu0 0.0
      %5286 = vmatpush2.msra.mxu0 0.0
      %5287 = vmatprep.subr.mxu0 0.0
      %5288 = vmatpush2.msra.mxu0 0.0
      %5289 = vmatprep.subr.mxu0 0.0
      %5290 = vmatpush2.msra.mxu0 0.0
      %5291 = vmatprep.subr.mxu0 0.0
      %5292 = vmatpush2.msra.mxu0 0.0
      %5293 = vmatprep.subr.mxu0 0.0
      %5294 = vmatpush2.msra.mxu0 0.0
      %5295 = vmatprep.subr.mxu0 0.0
      %5296 = vmatpush2.msra.mxu0 0.0
      %5297 = vmatprep.subr.mxu0 0.0
      %5298 = vmatpush2.msra.mxu0 0.0
      %5299 = vmatprep.subr.mxu0 0.0
      %5300 = vmatpush2.msra.mxu0 0.0
      %5301 = vmatprep.subr.mxu0 0.0
      %5302 = vmatpush2.msra.mxu0 0.0
      %5303 = vmatprep.subr.mxu0 0.0
      %5304 = vmatpush2.msra.mxu0 0.0
      %5305 = vmatprep.subr.mxu0 0.0
      %5306 = vmatpush2.msra.mxu0 0.0
      %5307 = vmatprep.mubr.f32.mxu0 0.0
      %v5308 = vand.u32 %v5111, 4294901760
      %5309 = vmatmul.mubr.f32.gmra.mxu0 %v5308
      %v5310 = vpop.f32.mrf.mxu0
      %v5311 = vadd.f32 %v5196, %v5310
      %v5312 = vpop.f32.mrf.mxu0
      %v5313 = vadd.f32 %v5198, %v5312
      %5314 = vmatprep.mubr.f32.mxu0 0.0
      %v5315 = vand.u32 %v5114, 4294901760
      %5316 = vmatmul.mubr.f32.gmra.mxu0 %v5315
      %v5317 = vpop.f32.mrf.mxu0
      %v5318 = vadd.f32 %v5207, %v5317
      %v5319 = vpop.f32.mrf.mxu0
      %v5320 = vadd.f32 %v5209, %v5319
      %5321 = vmatprep.mubr.f32.mxu0 0.0
      %v5322 = vand.u32 %v5117, 4294901760
      %5323 = vmatmul.mubr.f32.gmra.mxu0 %v5322
      %v5324 = vpop.f32.mrf.mxu0
      %v5325 = vadd.f32 %v5218, %v5324
      %v5326 = vpop.f32.mrf.mxu0
      %v5327 = vadd.f32 %v5220, %v5326
      %5328 = vmatprep.mubr.f32.mxu0 0.0
      %v5329 = vand.u32 %v5120, 4294901760
      %5330 = vmatmul.mubr.f32.gmra.mxu0 %v5329
      %v5331 = vpop.f32.mrf.mxu0
      %v5332 = vadd.f32 %v5229, %v5331
      %v5333 = vpop.f32.mrf.mxu0
      %v5334 = vadd.f32 %v5231, %v5333
      %5335 = vdwg.mxu0
      %5336 = vmatprep.subr.mxu0 0.0
      %5337 = vmatpush1.msra.mxu0 0.0
      %5338 = vmatprep.subr.mxu0 0.0
      %5339 = vmatpush1.msra.mxu0 0.0
      %5340 = vmatprep.subr.mxu0 0.0
      %5341 = vmatpush1.msra.mxu0 0.0
      %5342 = vmatprep.subr.mxu0 0.0
      %5343 = vmatpush1.msra.mxu0 0.0
      %5344 = vmatprep.subr.mxu0 0.0
      %5345 = vmatpush1.msra.mxu0 0.0
      %5346 = vmatprep.subr.mxu0 0.0
      %5347 = vmatpush1.msra.mxu0 0.0
      %5348 = vmatprep.subr.mxu0 0.0
      %5349 = vmatpush1.msra.mxu0 0.0
      %5350 = vmatprep.subr.mxu0 0.0
      %5351 = vmatpush1.msra.mxu0 0.0
      %5352 = vmatprep.subr.mxu0 0.0
      %5353 = vmatpush1.msra.mxu0 0.0
      %5354 = vmatprep.subr.mxu0 0.0
      %5355 = vmatpush1.msra.mxu0 0.0
      %5356 = vmatprep.subr.mxu0 0.0
      %5357 = vmatpush1.msra.mxu0 0.0
      %5358 = vmatprep.subr.mxu0 0.0
      %5359 = vmatpush1.msra.mxu0 0.0
      %5360 = vmatprep.subr.mxu0 0.0
      %5361 = vmatpush1.msra.mxu0 0.0
      %5362 = vmatprep.subr.mxu0 0.0
      %5363 = vmatpush1.msra.mxu0 0.0
      %5364 = vmatprep.subr.mxu0 0.0
      %5365 = vmatpush1.msra.mxu0 0.0
      %v5366 = vand.u32 %v268, 4294901760
      %v5367 = vsub.f32 %v268, %v5366
      %5368 = vmatprep.subr.mxu0 %v5367
      %v5369 = vand.u32 %v267, 4294901760
      %v5370 = vsub.f32 %v267, %v5369
      %5371 = vmatpush1.msra.mxu0 %v5370
      %5372 = vmatprep.subr.mxu0 0.0
      %5373 = vmatpush2.msra.mxu0 0.0
      %5374 = vmatprep.subr.mxu0 0.0
      %5375 = vmatpush2.msra.mxu0 0.0
      %5376 = vmatprep.subr.mxu0 0.0
      %5377 = vmatpush2.msra.mxu0 0.0
      %5378 = vmatprep.subr.mxu0 0.0
      %5379 = vmatpush2.msra.mxu0 0.0
      %5380 = vmatprep.subr.mxu0 0.0
      %5381 = vmatpush2.msra.mxu0 0.0
      %5382 = vmatprep.subr.mxu0 0.0
      %5383 = vmatpush2.msra.mxu0 0.0
      %5384 = vmatprep.subr.mxu0 0.0
      %5385 = vmatpush2.msra.mxu0 0.0
      %5386 = vmatprep.subr.mxu0 0.0
      %5387 = vmatpush2.msra.mxu0 0.0
      %5388 = vmatprep.subr.mxu0 0.0
      %5389 = vmatpush2.msra.mxu0 0.0
      %5390 = vmatprep.subr.mxu0 0.0
      %5391 = vmatpush2.msra.mxu0 0.0
      %5392 = vmatprep.subr.mxu0 0.0
      %5393 = vmatpush2.msra.mxu0 0.0
      %5394 = vmatprep.subr.mxu0 0.0
      %5395 = vmatpush2.msra.mxu0 0.0
      %5396 = vmatprep.subr.mxu0 0.0
      %5397 = vmatpush2.msra.mxu0 0.0
      %5398 = vmatprep.subr.mxu0 0.0
      %5399 = vmatpush2.msra.mxu0 0.0
      %5400 = vmatprep.subr.mxu0 0.0
      %5401 = vmatpush2.msra.mxu0 0.0
      %5402 = vmatprep.subr.mxu0 0.0
      %5403 = vmatpush2.msra.mxu0 0.0
      %5404 = vmatprep.mubr.f32.mxu0 0.0
      %v5405 = vand.u32 %v5111, 4294901760
      %v5406 = vsub.f32 %v5111, %v5405
      %5407 = vmatmul.mubr.f32.gmra.mxu0 %v5406
      %v5408 = vpop.f32.mrf.mxu0
      %v5409 = vadd.f32 %v5311, %v5408
      %v5410 = vpop.f32.mrf.mxu0
      %v5411 = vadd.f32 %v5313, %v5410
      %5412 = vmatprep.mubr.f32.mxu0 0.0
      %v5413 = vand.u32 %v5114, 4294901760
      %v5414 = vsub.f32 %v5114, %v5413
      %5415 = vmatmul.mubr.f32.gmra.mxu0 %v5414
      %v5416 = vpop.f32.mrf.mxu0
      %v5417 = vadd.f32 %v5318, %v5416
      %v5418 = vpop.f32.mrf.mxu0
      %v5419 = vadd.f32 %v5320, %v5418
      %5420 = vmatprep.mubr.f32.mxu0 0.0
      %v5421 = vand.u32 %v5117, 4294901760
      %v5422 = vsub.f32 %v5117, %v5421
      %5423 = vmatmul.mubr.f32.gmra.mxu0 %v5422
      %v5424 = vpop.f32.mrf.mxu0
      %v5425 = vadd.f32 %v5325, %v5424
      %v5426 = vpop.f32.mrf.mxu0
      %v5427 = vadd.f32 %v5327, %v5426
      %5428 = vmatprep.mubr.f32.mxu0 0.0
      %v5429 = vand.u32 %v5120, 4294901760
      %v5430 = vsub.f32 %v5120, %v5429
      %5431 = vmatmul.mubr.f32.gmra.mxu0 %v5430
      %v5432 = vpop.f32.mrf.mxu0
      %v5433 = vadd.f32 %v5332, %v5432
      %v5434 = vpop.f32.mrf.mxu0
      %v5435 = vadd.f32 %v5334, %v5434
      %5436 = vdwg.mxu0
      %5437 = vmatprep.subr.mxu0 0.0
      %5438 = vmatpush1.msra.mxu0 0.0
      %5439 = vmatprep.subr.mxu0 0.0
      %5440 = vmatpush1.msra.mxu0 0.0
      %5441 = vmatprep.subr.mxu0 0.0
      %5442 = vmatpush1.msra.mxu0 0.0
      %5443 = vmatprep.subr.mxu0 0.0
      %5444 = vmatpush1.msra.mxu0 0.0
      %5445 = vmatprep.subr.mxu0 0.0
      %5446 = vmatpush1.msra.mxu0 0.0
      %5447 = vmatprep.subr.mxu0 0.0
      %5448 = vmatpush1.msra.mxu0 0.0
      %5449 = vmatprep.subr.mxu0 0.0
      %5450 = vmatpush1.msra.mxu0 0.0
      %5451 = vmatprep.subr.mxu0 0.0
      %5452 = vmatpush1.msra.mxu0 0.0
      %5453 = vmatprep.subr.mxu0 0.0
      %5454 = vmatpush1.msra.mxu0 0.0
      %5455 = vmatprep.subr.mxu0 0.0
      %5456 = vmatpush1.msra.mxu0 0.0
      %5457 = vmatprep.subr.mxu0 0.0
      %5458 = vmatpush1.msra.mxu0 0.0
      %5459 = vmatprep.subr.mxu0 0.0
      %5460 = vmatpush1.msra.mxu0 0.0
      %5461 = vmatprep.subr.mxu0 0.0
      %5462 = vmatpush1.msra.mxu0 0.0
      %5463 = vmatprep.subr.mxu0 0.0
      %5464 = vmatpush1.msra.mxu0 0.0
      %5465 = vmatprep.subr.mxu0 0.0
      %5466 = vmatpush1.msra.mxu0 0.0
      %v5467 = vand.u32 %v268, 4294901760
      %5468 = vmatprep.subr.mxu0 %v5467
      %v5469 = vand.u32 %v267, 4294901760
      %5470 = vmatpush1.msra.mxu0 %v5469
      %5471 = vmatprep.subr.mxu0 0.0
      %5472 = vmatpush2.msra.mxu0 0.0
      %5473 = vmatprep.subr.mxu0 0.0
      %5474 = vmatpush2.msra.mxu0 0.0
      %5475 = vmatprep.subr.mxu0 0.0
      %5476 = vmatpush2.msra.mxu0 0.0
      %5477 = vmatprep.subr.mxu0 0.0
      %5478 = vmatpush2.msra.mxu0 0.0
      %5479 = vmatprep.subr.mxu0 0.0
      %5480 = vmatpush2.msra.mxu0 0.0
      %5481 = vmatprep.subr.mxu0 0.0
      %5482 = vmatpush2.msra.mxu0 0.0
      %5483 = vmatprep.subr.mxu0 0.0
      %5484 = vmatpush2.msra.mxu0 0.0
      %5485 = vmatprep.subr.mxu0 0.0
      %5486 = vmatpush2.msra.mxu0 0.0
      %5487 = vmatprep.subr.mxu0 0.0
      %5488 = vmatpush2.msra.mxu0 0.0
      %5489 = vmatprep.subr.mxu0 0.0
      %5490 = vmatpush2.msra.mxu0 0.0
      %5491 = vmatprep.subr.mxu0 0.0
      %5492 = vmatpush2.msra.mxu0 0.0
      %5493 = vmatprep.subr.mxu0 0.0
      %5494 = vmatpush2.msra.mxu0 0.0
      %5495 = vmatprep.subr.mxu0 0.0
      %5496 = vmatpush2.msra.mxu0 0.0
      %5497 = vmatprep.subr.mxu0 0.0
      %5498 = vmatpush2.msra.mxu0 0.0
      %5499 = vmatprep.subr.mxu0 0.0
      %5500 = vmatpush2.msra.mxu0 0.0
      %5501 = vmatprep.subr.mxu0 0.0
      %5502 = vmatpush2.msra.mxu0 0.0
      %5503 = vmatprep.mubr.f32.mxu0 0.0
      %v5504 = vand.u32 %v5111, 4294901760
      %v5505 = vsub.f32 %v5111, %v5504
      %v5506 = vand.u32 %v5505, 4294901760
      %5507 = vmatmul.mubr.f32.gmra.mxu0 %v5506
      %v5508 = vpop.f32.mrf.mxu0
      %v5509 = vadd.f32 %v5409, %v5508
      %v5510 = vpop.f32.mrf.mxu0
      %v5511 = vadd.f32 %v5411, %v5510
      %5512 = vmatprep.mubr.f32.mxu0 0.0
      %v5513 = vand.u32 %v5114, 4294901760
      %v5514 = vsub.f32 %v5114, %v5513
      %v5515 = vand.u32 %v5514, 4294901760
      %5516 = vmatmul.mubr.f32.gmra.mxu0 %v5515
      %v5517 = vpop.f32.mrf.mxu0
      %v5518 = vadd.f32 %v5417, %v5517
      %v5519 = vpop.f32.mrf.mxu0
      %v5520 = vadd.f32 %v5419, %v5519
      %5521 = vmatprep.mubr.f32.mxu0 0.0
      %v5522 = vand.u32 %v5117, 4294901760
      %v5523 = vsub.f32 %v5117, %v5522
      %v5524 = vand.u32 %v5523, 4294901760
      %5525 = vmatmul.mubr.f32.gmra.mxu0 %v5524
      %v5526 = vpop.f32.mrf.mxu0
      %v5527 = vadd.f32 %v5425, %v5526
      %v5528 = vpop.f32.mrf.mxu0
      %v5529 = vadd.f32 %v5427, %v5528
      %5530 = vmatprep.mubr.f32.mxu0 0.0
      %v5531 = vand.u32 %v5120, 4294901760
      %v5532 = vsub.f32 %v5120, %v5531
      %v5533 = vand.u32 %v5532, 4294901760
      %5534 = vmatmul.mubr.f32.gmra.mxu0 %v5533
      %v5535 = vpop.f32.mrf.mxu0
      %v5536 = vadd.f32 %v5433, %v5535
      %v5537 = vpop.f32.mrf.mxu0
      %v5538 = vadd.f32 %v5435, %v5537
      %5539 = vdwg.mxu0
      %5540 = vmatprep.subr.mxu0 0.0
      %5541 = vmatpush1.msra.mxu0 0.0
      %5542 = vmatprep.subr.mxu0 0.0
      %5543 = vmatpush1.msra.mxu0 0.0
      %5544 = vmatprep.subr.mxu0 0.0
      %5545 = vmatpush1.msra.mxu0 0.0
      %5546 = vmatprep.subr.mxu0 0.0
      %5547 = vmatpush1.msra.mxu0 0.0
      %5548 = vmatprep.subr.mxu0 0.0
      %5549 = vmatpush1.msra.mxu0 0.0
      %5550 = vmatprep.subr.mxu0 0.0
      %5551 = vmatpush1.msra.mxu0 0.0
      %5552 = vmatprep.subr.mxu0 0.0
      %5553 = vmatpush1.msra.mxu0 0.0
      %5554 = vmatprep.subr.mxu0 0.0
      %5555 = vmatpush1.msra.mxu0 0.0
      %5556 = vmatprep.subr.mxu0 0.0
      %5557 = vmatpush1.msra.mxu0 0.0
      %5558 = vmatprep.subr.mxu0 0.0
      %5559 = vmatpush1.msra.mxu0 0.0
      %5560 = vmatprep.subr.mxu0 0.0
      %5561 = vmatpush1.msra.mxu0 0.0
      %5562 = vmatprep.subr.mxu0 0.0
      %5563 = vmatpush1.msra.mxu0 0.0
      %5564 = vmatprep.subr.mxu0 0.0
      %5565 = vmatpush1.msra.mxu0 0.0
      %5566 = vmatprep.subr.mxu0 0.0
      %5567 = vmatpush1.msra.mxu0 0.0
      %5568 = vmatprep.subr.mxu0 0.0
      %5569 = vmatpush1.msra.mxu0 0.0
      %v5570 = vand.u32 %v268, 4294901760
      %v5571 = vsub.f32 %v268, %v5570
      %v5572 = vand.u32 %v5571, 4294901760
      %5573 = vmatprep.subr.mxu0 %v5572
      %v5574 = vand.u32 %v267, 4294901760
      %v5575 = vsub.f32 %v267, %v5574
      %v5576 = vand.u32 %v5575, 4294901760
      %5577 = vmatpush1.msra.mxu0 %v5576
      %5578 = vmatprep.subr.mxu0 0.0
      %5579 = vmatpush2.msra.mxu0 0.0
      %5580 = vmatprep.subr.mxu0 0.0
      %5581 = vmatpush2.msra.mxu0 0.0
      %5582 = vmatprep.subr.mxu0 0.0
      %5583 = vmatpush2.msra.mxu0 0.0
      %5584 = vmatprep.subr.mxu0 0.0
      %5585 = vmatpush2.msra.mxu0 0.0
      %5586 = vmatprep.subr.mxu0 0.0
      %5587 = vmatpush2.msra.mxu0 0.0
      %5588 = vmatprep.subr.mxu0 0.0
      %5589 = vmatpush2.msra.mxu0 0.0
      %5590 = vmatprep.subr.mxu0 0.0
      %5591 = vmatpush2.msra.mxu0 0.0
      %5592 = vmatprep.subr.mxu0 0.0
      %5593 = vmatpush2.msra.mxu0 0.0
      %5594 = vmatprep.subr.mxu0 0.0
      %5595 = vmatpush2.msra.mxu0 0.0
      %5596 = vmatprep.subr.mxu0 0.0
      %5597 = vmatpush2.msra.mxu0 0.0
      %5598 = vmatprep.subr.mxu0 0.0
      %5599 = vmatpush2.msra.mxu0 0.0
      %5600 = vmatprep.subr.mxu0 0.0
      %5601 = vmatpush2.msra.mxu0 0.0
      %5602 = vmatprep.subr.mxu0 0.0
      %5603 = vmatpush2.msra.mxu0 0.0
      %5604 = vmatprep.subr.mxu0 0.0
      %5605 = vmatpush2.msra.mxu0 0.0
      %5606 = vmatprep.subr.mxu0 0.0
      %5607 = vmatpush2.msra.mxu0 0.0
      %5608 = vmatprep.subr.mxu0 0.0
      %5609 = vmatpush2.msra.mxu0 0.0
      %5610 = vmatprep.mubr.f32.mxu0 0.0
      %v5611 = vand.u32 %v5111, 4294901760
      %5612 = vmatmul.mubr.f32.gmra.mxu0 %v5611
      %v5613 = vpop.f32.mrf.mxu0
      %v5614 = vadd.f32 %v5509, %v5613
      %v5615 = vpop.f32.mrf.mxu0
      %v5616 = vadd.f32 %v5511, %v5615
      %5617 = vmatprep.mubr.f32.mxu0 0.0
      %v5618 = vand.u32 %v5114, 4294901760
      %5619 = vmatmul.mubr.f32.gmra.mxu0 %v5618
      %v5620 = vpop.f32.mrf.mxu0
      %v5621 = vadd.f32 %v5518, %v5620
      %v5622 = vpop.f32.mrf.mxu0
      %v5623 = vadd.f32 %v5520, %v5622
      %5624 = vmatprep.mubr.f32.mxu0 0.0
      %v5625 = vand.u32 %v5117, 4294901760
      %5626 = vmatmul.mubr.f32.gmra.mxu0 %v5625
      %v5627 = vpop.f32.mrf.mxu0
      %v5628 = vadd.f32 %v5527, %v5627
      %v5629 = vpop.f32.mrf.mxu0
      %v5630 = vadd.f32 %v5529, %v5629
      %5631 = vmatprep.mubr.f32.mxu0 0.0
      %v5632 = vand.u32 %v5120, 4294901760
      %5633 = vmatmul.mubr.f32.gmra.mxu0 %v5632
      %v5634 = vpop.f32.mrf.mxu0
      %v5635 = vadd.f32 %v5536, %v5634
      %v5636 = vpop.f32.mrf.mxu0
      %v5637 = vadd.f32 %v5538, %v5636
      %5638 = vdwg.mxu0
      %5639 = vmatprep.subr.mxu0 0.0
      %5640 = vmatpush1.msra.mxu0 0.0
      %5641 = vmatprep.subr.mxu0 0.0
      %5642 = vmatpush1.msra.mxu0 0.0
      %5643 = vmatprep.subr.mxu0 0.0
      %5644 = vmatpush1.msra.mxu0 0.0
      %5645 = vmatprep.subr.mxu0 0.0
      %5646 = vmatpush1.msra.mxu0 0.0
      %5647 = vmatprep.subr.mxu0 0.0
      %5648 = vmatpush1.msra.mxu0 0.0
      %5649 = vmatprep.subr.mxu0 0.0
      %5650 = vmatpush1.msra.mxu0 0.0
      %5651 = vmatprep.subr.mxu0 0.0
      %5652 = vmatpush1.msra.mxu0 0.0
      %5653 = vmatprep.subr.mxu0 0.0
      %5654 = vmatpush1.msra.mxu0 0.0
      %5655 = vmatprep.subr.mxu0 0.0
      %5656 = vmatpush1.msra.mxu0 0.0
      %5657 = vmatprep.subr.mxu0 0.0
      %5658 = vmatpush1.msra.mxu0 0.0
      %5659 = vmatprep.subr.mxu0 0.0
      %5660 = vmatpush1.msra.mxu0 0.0
      %5661 = vmatprep.subr.mxu0 0.0
      %5662 = vmatpush1.msra.mxu0 0.0
      %5663 = vmatprep.subr.mxu0 0.0
      %5664 = vmatpush1.msra.mxu0 0.0
      %5665 = vmatprep.subr.mxu0 0.0
      %5666 = vmatpush1.msra.mxu0 0.0
      %5667 = vmatprep.subr.mxu0 0.0
      %5668 = vmatpush1.msra.mxu0 0.0
      %v5669 = vand.u32 %v268, 4294901760
      %5670 = vmatprep.subr.mxu0 %v5669
      %v5671 = vand.u32 %v267, 4294901760
      %5672 = vmatpush1.msra.mxu0 %v5671
      %5673 = vmatprep.subr.mxu0 0.0
      %5674 = vmatpush2.msra.mxu0 0.0
      %5675 = vmatprep.subr.mxu0 0.0
      %5676 = vmatpush2.msra.mxu0 0.0
      %5677 = vmatprep.subr.mxu0 0.0
      %5678 = vmatpush2.msra.mxu0 0.0
      %5679 = vmatprep.subr.mxu0 0.0
      %5680 = vmatpush2.msra.mxu0 0.0
      %5681 = vmatprep.subr.mxu0 0.0
      %5682 = vmatpush2.msra.mxu0 0.0
      %5683 = vmatprep.subr.mxu0 0.0
      %5684 = vmatpush2.msra.mxu0 0.0
      %5685 = vmatprep.subr.mxu0 0.0
      %5686 = vmatpush2.msra.mxu0 0.0
      %5687 = vmatprep.subr.mxu0 0.0
      %5688 = vmatpush2.msra.mxu0 0.0
      %5689 = vmatprep.subr.mxu0 0.0
      %5690 = vmatpush2.msra.mxu0 0.0
      %5691 = vmatprep.subr.mxu0 0.0
      %5692 = vmatpush2.msra.mxu0 0.0
      %5693 = vmatprep.subr.mxu0 0.0
      %5694 = vmatpush2.msra.mxu0 0.0
      %5695 = vmatprep.subr.mxu0 0.0
      %5696 = vmatpush2.msra.mxu0 0.0
      %5697 = vmatprep.subr.mxu0 0.0
      %5698 = vmatpush2.msra.mxu0 0.0
      %5699 = vmatprep.subr.mxu0 0.0
      %5700 = vmatpush2.msra.mxu0 0.0
      %5701 = vmatprep.subr.mxu0 0.0
      %5702 = vmatpush2.msra.mxu0 0.0
      %5703 = vmatprep.subr.mxu0 0.0
      %5704 = vmatpush2.msra.mxu0 0.0
      %5705 = vmatprep.mubr.f32.mxu0 0.0
      %v5706 = vand.u32 %v5111, 4294901760
      %5707 = vmatmul.mubr.f32.gmra.mxu0 %v5706
      %v5708 = vpop.f32.mrf.mxu0
      %v5709 = vadd.f32 %v5614, %v5708
      %v5710 = vpop.f32.mrf.mxu0
      %v5711 = vadd.f32 %v5616, %v5710
      %5712 = vmatprep.mubr.f32.mxu0 0.0
      %v5713 = vand.u32 %v5114, 4294901760
      %5714 = vmatmul.mubr.f32.gmra.mxu0 %v5713
      %v5715 = vpop.f32.mrf.mxu0
      %v5716 = vadd.f32 %v5621, %v5715
      %v5717 = vpop.f32.mrf.mxu0
      %v5718 = vadd.f32 %v5623, %v5717
      %5719 = vmatprep.mubr.f32.mxu0 0.0
      %v5720 = vand.u32 %v5117, 4294901760
      %5721 = vmatmul.mubr.f32.gmra.mxu0 %v5720
      %v5722 = vpop.f32.mrf.mxu0
      %v5723 = vadd.f32 %v5628, %v5722
      %v5724 = vpop.f32.mrf.mxu0
      %v5725 = vadd.f32 %v5630, %v5724
      %5726 = vmatprep.mubr.f32.mxu0 0.0
      %v5727 = vand.u32 %v5120, 4294901760
      %5728 = vmatmul.mubr.f32.gmra.mxu0 %v5727
      %v5729 = vpop.f32.mrf.mxu0
      %v5730 = vadd.f32 %v5635, %v5729
      %v5731 = vpop.f32.mrf.mxu0
      %v5732 = vadd.f32 %v5637, %v5731
      %5733 = vdwg.mxu0
      %5734 = vmatprep.subr.mxu0 0.0
      %5735 = vmatpush1.msra.mxu0 0.0
      %5736 = vmatprep.subr.mxu0 0.0
      %5737 = vmatpush1.msra.mxu0 0.0
      %5738 = vmatprep.subr.mxu0 0.0
      %5739 = vmatpush1.msra.mxu0 0.0
      %5740 = vmatprep.subr.mxu0 0.0
      %5741 = vmatpush1.msra.mxu0 0.0
      %5742 = vmatprep.subr.mxu0 0.0
      %5743 = vmatpush1.msra.mxu0 0.0
      %5744 = vmatprep.subr.mxu0 0.0
      %5745 = vmatpush1.msra.mxu0 0.0
      %5746 = vmatprep.subr.mxu0 0.0
      %5747 = vmatpush1.msra.mxu0 0.0
      %5748 = vmatprep.subr.mxu0 0.0
      %5749 = vmatpush1.msra.mxu0 0.0
      %5750 = vmatprep.subr.mxu0 0.0
      %5751 = vmatpush1.msra.mxu0 0.0
      %5752 = vmatprep.subr.mxu0 0.0
      %5753 = vmatpush1.msra.mxu0 0.0
      %5754 = vmatprep.subr.mxu0 0.0
      %5755 = vmatpush1.msra.mxu0 0.0
      %5756 = vmatprep.subr.mxu0 0.0
      %5757 = vmatpush1.msra.mxu0 0.0
      %5758 = vmatprep.subr.mxu0 0.0
      %5759 = vmatpush1.msra.mxu0 0.0
      %5760 = vmatprep.subr.mxu0 0.0
      %5761 = vmatpush1.msra.mxu0 0.0
      %5762 = vmatprep.subr.mxu0 0.0
      %5763 = vmatpush1.msra.mxu0 0.0
      %5764 = vmatprep.subr.mxu0 0.0
      %v5765 = vand.u32 %v269, 4294901760
      %5766 = vmatpush1.msra.mxu0 %v5765
      %5767 = vmatprep.subr.mxu0 0.0
      %5768 = vmatpush2.msra.mxu0 0.0
      %5769 = vmatprep.subr.mxu0 0.0
      %5770 = vmatpush2.msra.mxu0 0.0
      %5771 = vmatprep.subr.mxu0 0.0
      %5772 = vmatpush2.msra.mxu0 0.0
      %5773 = vmatprep.subr.mxu0 0.0
      %5774 = vmatpush2.msra.mxu0 0.0
      %5775 = vmatprep.subr.mxu0 0.0
      %5776 = vmatpush2.msra.mxu0 0.0
      %5777 = vmatprep.subr.mxu0 0.0
      %5778 = vmatpush2.msra.mxu0 0.0
      %5779 = vmatprep.subr.mxu0 0.0
      %5780 = vmatpush2.msra.mxu0 0.0
      %5781 = vmatprep.subr.mxu0 0.0
      %5782 = vmatpush2.msra.mxu0 0.0
      %5783 = vmatprep.subr.mxu0 0.0
      %5784 = vmatpush2.msra.mxu0 0.0
      %5785 = vmatprep.subr.mxu0 0.0
      %5786 = vmatpush2.msra.mxu0 0.0
      %5787 = vmatprep.subr.mxu0 0.0
      %5788 = vmatpush2.msra.mxu0 0.0
      %5789 = vmatprep.subr.mxu0 0.0
      %5790 = vmatpush2.msra.mxu0 0.0
      %5791 = vmatprep.subr.mxu0 0.0
      %5792 = vmatpush2.msra.mxu0 0.0
      %5793 = vmatprep.subr.mxu0 0.0
      %5794 = vmatpush2.msra.mxu0 0.0
      %5795 = vmatprep.subr.mxu0 0.0
      %5796 = vmatpush2.msra.mxu0 0.0
      %5797 = vmatprep.subr.mxu0 0.0
      %5798 = vmatpush2.msra.mxu0 0.0
      %5799 = vmatprep.mubr.f32.mxu0 0.0
      %v5800 = vand.u32 %v5111, 4294901760
      %v5801 = vsub.f32 %v5111, %v5800
      %v5802 = vand.u32 %v5801, 4294901760
      %v5803 = vsub.f32 %v5801, %v5802
      %v5804 = vand.u32 %v5803, 4294901760
      %5805 = vmatmul.mubr.f32.gmra.mxu0 %v5804
      %v5806 = vpop.f32.mrf.mxu0
      %v5807 = vadd.f32 0.0, %v5806
      %v5808 = vpop.f32.mrf.mxu0
      %5809 = vmatprep.mubr.f32.mxu0 0.0
      %v5810 = vand.u32 %v5114, 4294901760
      %v5811 = vsub.f32 %v5114, %v5810
      %v5812 = vand.u32 %v5811, 4294901760
      %v5813 = vsub.f32 %v5811, %v5812
      %v5814 = vand.u32 %v5813, 4294901760
      %5815 = vmatmul.mubr.f32.gmra.mxu0 %v5814
      %v5816 = vpop.f32.mrf.mxu0
      %v5817 = vadd.f32 0.0, %v5816
      %v5818 = vpop.f32.mrf.mxu0
      %5819 = vmatprep.mubr.f32.mxu0 0.0
      %v5820 = vand.u32 %v5117, 4294901760
      %v5821 = vsub.f32 %v5117, %v5820
      %v5822 = vand.u32 %v5821, 4294901760
      %v5823 = vsub.f32 %v5821, %v5822
      %v5824 = vand.u32 %v5823, 4294901760
      %5825 = vmatmul.mubr.f32.gmra.mxu0 %v5824
      %v5826 = vpop.f32.mrf.mxu0
      %v5827 = vadd.f32 0.0, %v5826
      %v5828 = vpop.f32.mrf.mxu0
      %5829 = vmatprep.mubr.f32.mxu0 0.0
      %v5830 = vand.u32 %v5120, 4294901760
      %v5831 = vsub.f32 %v5120, %v5830
      %v5832 = vand.u32 %v5831, 4294901760
      %v5833 = vsub.f32 %v5831, %v5832
      %v5834 = vand.u32 %v5833, 4294901760
      %5835 = vmatmul.mubr.f32.gmra.mxu0 %v5834
      %v5836 = vpop.f32.mrf.mxu0
      %v5837 = vadd.f32 0.0, %v5836
      %v5838 = vpop.f32.mrf.mxu0
      %5839 = vdwg.mxu0
      %5840 = vmatprep.subr.mxu0 0.0
      %5841 = vmatpush1.msra.mxu0 0.0
      %5842 = vmatprep.subr.mxu0 0.0
      %5843 = vmatpush1.msra.mxu0 0.0
      %5844 = vmatprep.subr.mxu0 0.0
      %5845 = vmatpush1.msra.mxu0 0.0
      %5846 = vmatprep.subr.mxu0 0.0
      %5847 = vmatpush1.msra.mxu0 0.0
      %5848 = vmatprep.subr.mxu0 0.0
      %5849 = vmatpush1.msra.mxu0 0.0
      %5850 = vmatprep.subr.mxu0 0.0
      %5851 = vmatpush1.msra.mxu0 0.0
      %5852 = vmatprep.subr.mxu0 0.0
      %5853 = vmatpush1.msra.mxu0 0.0
      %5854 = vmatprep.subr.mxu0 0.0
      %5855 = vmatpush1.msra.mxu0 0.0
      %5856 = vmatprep.subr.mxu0 0.0
      %5857 = vmatpush1.msra.mxu0 0.0
      %5858 = vmatprep.subr.mxu0 0.0
      %5859 = vmatpush1.msra.mxu0 0.0
      %5860 = vmatprep.subr.mxu0 0.0
      %5861 = vmatpush1.msra.mxu0 0.0
      %5862 = vmatprep.subr.mxu0 0.0
      %5863 = vmatpush1.msra.mxu0 0.0
      %5864 = vmatprep.subr.mxu0 0.0
      %5865 = vmatpush1.msra.mxu0 0.0
      %5866 = vmatprep.subr.mxu0 0.0
      %5867 = vmatpush1.msra.mxu0 0.0
      %5868 = vmatprep.subr.mxu0 0.0
      %5869 = vmatpush1.msra.mxu0 0.0
      %5870 = vmatprep.subr.mxu0 0.0
      %v5871 = vand.u32 %v269, 4294901760
      %v5872 = vsub.f32 %v269, %v5871
      %v5873 = vand.u32 %v5872, 4294901760
      %v5874 = vsub.f32 %v5872, %v5873
      %v5875 = vand.u32 %v5874, 4294901760
      %5876 = vmatpush1.msra.mxu0 %v5875
      %5877 = vmatprep.subr.mxu0 0.0
      %5878 = vmatpush2.msra.mxu0 0.0
      %5879 = vmatprep.subr.mxu0 0.0
      %5880 = vmatpush2.msra.mxu0 0.0
      %5881 = vmatprep.subr.mxu0 0.0
      %5882 = vmatpush2.msra.mxu0 0.0
      %5883 = vmatprep.subr.mxu0 0.0
      %5884 = vmatpush2.msra.mxu0 0.0
      %5885 = vmatprep.subr.mxu0 0.0
      %5886 = vmatpush2.msra.mxu0 0.0
      %5887 = vmatprep.subr.mxu0 0.0
      %5888 = vmatpush2.msra.mxu0 0.0
      %5889 = vmatprep.subr.mxu0 0.0
      %5890 = vmatpush2.msra.mxu0 0.0
      %5891 = vmatprep.subr.mxu0 0.0
      %5892 = vmatpush2.msra.mxu0 0.0
      %5893 = vmatprep.subr.mxu0 0.0
      %5894 = vmatpush2.msra.mxu0 0.0
      %5895 = vmatprep.subr.mxu0 0.0
      %5896 = vmatpush2.msra.mxu0 0.0
      %5897 = vmatprep.subr.mxu0 0.0
      %5898 = vmatpush2.msra.mxu0 0.0
      %5899 = vmatprep.subr.mxu0 0.0
      %5900 = vmatpush2.msra.mxu0 0.0
      %5901 = vmatprep.subr.mxu0 0.0
      %5902 = vmatpush2.msra.mxu0 0.0
      %5903 = vmatprep.subr.mxu0 0.0
      %5904 = vmatpush2.msra.mxu0 0.0
      %5905 = vmatprep.subr.mxu0 0.0
      %5906 = vmatpush2.msra.mxu0 0.0
      %5907 = vmatprep.subr.mxu0 0.0
      %5908 = vmatpush2.msra.mxu0 0.0
      %5909 = vmatprep.mubr.f32.mxu0 0.0
      %v5910 = vand.u32 %v5111, 4294901760
      %5911 = vmatmul.mubr.f32.gmra.mxu0 %v5910
      %v5912 = vpop.f32.mrf.mxu0
      %v5913 = vadd.f32 %v5807, %v5912
      %v5914 = vpop.f32.mrf.mxu0
      %5915 = vmatprep.mubr.f32.mxu0 0.0
      %v5916 = vand.u32 %v5114, 4294901760
      %5917 = vmatmul.mubr.f32.gmra.mxu0 %v5916
      %v5918 = vpop.f32.mrf.mxu0
      %v5919 = vadd.f32 %v5817, %v5918
      %v5920 = vpop.f32.mrf.mxu0
      %5921 = vmatprep.mubr.f32.mxu0 0.0
      %v5922 = vand.u32 %v5117, 4294901760
      %5923 = vmatmul.mubr.f32.gmra.mxu0 %v5922
      %v5924 = vpop.f32.mrf.mxu0
      %v5925 = vadd.f32 %v5827, %v5924
      %v5926 = vpop.f32.mrf.mxu0
      %5927 = vmatprep.mubr.f32.mxu0 0.0
      %v5928 = vand.u32 %v5120, 4294901760
      %5929 = vmatmul.mubr.f32.gmra.mxu0 %v5928
      %v5930 = vpop.f32.mrf.mxu0
      %v5931 = vadd.f32 %v5837, %v5930
      %v5932 = vpop.f32.mrf.mxu0
      %5933 = vdwg.mxu0
      %5934 = vmatprep.subr.mxu0 0.0
      %5935 = vmatpush1.msra.mxu0 0.0
      %5936 = vmatprep.subr.mxu0 0.0
      %5937 = vmatpush1.msra.mxu0 0.0
      %5938 = vmatprep.subr.mxu0 0.0
      %5939 = vmatpush1.msra.mxu0 0.0
      %5940 = vmatprep.subr.mxu0 0.0
      %5941 = vmatpush1.msra.mxu0 0.0
      %5942 = vmatprep.subr.mxu0 0.0
      %5943 = vmatpush1.msra.mxu0 0.0
      %5944 = vmatprep.subr.mxu0 0.0
      %5945 = vmatpush1.msra.mxu0 0.0
      %5946 = vmatprep.subr.mxu0 0.0
      %5947 = vmatpush1.msra.mxu0 0.0
      %5948 = vmatprep.subr.mxu0 0.0
      %5949 = vmatpush1.msra.mxu0 0.0
      %5950 = vmatprep.subr.mxu0 0.0
      %5951 = vmatpush1.msra.mxu0 0.0
      %5952 = vmatprep.subr.mxu0 0.0
      %5953 = vmatpush1.msra.mxu0 0.0
      %5954 = vmatprep.subr.mxu0 0.0
      %5955 = vmatpush1.msra.mxu0 0.0
      %5956 = vmatprep.subr.mxu0 0.0
      %5957 = vmatpush1.msra.mxu0 0.0
      %5958 = vmatprep.subr.mxu0 0.0
      %5959 = vmatpush1.msra.mxu0 0.0
      %5960 = vmatprep.subr.mxu0 0.0
      %5961 = vmatpush1.msra.mxu0 0.0
      %5962 = vmatprep.subr.mxu0 0.0
      %5963 = vmatpush1.msra.mxu0 0.0
      %5964 = vmatprep.subr.mxu0 0.0
      %v5965 = vand.u32 %v269, 4294901760
      %v5966 = vsub.f32 %v269, %v5965
      %5967 = vmatpush1.msra.mxu0 %v5966
      %5968 = vmatprep.subr.mxu0 0.0
      %5969 = vmatpush2.msra.mxu0 0.0
      %5970 = vmatprep.subr.mxu0 0.0
      %5971 = vmatpush2.msra.mxu0 0.0
      %5972 = vmatprep.subr.mxu0 0.0
      %5973 = vmatpush2.msra.mxu0 0.0
      %5974 = vmatprep.subr.mxu0 0.0
      %5975 = vmatpush2.msra.mxu0 0.0
      %5976 = vmatprep.subr.mxu0 0.0
      %5977 = vmatpush2.msra.mxu0 0.0
      %5978 = vmatprep.subr.mxu0 0.0
      %5979 = vmatpush2.msra.mxu0 0.0
      %5980 = vmatprep.subr.mxu0 0.0
      %5981 = vmatpush2.msra.mxu0 0.0
      %5982 = vmatprep.subr.mxu0 0.0
      %5983 = vmatpush2.msra.mxu0 0.0
      %5984 = vmatprep.subr.mxu0 0.0
      %5985 = vmatpush2.msra.mxu0 0.0
      %5986 = vmatprep.subr.mxu0 0.0
      %5987 = vmatpush2.msra.mxu0 0.0
      %5988 = vmatprep.subr.mxu0 0.0
      %5989 = vmatpush2.msra.mxu0 0.0
      %5990 = vmatprep.subr.mxu0 0.0
      %5991 = vmatpush2.msra.mxu0 0.0
      %5992 = vmatprep.subr.mxu0 0.0
      %5993 = vmatpush2.msra.mxu0 0.0
      %5994 = vmatprep.subr.mxu0 0.0
      %5995 = vmatpush2.msra.mxu0 0.0
      %5996 = vmatprep.subr.mxu0 0.0
      %5997 = vmatpush2.msra.mxu0 0.0
      %5998 = vmatprep.subr.mxu0 0.0
      %5999 = vmatpush2.msra.mxu0 0.0
      %6000 = vmatprep.mubr.f32.mxu0 0.0
      %v6001 = vand.u32 %v5111, 4294901760
      %v6002 = vsub.f32 %v5111, %v6001
      %6003 = vmatmul.mubr.f32.gmra.mxu0 %v6002
      %v6004 = vpop.f32.mrf.mxu0
      %v6005 = vadd.f32 %v5913, %v6004
      %v6006 = vpop.f32.mrf.mxu0
      %6007 = vmatprep.mubr.f32.mxu0 0.0
      %v6008 = vand.u32 %v5114, 4294901760
      %v6009 = vsub.f32 %v5114, %v6008
      %6010 = vmatmul.mubr.f32.gmra.mxu0 %v6009
      %v6011 = vpop.f32.mrf.mxu0
      %v6012 = vadd.f32 %v5919, %v6011
      %v6013 = vpop.f32.mrf.mxu0
      %6014 = vmatprep.mubr.f32.mxu0 0.0
      %v6015 = vand.u32 %v5117, 4294901760
      %v6016 = vsub.f32 %v5117, %v6015
      %6017 = vmatmul.mubr.f32.gmra.mxu0 %v6016
      %v6018 = vpop.f32.mrf.mxu0
      %v6019 = vadd.f32 %v5925, %v6018
      %v6020 = vpop.f32.mrf.mxu0
      %6021 = vmatprep.mubr.f32.mxu0 0.0
      %v6022 = vand.u32 %v5120, 4294901760
      %v6023 = vsub.f32 %v5120, %v6022
      %6024 = vmatmul.mubr.f32.gmra.mxu0 %v6023
      %v6025 = vpop.f32.mrf.mxu0
      %v6026 = vadd.f32 %v5931, %v6025
      %v6027 = vpop.f32.mrf.mxu0
      %6028 = vdwg.mxu0
      %6029 = vmatprep.subr.mxu0 0.0
      %6030 = vmatpush1.msra.mxu0 0.0
      %6031 = vmatprep.subr.mxu0 0.0
      %6032 = vmatpush1.msra.mxu0 0.0
      %6033 = vmatprep.subr.mxu0 0.0
      %6034 = vmatpush1.msra.mxu0 0.0
      %6035 = vmatprep.subr.mxu0 0.0
      %6036 = vmatpush1.msra.mxu0 0.0
      %6037 = vmatprep.subr.mxu0 0.0
      %6038 = vmatpush1.msra.mxu0 0.0
      %6039 = vmatprep.subr.mxu0 0.0
      %6040 = vmatpush1.msra.mxu0 0.0
      %6041 = vmatprep.subr.mxu0 0.0
      %6042 = vmatpush1.msra.mxu0 0.0
      %6043 = vmatprep.subr.mxu0 0.0
      %6044 = vmatpush1.msra.mxu0 0.0
      %6045 = vmatprep.subr.mxu0 0.0
      %6046 = vmatpush1.msra.mxu0 0.0
      %6047 = vmatprep.subr.mxu0 0.0
      %6048 = vmatpush1.msra.mxu0 0.0
      %6049 = vmatprep.subr.mxu0 0.0
      %6050 = vmatpush1.msra.mxu0 0.0
      %6051 = vmatprep.subr.mxu0 0.0
      %6052 = vmatpush1.msra.mxu0 0.0
      %6053 = vmatprep.subr.mxu0 0.0
      %6054 = vmatpush1.msra.mxu0 0.0
      %6055 = vmatprep.subr.mxu0 0.0
      %6056 = vmatpush1.msra.mxu0 0.0
      %6057 = vmatprep.subr.mxu0 0.0
      %6058 = vmatpush1.msra.mxu0 0.0
      %6059 = vmatprep.subr.mxu0 0.0
      %v6060 = vand.u32 %v269, 4294901760
      %6061 = vmatpush1.msra.mxu0 %v6060
      %6062 = vmatprep.subr.mxu0 0.0
      %6063 = vmatpush2.msra.mxu0 0.0
      %6064 = vmatprep.subr.mxu0 0.0
      %6065 = vmatpush2.msra.mxu0 0.0
      %6066 = vmatprep.subr.mxu0 0.0
      %6067 = vmatpush2.msra.mxu0 0.0
      %6068 = vmatprep.subr.mxu0 0.0
      %6069 = vmatpush2.msra.mxu0 0.0
      %6070 = vmatprep.subr.mxu0 0.0
      %6071 = vmatpush2.msra.mxu0 0.0
      %6072 = vmatprep.subr.mxu0 0.0
      %6073 = vmatpush2.msra.mxu0 0.0
      %6074 = vmatprep.subr.mxu0 0.0
      %6075 = vmatpush2.msra.mxu0 0.0
      %6076 = vmatprep.subr.mxu0 0.0
      %6077 = vmatpush2.msra.mxu0 0.0
      %6078 = vmatprep.subr.mxu0 0.0
      %6079 = vmatpush2.msra.mxu0 0.0
      %6080 = vmatprep.subr.mxu0 0.0
      %6081 = vmatpush2.msra.mxu0 0.0
      %6082 = vmatprep.subr.mxu0 0.0
      %6083 = vmatpush2.msra.mxu0 0.0
      %6084 = vmatprep.subr.mxu0 0.0
      %6085 = vmatpush2.msra.mxu0 0.0
      %6086 = vmatprep.subr.mxu0 0.0
      %6087 = vmatpush2.msra.mxu0 0.0
      %6088 = vmatprep.subr.mxu0 0.0
      %6089 = vmatpush2.msra.mxu0 0.0
      %6090 = vmatprep.subr.mxu0 0.0
      %6091 = vmatpush2.msra.mxu0 0.0
      %6092 = vmatprep.subr.mxu0 0.0
      %6093 = vmatpush2.msra.mxu0 0.0
      %6094 = vmatprep.mubr.f32.mxu0 0.0
      %v6095 = vand.u32 %v5111, 4294901760
      %v6096 = vsub.f32 %v5111, %v6095
      %v6097 = vand.u32 %v6096, 4294901760
      %6098 = vmatmul.mubr.f32.gmra.mxu0 %v6097
      %v6099 = vpop.f32.mrf.mxu0
      %v6100 = vadd.f32 %v6005, %v6099
      %v6101 = vpop.f32.mrf.mxu0
      %6102 = vmatprep.mubr.f32.mxu0 0.0
      %v6103 = vand.u32 %v5114, 4294901760
      %v6104 = vsub.f32 %v5114, %v6103
      %v6105 = vand.u32 %v6104, 4294901760
      %6106 = vmatmul.mubr.f32.gmra.mxu0 %v6105
      %v6107 = vpop.f32.mrf.mxu0
      %v6108 = vadd.f32 %v6012, %v6107
      %v6109 = vpop.f32.mrf.mxu0
      %6110 = vmatprep.mubr.f32.mxu0 0.0
      %v6111 = vand.u32 %v5117, 4294901760
      %v6112 = vsub.f32 %v5117, %v6111
      %v6113 = vand.u32 %v6112, 4294901760
      %6114 = vmatmul.mubr.f32.gmra.mxu0 %v6113
      %v6115 = vpop.f32.mrf.mxu0
      %v6116 = vadd.f32 %v6019, %v6115
      %v6117 = vpop.f32.mrf.mxu0
      %6118 = vmatprep.mubr.f32.mxu0 0.0
      %v6119 = vand.u32 %v5120, 4294901760
      %v6120 = vsub.f32 %v5120, %v6119
      %v6121 = vand.u32 %v6120, 4294901760
      %6122 = vmatmul.mubr.f32.gmra.mxu0 %v6121
      %v6123 = vpop.f32.mrf.mxu0
      %v6124 = vadd.f32 %v6026, %v6123
      %v6125 = vpop.f32.mrf.mxu0
      %6126 = vdwg.mxu0
      %6127 = vmatprep.subr.mxu0 0.0
      %6128 = vmatpush1.msra.mxu0 0.0
      %6129 = vmatprep.subr.mxu0 0.0
      %6130 = vmatpush1.msra.mxu0 0.0
      %6131 = vmatprep.subr.mxu0 0.0
      %6132 = vmatpush1.msra.mxu0 0.0
      %6133 = vmatprep.subr.mxu0 0.0
      %6134 = vmatpush1.msra.mxu0 0.0
      %6135 = vmatprep.subr.mxu0 0.0
      %6136 = vmatpush1.msra.mxu0 0.0
      %6137 = vmatprep.subr.mxu0 0.0
      %6138 = vmatpush1.msra.mxu0 0.0
      %6139 = vmatprep.subr.mxu0 0.0
      %6140 = vmatpush1.msra.mxu0 0.0
      %6141 = vmatprep.subr.mxu0 0.0
      %6142 = vmatpush1.msra.mxu0 0.0
      %6143 = vmatprep.subr.mxu0 0.0
      %6144 = vmatpush1.msra.mxu0 0.0
      %6145 = vmatprep.subr.mxu0 0.0
      %6146 = vmatpush1.msra.mxu0 0.0
      %6147 = vmatprep.subr.mxu0 0.0
      %6148 = vmatpush1.msra.mxu0 0.0
      %6149 = vmatprep.subr.mxu0 0.0
      %6150 = vmatpush1.msra.mxu0 0.0
      %6151 = vmatprep.subr.mxu0 0.0
      %6152 = vmatpush1.msra.mxu0 0.0
      %6153 = vmatprep.subr.mxu0 0.0
      %6154 = vmatpush1.msra.mxu0 0.0
      %6155 = vmatprep.subr.mxu0 0.0
      %6156 = vmatpush1.msra.mxu0 0.0
      %6157 = vmatprep.subr.mxu0 0.0
      %v6158 = vand.u32 %v269, 4294901760
      %v6159 = vsub.f32 %v269, %v6158
      %v6160 = vand.u32 %v6159, 4294901760
      %6161 = vmatpush1.msra.mxu0 %v6160
      %6162 = vmatprep.subr.mxu0 0.0
      %6163 = vmatpush2.msra.mxu0 0.0
      %6164 = vmatprep.subr.mxu0 0.0
      %6165 = vmatpush2.msra.mxu0 0.0
      %6166 = vmatprep.subr.mxu0 0.0
      %6167 = vmatpush2.msra.mxu0 0.0
      %6168 = vmatprep.subr.mxu0 0.0
      %6169 = vmatpush2.msra.mxu0 0.0
      %6170 = vmatprep.subr.mxu0 0.0
      %6171 = vmatpush2.msra.mxu0 0.0
      %6172 = vmatprep.subr.mxu0 0.0
      %6173 = vmatpush2.msra.mxu0 0.0
      %6174 = vmatprep.subr.mxu0 0.0
      %6175 = vmatpush2.msra.mxu0 0.0
      %6176 = vmatprep.subr.mxu0 0.0
      %6177 = vmatpush2.msra.mxu0 0.0
      %6178 = vmatprep.subr.mxu0 0.0
      %6179 = vmatpush2.msra.mxu0 0.0
      %6180 = vmatprep.subr.mxu0 0.0
      %6181 = vmatpush2.msra.mxu0 0.0
      %6182 = vmatprep.subr.mxu0 0.0
      %6183 = vmatpush2.msra.mxu0 0.0
      %6184 = vmatprep.subr.mxu0 0.0
      %6185 = vmatpush2.msra.mxu0 0.0
      %6186 = vmatprep.subr.mxu0 0.0
      %6187 = vmatpush2.msra.mxu0 0.0
      %6188 = vmatprep.subr.mxu0 0.0
      %6189 = vmatpush2.msra.mxu0 0.0
      %6190 = vmatprep.subr.mxu0 0.0
      %6191 = vmatpush2.msra.mxu0 0.0
      %6192 = vmatprep.subr.mxu0 0.0
      %6193 = vmatpush2.msra.mxu0 0.0
      %6194 = vmatprep.mubr.f32.mxu0 0.0
      %v6195 = vand.u32 %v5111, 4294901760
      %6196 = vmatmul.mubr.f32.gmra.mxu0 %v6195
      %v6197 = vpop.f32.mrf.mxu0
      %v6198 = vadd.f32 %v6100, %v6197
      %v6199 = vpop.f32.mrf.mxu0
      %6200 = vmatprep.mubr.f32.mxu0 0.0
      %v6201 = vand.u32 %v5114, 4294901760
      %6202 = vmatmul.mubr.f32.gmra.mxu0 %v6201
      %v6203 = vpop.f32.mrf.mxu0
      %v6204 = vadd.f32 %v6108, %v6203
      %v6205 = vpop.f32.mrf.mxu0
      %6206 = vmatprep.mubr.f32.mxu0 0.0
      %v6207 = vand.u32 %v5117, 4294901760
      %6208 = vmatmul.mubr.f32.gmra.mxu0 %v6207
      %v6209 = vpop.f32.mrf.mxu0
      %v6210 = vadd.f32 %v6116, %v6209
      %v6211 = vpop.f32.mrf.mxu0
      %6212 = vmatprep.mubr.f32.mxu0 0.0
      %v6213 = vand.u32 %v5120, 4294901760
      %6214 = vmatmul.mubr.f32.gmra.mxu0 %v6213
      %v6215 = vpop.f32.mrf.mxu0
      %v6216 = vadd.f32 %v6124, %v6215
      %v6217 = vpop.f32.mrf.mxu0
      %6218 = vdwg.mxu0
      %6219 = vmatprep.subr.mxu0 0.0
      %6220 = vmatpush1.msra.mxu0 0.0
      %6221 = vmatprep.subr.mxu0 0.0
      %6222 = vmatpush1.msra.mxu0 0.0
      %6223 = vmatprep.subr.mxu0 0.0
      %6224 = vmatpush1.msra.mxu0 0.0
      %6225 = vmatprep.subr.mxu0 0.0
      %6226 = vmatpush1.msra.mxu0 0.0
      %6227 = vmatprep.subr.mxu0 0.0
      %6228 = vmatpush1.msra.mxu0 0.0
      %6229 = vmatprep.subr.mxu0 0.0
      %6230 = vmatpush1.msra.mxu0 0.0
      %6231 = vmatprep.subr.mxu0 0.0
      %6232 = vmatpush1.msra.mxu0 0.0
      %6233 = vmatprep.subr.mxu0 0.0
      %6234 = vmatpush1.msra.mxu0 0.0
      %6235 = vmatprep.subr.mxu0 0.0
      %6236 = vmatpush1.msra.mxu0 0.0
      %6237 = vmatprep.subr.mxu0 0.0
      %6238 = vmatpush1.msra.mxu0 0.0
      %6239 = vmatprep.subr.mxu0 0.0
      %6240 = vmatpush1.msra.mxu0 0.0
      %6241 = vmatprep.subr.mxu0 0.0
      %6242 = vmatpush1.msra.mxu0 0.0
      %6243 = vmatprep.subr.mxu0 0.0
      %6244 = vmatpush1.msra.mxu0 0.0
      %6245 = vmatprep.subr.mxu0 0.0
      %6246 = vmatpush1.msra.mxu0 0.0
      %6247 = vmatprep.subr.mxu0 0.0
      %6248 = vmatpush1.msra.mxu0 0.0
      %6249 = vmatprep.subr.mxu0 0.0
      %v6250 = vand.u32 %v269, 4294901760
      %6251 = vmatpush1.msra.mxu0 %v6250
      %6252 = vmatprep.subr.mxu0 0.0
      %6253 = vmatpush2.msra.mxu0 0.0
      %6254 = vmatprep.subr.mxu0 0.0
      %6255 = vmatpush2.msra.mxu0 0.0
      %6256 = vmatprep.subr.mxu0 0.0
      %6257 = vmatpush2.msra.mxu0 0.0
      %6258 = vmatprep.subr.mxu0 0.0
      %6259 = vmatpush2.msra.mxu0 0.0
      %6260 = vmatprep.subr.mxu0 0.0
      %6261 = vmatpush2.msra.mxu0 0.0
      %6262 = vmatprep.subr.mxu0 0.0
      %6263 = vmatpush2.msra.mxu0 0.0
      %6264 = vmatprep.subr.mxu0 0.0
      %6265 = vmatpush2.msra.mxu0 0.0
      %6266 = vmatprep.subr.mxu0 0.0
      %6267 = vmatpush2.msra.mxu0 0.0
      %6268 = vmatprep.subr.mxu0 0.0
      %6269 = vmatpush2.msra.mxu0 0.0
      %6270 = vmatprep.subr.mxu0 0.0
      %6271 = vmatpush2.msra.mxu0 0.0
      %6272 = vmatprep.subr.mxu0 0.0
      %6273 = vmatpush2.msra.mxu0 0.0
      %6274 = vmatprep.subr.mxu0 0.0
      %6275 = vmatpush2.msra.mxu0 0.0
      %6276 = vmatprep.subr.mxu0 0.0
      %6277 = vmatpush2.msra.mxu0 0.0
      %6278 = vmatprep.subr.mxu0 0.0
      %6279 = vmatpush2.msra.mxu0 0.0
      %6280 = vmatprep.subr.mxu0 0.0
      %6281 = vmatpush2.msra.mxu0 0.0
      %6282 = vmatprep.subr.mxu0 0.0
      %6283 = vmatpush2.msra.mxu0 0.0
      %6284 = vmatprep.mubr.f32.mxu0 0.0
      %v6285 = vand.u32 %v5111, 4294901760
      %6286 = vmatmul.mubr.f32.gmra.mxu0 %v6285
      %v6287 = vpop.f32.mrf.mxu0
      %v6288 = vadd.f32 %v6198, %v6287
      %v6289 = vpop.f32.mrf.mxu0
      %6290 = vmatprep.mubr.f32.mxu0 0.0
      %v6291 = vand.u32 %v5114, 4294901760
      %6292 = vmatmul.mubr.f32.gmra.mxu0 %v6291
      %v6293 = vpop.f32.mrf.mxu0
      %v6294 = vadd.f32 %v6204, %v6293
      %v6295 = vpop.f32.mrf.mxu0
      %6296 = vmatprep.mubr.f32.mxu0 0.0
      %v6297 = vand.u32 %v5117, 4294901760
      %6298 = vmatmul.mubr.f32.gmra.mxu0 %v6297
      %v6299 = vpop.f32.mrf.mxu0
      %v6300 = vadd.f32 %v6210, %v6299
      %v6301 = vpop.f32.mrf.mxu0
      %6302 = vmatprep.mubr.f32.mxu0 0.0
      %v6303 = vand.u32 %v5120, 4294901760
      %6304 = vmatmul.mubr.f32.gmra.mxu0 %v6303
      %v6305 = vpop.f32.mrf.mxu0
      %v6306 = vadd.f32 %v6216, %v6305
      %v6307 = vpop.f32.mrf.mxu0
      %6308 = vdwg.mxu0
      %v6309 = vmul.f32 %v206, %v5709
      %v6310 = vmul.f32 %v207, %v5711
      %v6311 = vmul.f32 %v208, %v6288
      %v6312 = vmul.f32 %v209, %v5716
      %v6313 = vmul.f32 %v210, %v5718
      %v6314 = vmul.f32 %v211, %v6294
      %v6315 = vmul.f32 %v212, %v5723
      %v6316 = vmul.f32 %v213, %v5725
      %v6317 = vmul.f32 %v214, %v6300
      %v6318 = vmul.f32 %v215, %v5730
      %v6319 = vmul.f32 %v216, %v5732
      %v6320 = vmul.f32 %v217, %v6306
      %v6322 = vlaneseq
      %v6323 = vshrl.u32 %v6322, 7
      %v6324 = vsub.s32 0, %v6323
      %v6325 = vrot.slane %v218, %v6324
      %v6326 = vlaneseq
      %v6327 = vshrl.u32 %v6326, 7
      %v6328 = vsub.s32 1, %v6327
      %v6329 = vrot.slane %v218, %v6328
      %v6330 = vlaneseq
      %v6331 = vshrl.u32 %v6330, 7
      %v6332 = vsub.s32 2, %v6331
      %v6333 = vrot.slane %v218, %v6332
      %v6337 = vmul.f32 %v6309, %v6325
      %v6338 = vmul.f32 %v6310, %v6329
      %v6339 = vmul.f32 %v6311, %v6333
      %v6340 = vmul.f32 %v6312, %v6325
      %v6341 = vmul.f32 %v6313, %v6329
      %v6342 = vmul.f32 %v6314, %v6333
      %v6343 = vmul.f32 %v6315, %v6325
      %v6344 = vmul.f32 %v6316, %v6329
      %v6345 = vmul.f32 %v6317, %v6333
      %v6346 = vmul.f32 %v6318, %v6325
      %v6347 = vmul.f32 %v6319, %v6329
      %v6348 = vmul.f32 %v6320, %v6333
      %6349 = vst [vmem:[%s204] sm:$0xff] %v6337
      %6350 = vst [vmem:[%s204 + $0x8] sm:$0xff] %v6338
      %6351 = vst [vmem:[%s204 + $0x10] sm:$0xff] %v6339
      %6352 = vst [vmem:[%s204 + $0x18] sm:$0xff] %v6340
      %6353 = vst [vmem:[%s204 + $0x20] sm:$0xff] %v6341
      %6354 = vst [vmem:[%s204 + $0x28] sm:$0xff] %v6342
      %6355 = vst [vmem:[%s204 + $0x30] sm:$0xff] %v6343
      %6356 = vst [vmem:[%s204 + $0x38] sm:$0xff] %v6344
      %6357 = vst [vmem:[%s204 + $0x40] sm:$0xff] %v6345
      %6358 = vst [vmem:[%s204 + $0x48] sm:$0xff] %v6346
      %6359 = vst [vmem:[%s204 + $0x50] sm:$0xff] %v6347
      %6360 = vst [vmem:[%s204 + $0x58] sm:$0xff] %v6348
      %s6361 = smul.u32 4, %s15
      %p6362 = scmp.lt.s32.totalorder %s6361, 7
      %s6363 = scalar_select %p6362, %s6361, 7
      %s6364 = smul.addr %s6363, 3
      %s6365 = smul.addr %s6364, 8
      %s6366 = scalar_lea.vmem %s4, %s6365
      // Predicated region
      $region37: #{biasfree_layernorm.1} parent=35 // pred_check
        %p6367 = pneg %p122
      $region38: #{biasfree_layernorm.1} parent=35 // pred_check_branch
        %6369 = sbr.rel (%p6367) target = $region40
      $region39: #{biasfree_layernorm.1} parent=35 // pred_region
        %s6370 = smul.u32 4, %s15
      $region40: #{biasfree_layernorm.1} parent=35 // pred_fallthru
        _
    $region36: #{biasfree_layernorm.1} parent=5 // pred_fallthru
      _
    %p6371 = scmp.le.s32.totalorder 2, %s10
    // Predicated region
    $region41: #{biasfree_layernorm.1} parent=5 // pred_check
      %p6372 = pneg %p6371
    $region42: #{biasfree_layernorm.1} parent=5 // pred_check_branch
      %6374 = sbr.rel (%p6372) target = $region44
    $region43: #{biasfree_layernorm.1} parent=5 // pred_region
      %s6375 = ssub.s32 %s10, 2
      // Predicated region
      $region45: #{biasfree_layernorm.1} parent=43 // pred_check
        %p6376 = pneg %p128
      $region46: #{biasfree_layernorm.1} parent=43 // pred_check_branch
        %6378 = sbr.rel (%p6376) target = $region48
      $region47: #{biasfree_layernorm.1} parent=43 // pred_region
        %s6379 = smul.u32 4, %s16
        %p6380 = scmp.lt.s32.totalorder %s6379, 7
        %s6381 = scalar_select %p6380, %s6379, 7
        %s6382 = smul.addr %s6381, 3
        %s6383 = smul.addr %s6382, 8
        %s6384 = scalar_lea.vmem %s4, %s6383
      $region48: #{biasfree_layernorm.1} parent=43 // pred_fallthru
        _
    $region44: #{biasfree_layernorm.1} parent=5 // pred_fallthru
      _
  $region6: #{biasfree_layernorm.1} parent=0 // loop_footer
    %s14 = sadd.s32 1, %s10
  $region7: #{biasfree_layernorm.1} parent=0 // loop_footer_branch
    %9 = sbr.rel target = $region3
  $region8: #{biasfree_layernorm.1} parent=0 // loop_exit
    _

</llo_original>
